<compile_context>
chip_gen: v5e
topology: v5e:2x2
jax: 0.10.0
libtpu: 0.0.40
codegen_flags: <defaults>
</compile_context>

<pallas_src>
import jax
import jax.numpy as jnp
from jax.experimental import pallas as pl
from jax.experimental.pallas import tpu as pltpu

FEAT = 512                       # per-backbone feature dim (resnet18)
FEAT_DIM = 2 * FEAT              # concatenated feature dim
HIDDEN = 512                     # classifier hidden dim
NUM_CLASSES = (5, 3, 2, 3, 3, 3, 3, 2)
N_HEADS = len(NUM_CLASSES)
PAD_CLASSES = 128                # lane-dense output width per head-chunk
BN_EPS = 1e-5

NCHUNK = 4                       # grid steps (head chunks); 2 heads per chunk
HEADS_PER_CHUNK = N_HEADS // NCHUNK
CHUNK_COLS = HEADS_PER_CHUNK * HIDDEN          # w1 columns per chunk (1024)


def _fused_kernel(pooled_ref, wp_ref, w1_ref, bnp_ref, w2_ref, b2_ref, o_ref):
    """One head-chunk per grid step: Linear -> ReLU -> BatchNorm -> Linear."""
    # ---- backbone stand-in: block-diagonal (B, 2C) @ (2C, 2*FEAT) on the VPU ----
    # (K = 2C = 8 is degenerate for the MXU; broadcast-MACs on the VPU instead.)
    pooled = pooled_ref[...]                                   # (B, 2C) f32
    wp = wp_ref[...].astype(jnp.float32)                       # (2C, 2*FEAT), hoisted
    feats = pooled[:, 0:1] * wp[0:1, :]
    for c in range(1, wp.shape[0]):                            # static unroll
        feats = feats + pooled[:, c:c + 1] * wp[c:c + 1, :]    # (B, 2*FEAT)

    # ---- first linear for this chunk of heads (MXU, f32 accumulation) ----
    b1 = bnp_ref[0:1, :]                                       # (1, CHUNK_COLS)
    gamma = bnp_ref[1:2, :]
    beta = bnp_ref[2:3, :]
    h = jnp.dot(feats.astype(jnp.bfloat16), w1_ref[...],
                preferred_element_type=jnp.float32) + b1       # (B, CHUNK_COLS)
    h = jnp.maximum(h, 0.0)                                    # ReLU

    # ---- BatchNorm1d (training-mode batch stats), folded to one affine pass ----
    inv_b = 1.0 / h.shape[0]
    mean = jnp.sum(h, axis=0, keepdims=True) * inv_b
    mean_sq = jnp.sum(h * h, axis=0, keepdims=True) * inv_b
    var = jnp.maximum(mean_sq - mean * mean, 0.0)              # biased variance
    scale = gamma * jax.lax.rsqrt(var + BN_EPS)
    shift = beta - mean * scale
    h = h * scale + shift

    # ---- block-diagonal second linear: one MXU op, lane-dense (B, 128) slab ----
    o_ref[...] = jnp.dot(h.astype(jnp.bfloat16), w2_ref[...],
                         preferred_element_type=jnp.float32) + b2_ref[0]


def baseline_mlp3_forward(x, params):
    x_derm, x_clinic = x
    B, C = x_derm.shape[0], x_derm.shape[1]

    # Global average pooling in plain XLA (backbone stand-in pooling): keeps the
    # full-resolution images out of VMEM and upcasts only the tiny pooled tensor.
    pooled_d = jnp.mean(x_derm.reshape(B, C, -1).astype(jnp.float32), axis=-1)
    pooled_c = jnp.mean(x_clinic.reshape(B, C, -1).astype(jnp.float32), axis=-1)
    pooled_cat = jnp.concatenate([pooled_d, pooled_c], axis=-1)      # (B, 2C)
    c2 = pooled_cat.shape[1]

    # Right-size the VMEM budget from the double-buffered chunk sizes (+ headroom).
    w1_chunk_bytes = FEAT_DIM * CHUNK_COLS * 2        # bf16
    w2_chunk_bytes = CHUNK_COLS * PAD_CLASSES * 2     # bf16
    bnp_chunk_bytes = 3 * CHUNK_COLS * 4              # f32
    wp_bytes = c2 * FEAT_DIM * 2                      # bf16
    vmem_limit = int(2 * (w1_chunk_bytes + w2_chunk_bytes + bnp_chunk_bytes
                          + wp_bytes) + (8 << 20))

    grid_spec = pltpu.PrefetchScalarGridSpec(
        num_scalar_prefetch=0,
        grid=(NCHUNK,),
        in_specs=[
            pl.BlockSpec((B, c2), lambda g: (0, 0)),                   # pooled feats
            pl.BlockSpec((c2, FEAT_DIM), lambda g: (0, 0)),            # wp (block-diag)
            pl.BlockSpec((FEAT_DIM, CHUNK_COLS), lambda g: (0, g)),    # w1 chunk
            pl.BlockSpec((3, CHUNK_COLS), lambda g: (0, g)),           # b1/gamma/beta
            pl.BlockSpec((CHUNK_COLS, PAD_CLASSES), lambda g: (g, 0)), # w2 chunk
            pl.BlockSpec((1, 1, PAD_CLASSES), lambda g: (g, 0, 0)),    # b2 chunk
        ],
        out_specs=pl.BlockSpec((B, PAD_CLASSES), lambda g: (0, g)),
    )

    out = pl.pallas_call(
        _fused_kernel,
        out_shape=jax.ShapeDtypeStruct((B, NCHUNK * PAD_CLASSES), jnp.float32),
        grid_spec=grid_spec,
        compiler_params=pltpu.CompilerParams(
            dimension_semantics=("parallel",),
            vmem_limit_bytes=vmem_limit),
    )(pooled_cat, params["wp_cat"], params["w1"], params["bn_pack"],
      params["w2"], params["b2"])

    # Slice each head's true classes out of its chunk's 128-wide slab
    # (matches the PyTorch module's list-of-tensors output).
    outs = []
    for i, nc in enumerate(NUM_CLASSES):
        g, j = divmod(i, HEADS_PER_CHUNK)
        off = sum(NUM_CLASSES[g * HEADS_PER_CHUNK:g * HEADS_PER_CHUNK + j])
        base = g * PAD_CLASSES + off
        outs.append(out[:, base:base + nc])
    return outs


if __name__ == "__main__":
    key = jax.random.PRNGKey(0)
    keys = jax.random.split(key, 4 + 2 * N_HEADS)

    # small synthetic shapes consistent with a 2-view image input
    B, C, H, W = 2, 4, 16, 16
    x_derm = jax.random.normal(keys[0], (B, C, H, W), jnp.float32)
    x_clinic = jax.random.normal(keys[1], (B, C, H, W), jnp.float32)

    # backbone stand-in projection weights, packed block-diagonally so the
    # derm/clinic feature concat disappears inside the kernel.
    wp_derm = 0.01 * jax.random.normal(keys[2], (C, FEAT), jnp.float32)
    wp_clinic = 0.01 * jax.random.normal(keys[3], (C, FEAT), jnp.float32)
    wp_cat = jnp.zeros((2 * C, FEAT_DIM), jnp.float32)
    wp_cat = wp_cat.at[:C, :FEAT].set(wp_derm)
    wp_cat = wp_cat.at[C:, FEAT:].set(wp_clinic)

    # Per-head classifier params (PyTorch init: N(0, 0.01) weights, zero biases,
    # BN gamma=1 / beta=0), packed into the fused layouts.
    w1_heads = [0.01 * jax.random.normal(keys[4 + i], (FEAT_DIM, HIDDEN), jnp.float32)
                for i in range(N_HEADS)]
    w2_heads = [0.01 * jax.random.normal(keys[4 + N_HEADS + i], (HIDDEN, nc), jnp.float32)
                for i, nc in enumerate(NUM_CLASSES)]

    # fused first-linear weight: columns [i*HIDDEN:(i+1)*HIDDEN] belong to head i
    w1 = jnp.concatenate(w1_heads, axis=1)                       # (1024, 4096)

    # block-diagonal packed second linear: head i's rows map to its class columns
    # at cumulative offsets inside its chunk's 128-wide slab.
    w2 = jnp.zeros((N_HEADS * HIDDEN, PAD_CLASSES), jnp.float32)
    b2 = jnp.zeros((NCHUNK, 1, PAD_CLASSES), jnp.float32)        # PyTorch init: zero
    for i, nc in enumerate(NUM_CLASSES):
        g, j = divmod(i, HEADS_PER_CHUNK)
        off = sum(NUM_CLASSES[g * HEADS_PER_CHUNK:g * HEADS_PER_CHUNK + j])
        w2 = w2.at[i * HIDDEN:(i + 1) * HIDDEN, off:off + nc].set(w2_heads[i])

    params = {
        "wp_cat": wp_cat.astype(jnp.bfloat16),
        "w1": w1.astype(jnp.bfloat16),
        # packed per-column params: row0 = linear-1 bias, row1 = BN gamma, row2 = BN beta
        "bn_pack": jnp.concatenate(
            [jnp.zeros((1, N_HEADS * HIDDEN), jnp.float32),
             jnp.ones((1, N_HEADS * HIDDEN), jnp.float32),
             jnp.zeros((1, N_HEADS * HIDDEN), jnp.float32)], axis=0),
        "w2": w2.astype(jnp.bfloat16),
        "b2": b2,
    }

    outs = baseline_mlp3_forward((x_derm, x_clinic), params)
    outs = [jax.block_until_ready(o) for o in outs]

    expected = [(B, nc) for nc in NUM_CLASSES]
    assert [tuple(o.shape) for o in outs] == expected, [o.shape for o in outs]
    assert all(bool(jnp.all(jnp.isfinite(o))) for o in outs)
    print("KERNEL_OK")
</pallas_src>

<mosaic_0001>
module attributes {stable_mosaic.version = 11 : i64} {
  func.func @_fused_kernel(%arg0: i32, %arg1: memref<2x8xf32, #tpu.memory_space<vmem>>, %arg2: memref<8x1024xbf16, #tpu.memory_space<vmem>>, %arg3: memref<1024x1024xbf16, #tpu.memory_space<vmem>>, %arg4: memref<3x1024xf32, #tpu.memory_space<vmem>>, %arg5: memref<1024x128xbf16, #tpu.memory_space<vmem>>, %arg6: memref<1x1x128xf32, #tpu.memory_space<vmem>>, %arg7: memref<2x128xf32, #tpu.memory_space<vmem>>) attributes {dimension_semantics = [#tpu.dimension_semantics<parallel>], iteration_bounds = array<i64: 4>, scalar_prefetch = 0 : i64, scratch_operands = 0 : i64, tpu.core_type = #tpu.core_type<tc>, window_params = [{pipeline_mode = #tpu.pipeline_mode<synchronous>, transform_indices = @transform_0, window_bounds = array<i64: 2, 8>}, {pipeline_mode = #tpu.pipeline_mode<synchronous>, transform_indices = @transform_1, window_bounds = array<i64: 8, 1024>}, {transform_indices = @transform_2, window_bounds = array<i64: 1024, 1024>}, {transform_indices = @transform_3, window_bounds = array<i64: 3, 1024>}, {transform_indices = @transform_4, window_bounds = array<i64: 1024, 128>}, {transform_indices = @transform_5, window_bounds = array<i64: 1, 1, 128>}, {transform_indices = @transform_6, window_bounds = array<i64: 2, 128>}]} {
    %c0 = arith.constant 0 : index
    %c0_0 = arith.constant 0 : index
    %0 = vector.load %arg1[%c0, %c0_0] : memref<2x8xf32, #tpu.memory_space<vmem>>, vector<2x8xf32>
    %c0_1 = arith.constant 0 : index
    %c0_2 = arith.constant 0 : index
    %1 = vector.load %arg2[%c0_1, %c0_2] : memref<8x1024xbf16, #tpu.memory_space<vmem>>, vector<8x1024xbf16>
    %2 = arith.extf %1 : vector<8x1024xbf16> to vector<8x1024xf32>
    %3 = vector.extract_strided_slice %0 {offsets = [0, 0], sizes = [2, 1], strides = [1, 1]} : vector<2x8xf32> to vector<2x1xf32>
    %4 = vector.extract_strided_slice %2 {offsets = [0, 0], sizes = [1, 1024], strides = [1, 1]} : vector<8x1024xf32> to vector<1x1024xf32>
    %5 = vector.broadcast %3 : vector<2x1xf32> to vector<2x1024xf32>
    %6 = vector.broadcast %4 : vector<1x1024xf32> to vector<2x1024xf32>
    %7 = arith.mulf %5, %6 : vector<2x1024xf32>
    %8 = vector.extract_strided_slice %0 {offsets = [0, 1], sizes = [2, 1], strides = [1, 1]} : vector<2x8xf32> to vector<2x1xf32>
    %9 = vector.extract_strided_slice %2 {offsets = [1, 0], sizes = [1, 1024], strides = [1, 1]} : vector<8x1024xf32> to vector<1x1024xf32>
    %10 = vector.broadcast %8 : vector<2x1xf32> to vector<2x1024xf32>
    %11 = vector.broadcast %9 : vector<1x1024xf32> to vector<2x1024xf32>
    %12 = arith.mulf %10, %11 : vector<2x1024xf32>
    %13 = arith.addf %7, %12 : vector<2x1024xf32>
    %14 = vector.extract_strided_slice %0 {offsets = [0, 2], sizes = [2, 1], strides = [1, 1]} : vector<2x8xf32> to vector<2x1xf32>
    %15 = vector.extract_strided_slice %2 {offsets = [2, 0], sizes = [1, 1024], strides = [1, 1]} : vector<8x1024xf32> to vector<1x1024xf32>
    %16 = vector.broadcast %14 : vector<2x1xf32> to vector<2x1024xf32>
    %17 = vector.broadcast %15 : vector<1x1024xf32> to vector<2x1024xf32>
    %18 = arith.mulf %16, %17 : vector<2x1024xf32>
    %19 = arith.addf %13, %18 : vector<2x1024xf32>
    %20 = vector.extract_strided_slice %0 {offsets = [0, 3], sizes = [2, 1], strides = [1, 1]} : vector<2x8xf32> to vector<2x1xf32>
    %21 = vector.extract_strided_slice %2 {offsets = [3, 0], sizes = [1, 1024], strides = [1, 1]} : vector<8x1024xf32> to vector<1x1024xf32>
    %22 = vector.broadcast %20 : vector<2x1xf32> to vector<2x1024xf32>
    %23 = vector.broadcast %21 : vector<1x1024xf32> to vector<2x1024xf32>
    %24 = arith.mulf %22, %23 : vector<2x1024xf32>
    %25 = arith.addf %19, %24 : vector<2x1024xf32>
    %26 = vector.extract_strided_slice %0 {offsets = [0, 4], sizes = [2, 1], strides = [1, 1]} : vector<2x8xf32> to vector<2x1xf32>
    %27 = vector.extract_strided_slice %2 {offsets = [4, 0], sizes = [1, 1024], strides = [1, 1]} : vector<8x1024xf32> to vector<1x1024xf32>
    %28 = vector.broadcast %26 : vector<2x1xf32> to vector<2x1024xf32>
    %29 = vector.broadcast %27 : vector<1x1024xf32> to vector<2x1024xf32>
    %30 = arith.mulf %28, %29 : vector<2x1024xf32>
    %31 = arith.addf %25, %30 : vector<2x1024xf32>
    %32 = vector.extract_strided_slice %0 {offsets = [0, 5], sizes = [2, 1], strides = [1, 1]} : vector<2x8xf32> to vector<2x1xf32>
    %33 = vector.extract_strided_slice %2 {offsets = [5, 0], sizes = [1, 1024], strides = [1, 1]} : vector<8x1024xf32> to vector<1x1024xf32>
    %34 = vector.broadcast %32 : vector<2x1xf32> to vector<2x1024xf32>
    %35 = vector.broadcast %33 : vector<1x1024xf32> to vector<2x1024xf32>
    %36 = arith.mulf %34, %35 : vector<2x1024xf32>
    %37 = arith.addf %31, %36 : vector<2x1024xf32>
    %38 = vector.extract_strided_slice %0 {offsets = [0, 6], sizes = [2, 1], strides = [1, 1]} : vector<2x8xf32> to vector<2x1xf32>
    %39 = vector.extract_strided_slice %2 {offsets = [6, 0], sizes = [1, 1024], strides = [1, 1]} : vector<8x1024xf32> to vector<1x1024xf32>
    %40 = vector.broadcast %38 : vector<2x1xf32> to vector<2x1024xf32>
    %41 = vector.broadcast %39 : vector<1x1024xf32> to vector<2x1024xf32>
    %42 = arith.mulf %40, %41 : vector<2x1024xf32>
    %43 = arith.addf %37, %42 : vector<2x1024xf32>
    %44 = vector.extract_strided_slice %0 {offsets = [0, 7], sizes = [2, 1], strides = [1, 1]} : vector<2x8xf32> to vector<2x1xf32>
    %45 = vector.extract_strided_slice %2 {offsets = [7, 0], sizes = [1, 1024], strides = [1, 1]} : vector<8x1024xf32> to vector<1x1024xf32>
    %46 = vector.broadcast %44 : vector<2x1xf32> to vector<2x1024xf32>
    %47 = vector.broadcast %45 : vector<1x1024xf32> to vector<2x1024xf32>
    %48 = arith.mulf %46, %47 : vector<2x1024xf32>
    %49 = arith.addf %43, %48 : vector<2x1024xf32>
    %c0_3 = arith.constant 0 : index
    %c0_4 = arith.constant 0 : index
    %50 = vector.load %arg4[%c0_3, %c0_4] : memref<3x1024xf32, #tpu.memory_space<vmem>>, vector<1x1024xf32>
    %c1 = arith.constant 1 : index
    %c0_5 = arith.constant 0 : index
    %51 = vector.load %arg4[%c1, %c0_5] : memref<3x1024xf32, #tpu.memory_space<vmem>>, vector<1x1024xf32>
    %c2 = arith.constant 2 : index
    %c0_6 = arith.constant 0 : index
    %52 = vector.load %arg4[%c2, %c0_6] : memref<3x1024xf32, #tpu.memory_space<vmem>>, vector<1x1024xf32>
    %53 = arith.truncf %49 : vector<2x1024xf32> to vector<2x1024xbf16>
    %c0_7 = arith.constant 0 : index
    %c0_8 = arith.constant 0 : index
    %54 = vector.load %arg3[%c0_7, %c0_8] : memref<1024x1024xbf16, #tpu.memory_space<vmem>>, vector<1024x1024xbf16>
    %cst = arith.constant dense<0.000000e+00> : vector<2x1024xf32>
    %55 = tpu.matmul %53, %54, %cst {dimension_numbers = #tpu.dot_dimension_numbers<[1], [0], [0], [1], [0, 0, 1, 1], [], []>} : vector<2x1024xbf16>, vector<1024x1024xbf16>, vector<2x1024xf32> -> vector<2x1024xf32>
    %56 = vector.broadcast %50 : vector<1x1024xf32> to vector<2x1024xf32>
    %57 = arith.addf %55, %56 : vector<2x1024xf32>
    %cst_9 = arith.constant 0.000000e+00 : f32
    %58 = vector.broadcast %cst_9 : f32 to vector<2x1024xf32>
    %59 = arith.maximumf %57, %58 : vector<2x1024xf32>
    %cst_10 = arith.constant dense<0.000000e+00> : vector<1024xf32>
    %60 = vector.multi_reduction <add>, %59, %cst_10 [0] : vector<2x1024xf32> to vector<1024xf32>
    %61 = vector.shape_cast %60 : vector<1024xf32> to vector<1x1024xf32>
    %cst_11 = arith.constant 5.000000e-01 : f32
    %62 = vector.broadcast %cst_11 : f32 to vector<1x1024xf32>
    %63 = arith.mulf %61, %62 : vector<1x1024xf32>
    %64 = arith.mulf %59, %59 : vector<2x1024xf32>
    %cst_12 = arith.constant dense<0.000000e+00> : vector<1024xf32>
    %65 = vector.multi_reduction <add>, %64, %cst_12 [0] : vector<2x1024xf32> to vector<1024xf32>
    %66 = vector.shape_cast %65 : vector<1024xf32> to vector<1x1024xf32>
    %cst_13 = arith.constant 5.000000e-01 : f32
    %67 = vector.broadcast %cst_13 : f32 to vector<1x1024xf32>
    %68 = arith.mulf %66, %67 : vector<1x1024xf32>
    %69 = arith.mulf %63, %63 : vector<1x1024xf32>
    %70 = arith.subf %68, %69 : vector<1x1024xf32>
    %cst_14 = arith.constant 0.000000e+00 : f32
    %71 = vector.broadcast %cst_14 : f32 to vector<1x1024xf32>
    %72 = arith.maximumf %70, %71 : vector<1x1024xf32>
    %cst_15 = arith.constant 9.99999974E-6 : f32
    %73 = vector.broadcast %cst_15 : f32 to vector<1x1024xf32>
    %74 = arith.addf %72, %73 : vector<1x1024xf32>
    %75 = math.rsqrt %74 : vector<1x1024xf32>
    %76 = arith.mulf %51, %75 : vector<1x1024xf32>
    %77 = arith.mulf %63, %76 : vector<1x1024xf32>
    %78 = arith.subf %52, %77 : vector<1x1024xf32>
    %79 = vector.broadcast %76 : vector<1x1024xf32> to vector<2x1024xf32>
    %80 = arith.mulf %59, %79 : vector<2x1024xf32>
    %81 = vector.broadcast %78 : vector<1x1024xf32> to vector<2x1024xf32>
    %82 = arith.addf %80, %81 : vector<2x1024xf32>
    %83 = arith.truncf %82 : vector<2x1024xf32> to vector<2x1024xbf16>
    %c0_16 = arith.constant 0 : index
    %c0_17 = arith.constant 0 : index
    %84 = vector.load %arg5[%c0_16, %c0_17] : memref<1024x128xbf16, #tpu.memory_space<vmem>>, vector<1024x128xbf16>
    %cst_18 = arith.constant dense<0.000000e+00> : vector<2x128xf32>
    %85 = tpu.matmul %83, %84, %cst_18 {dimension_numbers = #tpu.dot_dimension_numbers<[1], [0], [0], [1], [0, 0, 1, 1], [], []>} : vector<2x1024xbf16>, vector<1024x128xbf16>, vector<2x128xf32> -> vector<2x128xf32>
    %c0_19 = arith.constant 0 : index
    %c0_20 = arith.constant 0 : index
    %c0_21 = arith.constant 0 : index
    %86 = vector.load %arg6[%c0_19, %c0_20, %c0_21] : memref<1x1x128xf32, #tpu.memory_space<vmem>>, vector<1x1x128xf32>
    %87 = vector.shape_cast %86 : vector<1x1x128xf32> to vector<1x128xf32>
    %88 = vector.broadcast %87 : vector<1x128xf32> to vector<2x128xf32>
    %89 = arith.addf %85, %88 : vector<2x128xf32>
    %c0_22 = arith.constant 0 : index
    %c0_23 = arith.constant 0 : index
    %90 = vector.load %arg7[%c0_22, %c0_23] : memref<2x128xf32, #tpu.memory_space<vmem>>, vector<2x128xf32>
    tpu.vector_store %arg7[%c0_22, %c0_23], %89 {strides = array<i32>} : memref<2x128xf32, #tpu.memory_space<vmem>>, vector<2x128xf32>,
    return
  }
  func.func @transform_0(%arg0: i32) -> (i32, i32) {
    %c0_i32 = arith.constant 0 : i32
    %c0_i32_0 = arith.constant 0 : i32
    %c0_i32_1 = arith.constant 0 : i32
    return %c0_i32, %c0_i32_0 : i32, i32
  }
  func.func @transform_1(%arg0: i32) -> (i32, i32) {
    %c0_i32 = arith.constant 0 : i32
    %c0_i32_0 = arith.constant 0 : i32
    %c0_i32_1 = arith.constant 0 : i32
    return %c0_i32, %c0_i32_0 : i32, i32
  }
  func.func @transform_2(%arg0: i32) -> (i32, i32) {
    %c0_i32 = arith.constant 0 : i32
    %c0_i32_0 = arith.constant 0 : i32
    return %c0_i32, %arg0 : i32, i32
  }
  func.func @transform_3(%arg0: i32) -> (i32, i32) {
    %c0_i32 = arith.constant 0 : i32
    %c0_i32_0 = arith.constant 0 : i32
    return %c0_i32, %arg0 : i32, i32
  }
  func.func @transform_4(%arg0: i32) -> (i32, i32) {
    %c0_i32 = arith.constant 0 : i32
    %c0_i32_0 = arith.constant 0 : i32
    return %arg0, %c0_i32 : i32, i32
  }
  func.func @transform_5(%arg0: i32) -> (i32, i32, i32) {
    %c0_i32 = arith.constant 0 : i32
    %c0_i32_0 = arith.constant 0 : i32
    %c0_i32_1 = arith.constant 0 : i32
    return %arg0, %c0_i32, %c0_i32_0 : i32, i32, i32
  }
  func.func @transform_6(%arg0: i32) -> (i32, i32) {
    %c0_i32 = arith.constant 0 : i32
    %c0_i32_0 = arith.constant 0 : i32
    return %c0_i32, %arg0 : i32, i32
  }
}

</mosaic_0001>

<llo_original>
// kernel: tpu_custom_call.1
$region0: #{tpu_custom_call.1}
  #allocation0 [shape = 'u32[]', space=smem, size = 0x4, offset = 0x4, fixed_abs, tag = 'smem constant byte address 0x4 - core index']
  #allocation1 [shape = 'u32[72,128]{1,0:T(1,128)}', space=vmem, size = 0x9000, scoped, tag = 'internal scratch']
  %s0 = inlined_call_operand.hbm [shape: f32[2,8], index: 0, kind: input, shape index: {}]
  %s1 = inlined_call_operand.hbm [shape: bf16[8,1024], index: 1, kind: input, shape index: {}]
  %s2 = inlined_call_operand.hbm [shape: bf16[1024,4096], index: 2, kind: input, shape index: {}]
  %s3 = inlined_call_operand.hbm [shape: f32[3,4096], index: 3, kind: input, shape index: {}]
  %s4 = inlined_call_operand.hbm [shape: bf16[4096,128], index: 4, kind: input, shape index: {}]
  %s5 = inlined_call_operand.hbm [shape: f32[4,1,128], index: 5, kind: input, shape index: {}]
  %s6 = inlined_call_operand.hbm [shape: f32[2,512], index: 6, kind: output, shape index: {}]
  %s7 = sld [smem:[#allocation0]]
  $region81: #{tpu_custom_call.1} parent=0
    _
  %s9 = ssub.s32 1, %s7
  %s10 = scalar_select 0, %s9, %s7
  $region1: #{tpu_custom_call.1} parent=0
    #allocation2 [shape = 'u8[1024]{0}', space=vmem, size = 0x400, scoped, tag = 'input window, operand 0, single buffered']
    #allocation3 [shape = 's32[2]{0}', space=sflag, size = 0x8, scoped, tag = 'scoped memory for tpu_custom_call.1']
    #allocation4 [shape = 's32[2]{0}', space=sflag, size = 0x8, scoped, tag = 'scoped memory for tpu_custom_call.1']
    #allocation5 [shape = 'u8[16384]{0}', space=vmem, size = 0x4000, scoped, tag = 'input window, operand 1, single buffered']
    #allocation6 [shape = 's32[1]{0}', space=sflag, size = 0x4, scoped, tag = 'scoped memory for tpu_custom_call.1']
    #allocation7 [shape = 'u8[4194304]{0}', space=vmem, size = 0x400000, scoped, tag = 'input window, operand 2']
    #allocation8 [shape = 'u8[32768]{0}', space=vmem, size = 0x8000, scoped, tag = 'input window, operand 3']
    #allocation9 [shape = 'u8[524288]{0}', space=vmem, size = 0x80000, scoped, tag = 'input window, operand 4']
    #allocation10 [shape = 'u8[1024]{0}', space=vmem, size = 0x400, scoped, tag = 'input window, operand 5']
    #allocation11 [shape = 'u8[2048]{0}', space=vmem, size = 0x800, scoped, tag = 'output window, operand 0']
    %11 = vsyncpa [#allocation3], 0
    %12 = vsyncpa [#allocation6], 0
    %13 = vsyncpa [#allocation4], 0
    %s14 = scalar_lea.sflag [#allocation4], 1
    %15 = vsyncpa %s14, 0
    loop: start=0, step=1, limit=6
    $region2: #{tpu_custom_call.1} parent=1 // loop_pre_header
      _
    $region3: #{tpu_custom_call.1} parent=1 // loop_header
      %s17 = sphi 0, %s21
      %p18 = scmp.ge.s32.totalorder %s17, 6
      %s25 = sphi 0, %s25
      %s27 = sphi 0, %s25
      %s28 = sphi 0, %s27
      %s42 = sphi 0, %s28
      %s46 = sphi 0, %s46
      %s48 = sphi 0, %s46
      %s49 = sphi 0, %s48
      %s63 = sphi 0, %s49
      %s69 = sphi 0, %s71
      %s72 = sphi 0, %s69
      %s73 = sphi 0, %s72
      %s89 = sphi 0, %s73
      %s95 = sphi 0, %s97
      %s98 = sphi 0, %s95
      %s99 = sphi 0, %s98
      %s115 = sphi 0, %s99
      %s121 = sphi 0, %s123
      %s124 = sphi 0, %s121
      %s125 = sphi 0, %s124
      %s141 = sphi 0, %s125
      %s147 = sphi 0, %s149
      %s150 = sphi 0, %s147
      %s151 = sphi 0, %s150
      %s167 = sphi 0, %s151
      %s173 = sphi 0, %s175
      %s176 = sphi 0, %s173
      %s177 = sphi 0, %s176
      %s193 = sphi 0, %s177
    $region4: #{tpu_custom_call.1} parent=1 // loop_header_branch
      %20 = sbr.rel (%p18) target = $region8
    $region5: #{tpu_custom_call.1} parent=1 // loop_body
      %s22 = ssub.s32 %s17, 1
      %s23 = ssub.s32 %s17, 2
      %s24 = sadd.s32 %s17, 1
      %s26 = sadd.s32 %s25, 1
      %p29 = scmp.eq.s32.totalorder %s17, 3
      %p30 = scmp.ne.s32.totalorder %s25, %s27
      %p31 = scmp.eq.s32.totalorder %s17, 0
      %p32 = por %p30, %p31
      %p33 = scmp.ne.s32.totalorder %s25, %s27
      %p34 = scmp.eq.s32.totalorder %s22, 3
      %p35 = por %p33, %p34
      %p36 = scmp.ne.s32.totalorder %s27, %s28
      %p37 = scmp.eq.s32.totalorder %s22, 0
      %p38 = por %p36, %p37
      %p39 = scmp.ne.s32.totalorder %s27, %s28
      %p40 = scmp.eq.s32.totalorder %s23, 3
      %p41 = por %p39, %p40
      %p43 = scmp.ne.s32.totalorder %s28, %s42
      %p44 = scmp.eq.s32.totalorder %s23, 0
      %p45 = por %p43, %p44
      %s47 = sadd.s32 %s46, 1
      %p50 = scmp.eq.s32.totalorder %s17, 3
      %p51 = scmp.ne.s32.totalorder %s46, %s48
      %p52 = scmp.eq.s32.totalorder %s17, 0
      %p53 = por %p51, %p52
      %p54 = scmp.ne.s32.totalorder %s46, %s48
      %p55 = scmp.eq.s32.totalorder %s22, 3
      %p56 = por %p54, %p55
      %p57 = scmp.ne.s32.totalorder %s48, %s49
      %p58 = scmp.eq.s32.totalorder %s22, 0
      %p59 = por %p57, %p58
      %p60 = scmp.ne.s32.totalorder %s48, %s49
      %p61 = scmp.eq.s32.totalorder %s23, 3
      %p62 = por %p60, %p61
      %p64 = scmp.ne.s32.totalorder %s49, %s63
      %p65 = scmp.eq.s32.totalorder %s23, 0
      %p66 = por %p64, %p65
      %s67 = ssub.s32 %s17, %s24
      %p68 = scmp.eq.s32.totalorder %s67, 0
      %s70 = sadd.s32 %s69, 1
      %s71 = scalar_select %p68, %s69, %s70
      %p74 = pneg %p68
      %p75 = scmp.eq.s32.totalorder %s17, 3
      %p76 = por %p74, %p75
      %p77 = scmp.ne.s32.totalorder %s69, %s72
      %p78 = scmp.eq.s32.totalorder %s17, 0
      %p79 = por %p77, %p78
      %p80 = scmp.ne.s32.totalorder %s69, %s72
      %p81 = scmp.eq.s32.totalorder %s22, 3
      %p82 = por %p80, %p81
      %p83 = scmp.ne.s32.totalorder %s72, %s73
      %p84 = scmp.eq.s32.totalorder %s22, 0
      %p85 = por %p83, %p84
      %p86 = scmp.ne.s32.totalorder %s72, %s73
      %p87 = scmp.eq.s32.totalorder %s23, 3
      %p88 = por %p86, %p87
      %p90 = scmp.ne.s32.totalorder %s73, %s89
      %p91 = scmp.eq.s32.totalorder %s23, 0
      %p92 = por %p90, %p91
      %s93 = ssub.s32 %s17, %s24
      %p94 = scmp.eq.s32.totalorder %s93, 0
      %s96 = sadd.s32 %s95, 1
      %s97 = scalar_select %p94, %s95, %s96
      %p100 = pneg %p94
      %p101 = scmp.eq.s32.totalorder %s17, 3
      %p102 = por %p100, %p101
      %p103 = scmp.ne.s32.totalorder %s95, %s98
      %p104 = scmp.eq.s32.totalorder %s17, 0
      %p105 = por %p103, %p104
      %p106 = scmp.ne.s32.totalorder %s95, %s98
      %p107 = scmp.eq.s32.totalorder %s22, 3
      %p108 = por %p106, %p107
      %p109 = scmp.ne.s32.totalorder %s98, %s99
      %p110 = scmp.eq.s32.totalorder %s22, 0
      %p111 = por %p109, %p110
      %p112 = scmp.ne.s32.totalorder %s98, %s99
      %p113 = scmp.eq.s32.totalorder %s23, 3
      %p114 = por %p112, %p113
      %p116 = scmp.ne.s32.totalorder %s99, %s115
      %p117 = scmp.eq.s32.totalorder %s23, 0
      %p118 = por %p116, %p117
      %s119 = ssub.s32 %s17, %s24
      %p120 = scmp.eq.s32.totalorder %s119, 0
      %s122 = sadd.s32 %s121, 1
      %s123 = scalar_select %p120, %s121, %s122
      %p126 = pneg %p120
      %p127 = scmp.eq.s32.totalorder %s17, 3
      %p128 = por %p126, %p127
      %p129 = scmp.ne.s32.totalorder %s121, %s124
      %p130 = scmp.eq.s32.totalorder %s17, 0
      %p131 = por %p129, %p130
      %p132 = scmp.ne.s32.totalorder %s121, %s124
      %p133 = scmp.eq.s32.totalorder %s22, 3
      %p134 = por %p132, %p133
      %p135 = scmp.ne.s32.totalorder %s124, %s125
      %p136 = scmp.eq.s32.totalorder %s22, 0
      %p137 = por %p135, %p136
      %p138 = scmp.ne.s32.totalorder %s124, %s125
      %p139 = scmp.eq.s32.totalorder %s23, 3
      %p140 = por %p138, %p139
      %p142 = scmp.ne.s32.totalorder %s125, %s141
      %p143 = scmp.eq.s32.totalorder %s23, 0
      %p144 = por %p142, %p143
      %s145 = ssub.s32 %s17, %s24
      %p146 = scmp.eq.s32.totalorder %s145, 0
      %s148 = sadd.s32 %s147, 1
      %s149 = scalar_select %p146, %s147, %s148
      %p152 = pneg %p146
      %p153 = scmp.eq.s32.totalorder %s17, 3
      %p154 = por %p152, %p153
      %p155 = scmp.ne.s32.totalorder %s147, %s150
      %p156 = scmp.eq.s32.totalorder %s17, 0
      %p157 = por %p155, %p156
      %p158 = scmp.ne.s32.totalorder %s147, %s150
      %p159 = scmp.eq.s32.totalorder %s22, 3
      %p160 = por %p158, %p159
      %p161 = scmp.ne.s32.totalorder %s150, %s151
      %p162 = scmp.eq.s32.totalorder %s22, 0
      %p163 = por %p161, %p162
      %p164 = scmp.ne.s32.totalorder %s150, %s151
      %p165 = scmp.eq.s32.totalorder %s23, 3
      %p166 = por %p164, %p165
      %p168 = scmp.ne.s32.totalorder %s151, %s167
      %p169 = scmp.eq.s32.totalorder %s23, 0
      %p170 = por %p168, %p169
      %s171 = ssub.s32 %s17, %s24
      %p172 = scmp.eq.s32.totalorder %s171, 0
      %s174 = sadd.s32 %s173, 1
      %s175 = scalar_select %p172, %s173, %s174
      %p178 = pneg %p172
      %p179 = scmp.eq.s32.totalorder %s17, 3
      %p180 = por %p178, %p179
      %p181 = scmp.ne.s32.totalorder %s173, %s176
      %p182 = scmp.eq.s32.totalorder %s17, 0
      %p183 = por %p181, %p182
      %p184 = scmp.ne.s32.totalorder %s173, %s176
      %p185 = scmp.eq.s32.totalorder %s22, 3
      %p186 = por %p184, %p185
      %p187 = scmp.ne.s32.totalorder %s176, %s177
      %p188 = scmp.eq.s32.totalorder %s22, 0
      %p189 = por %p187, %p188
      %p190 = scmp.ne.s32.totalorder %s176, %s177
      %p191 = scmp.eq.s32.totalorder %s23, 3
      %p192 = por %p190, %p191
      %p194 = scmp.ne.s32.totalorder %s177, %s193
      %p195 = scmp.eq.s32.totalorder %s23, 0
      %p196 = por %p194, %p195
      %p197 = scmp.le.s32.totalorder 1, %s17
      %p198 = scmp.lt.s32.totalorder %s17, 5
      %p199 = pnand %p197, %p198
      %p200 = pneg %p199
      // Predicated region
      $region9: #{tpu_custom_call.1} parent=5 // pred_check
        _
      $region10: #{tpu_custom_call.1} parent=5 // pred_check_branch
        %202 = sbr.rel (%p199) target = $region12
      $region11: #{tpu_custom_call.1} parent=5 // pred_region
        %s203 = ssub.s32 %s17, 1
        // Predicated region
        $region13: #{tpu_custom_call.1} parent=11 // pred_check
          %p204 = pneg %p38
        $region14: #{tpu_custom_call.1} parent=11 // pred_check_branch
          %206 = sbr.rel (%p204) target = $region16
        $region15: #{tpu_custom_call.1} parent=11 // pred_region
          %208 = vsyncadd [#allocation3], 0
          %s210 = sshll.u32 %s0, 4
          %s211 = int_to_ptr.hbm [resolvable:$true] %s210
          %s212 = sshll.u32 [#allocation2], 4
          %s213 = int_to_ptr.vmem [resolvable:$true] %s212
          %215 = dma.hbm_to_vmem [thread:$0]  %s211, 32, %s213, [#allocation3]
        $region16: #{tpu_custom_call.1} parent=11 // pred_fallthru
          _
        // Predicated region
        $region17: #{tpu_custom_call.1} parent=11 // pred_check
          %p216 = pneg %p59
        $region18: #{tpu_custom_call.1} parent=11 // pred_check_branch
          %218 = sbr.rel (%p216) target = $region20
        $region19: #{tpu_custom_call.1} parent=11 // pred_region
          %220 = vsyncadd [#allocation6], 0
          %s222 = sshll.u32 %s1, 4
          %s223 = int_to_ptr.hbm [resolvable:$true] %s222
          %s224 = sshll.u32 [#allocation5], 4
          %s225 = int_to_ptr.vmem [resolvable:$true] %s224
          %227 = dma.hbm_to_vmem [thread:$0]  %s223, 512, %s225, [#allocation6]
        $region20: #{tpu_custom_call.1} parent=11 // pred_fallthru
          _
      $region12: #{tpu_custom_call.1} parent=5 // pred_fallthru
        _
      %p228 = scmp.lt.s32.totalorder %s17, 4
      // Predicated region
      $region21: #{tpu_custom_call.1} parent=5 // pred_check
        %p229 = pneg %p228
      $region22: #{tpu_custom_call.1} parent=5 // pred_check_branch
        %231 = sbr.rel (%p229) target = $region24
      $region23: #{tpu_custom_call.1} parent=5 // pred_region
        // Predicated region
        $region25: #{tpu_custom_call.1} parent=23 // pred_check
          %p232 = pneg %p79
        $region26: #{tpu_custom_call.1} parent=23 // pred_check_branch
          %234 = sbr.rel (%p232) target = $region28
        $region27: #{tpu_custom_call.1} parent=23 // pred_region
          %s235 = sand.u32 %s17, 1
          %s236 = scalar_lea.sflag [#allocation3], %s235
          %s237 = sand.u32 %s69, 1
          %s238 = smul.addr %s237, 4096
          %s239 = scalar_lea.vmem [#allocation7], %s238
          %s240 = smul.u32 8, %s17
          %242 = vsyncadd %s236, 0
          %s243 = smul.addr %s240, 4
          %s244 = scalar_lea.hbm %s2, %s243
          %s245 = sshll.u32 %s244, 4
          %s246 = int_to_ptr.hbm [resolvable:$true] %s245
          %s247 = sshll.u32 %s239, 4
          %s248 = int_to_ptr.vmem [resolvable:$true] %s247
          %253 = dma.hbm_to_vmem [thread:$0]  %s246, 65536, %s248, %s236, 2048, 512, 32
        $region28: #{tpu_custom_call.1} parent=23 // pred_fallthru
          _
        // Predicated region
        $region29: #{tpu_custom_call.1} parent=23 // pred_check
          %p254 = pneg %p105
        $region30: #{tpu_custom_call.1} parent=23 // pred_check_branch
          %256 = sbr.rel (%p254) target = $region32
        $region31: #{tpu_custom_call.1} parent=23 // pred_region
          %s257 = sand.u32 %s17, 1
          %s258 = scalar_lea.sflag [#allocation3], %s257
          %s259 = sand.u32 %s95, 1
          %s260 = smul.addr %s259, 32
          %s261 = scalar_lea.vmem [#allocation8], %s260
          %s262 = smul.u32 8, %s17
          %264 = vsyncadd %s258, 0
          %s265 = smul.addr %s262, 4
          %s266 = scalar_lea.hbm %s3, %s265
          %s268 = sshll.u32 %s266, 4
          %s269 = int_to_ptr.hbm [resolvable:$true] %s268
          %s270 = sshll.u32 %s261, 4
          %s271 = int_to_ptr.vmem [resolvable:$true] %s270
          %273 = dma.hbm_to_vmem [thread:$0]  %s269, 512, %s271, %s258
        $region32: #{tpu_custom_call.1} parent=23 // pred_fallthru
          _
        // Predicated region
        $region33: #{tpu_custom_call.1} parent=23 // pred_check
          %p274 = pneg %p131
        $region34: #{tpu_custom_call.1} parent=23 // pred_check_branch
          %276 = sbr.rel (%p274) target = $region36
        $region35: #{tpu_custom_call.1} parent=23 // pred_region
          %s277 = sand.u32 %s17, 1
          %s278 = scalar_lea.sflag [#allocation3], %s277
          %s279 = sand.u32 %s121, 1
          %s280 = smul.addr %s279, 512
          %s281 = scalar_lea.vmem [#allocation9], %s280
          %s282 = smul.u32 128, %s17
          %284 = vsyncadd %s278, 0
          %s285 = smul.addr %s282, 4
          %s286 = scalar_lea.hbm %s4, %s285
          %s287 = sshll.u32 %s286, 4
          %s288 = int_to_ptr.hbm [resolvable:$true] %s287
          %s289 = sshll.u32 %s281, 4
          %s290 = int_to_ptr.vmem [resolvable:$true] %s289
          %295 = dma.hbm_to_vmem [thread:$0]  %s288, 8192, %s290, %s278, 64, 64, 4
        $region36: #{tpu_custom_call.1} parent=23 // pred_fallthru
          _
        // Predicated region
        $region37: #{tpu_custom_call.1} parent=23 // pred_check
          %p296 = pneg %p157
        $region38: #{tpu_custom_call.1} parent=23 // pred_check_branch
          %298 = sbr.rel (%p296) target = $region40
        $region39: #{tpu_custom_call.1} parent=23 // pred_region
          %s299 = sand.u32 %s17, 1
          %s300 = scalar_lea.sflag [#allocation3], %s299
          %s301 = sand.u32 %s147, 1
          %s302 = scalar_lea.vmem [#allocation10], %s301
          %304 = vsyncadd %s300, 0
          %s305 = scalar_lea.hbm %s5, %s17
          %s307 = sshll.u32 %s305, 4
          %s308 = int_to_ptr.hbm [resolvable:$true] %s307
          %s309 = sshll.u32 %s302, 4
          %s310 = int_to_ptr.vmem [resolvable:$true] %s309
          %312 = dma.hbm_to_vmem [thread:$0]  %s308, 16, %s310, %s300
        $region40: #{tpu_custom_call.1} parent=23 // pred_fallthru
          _
      $region24: #{tpu_custom_call.1} parent=5 // pred_fallthru
        _
      %p313 = scmp.le.s32.totalorder 1, %s17
      %p314 = scmp.lt.s32.totalorder %s17, 5
      %p315 = pnand %p313, %p314
      %p316 = pneg %p315
      // Predicated region
      $region41: #{tpu_custom_call.1} parent=5 // pred_check
        _
      $region42: #{tpu_custom_call.1} parent=5 // pred_check_branch
        %318 = sbr.rel (%p315) target = $region44
      $region43: #{tpu_custom_call.1} parent=5 // pred_region
        %s319 = ssub.s32 %s17, 1
        // Predicated region
        $region45: #{tpu_custom_call.1} parent=43 // pred_check
          %p320 = pneg %p38
        $region46: #{tpu_custom_call.1} parent=43 // pred_check_branch
          %322 = sbr.rel (%p320) target = $region48
        $region47: #{tpu_custom_call.1} parent=43 // pred_region
          %324 = dma.done [#allocation3], 32
        $region48: #{tpu_custom_call.1} parent=43 // pred_fallthru
          _
        // Predicated region
        $region49: #{tpu_custom_call.1} parent=43 // pred_check
          %p325 = pneg %p59
        $region50: #{tpu_custom_call.1} parent=43 // pred_check_branch
          %327 = sbr.rel (%p325) target = $region52
        $region51: #{tpu_custom_call.1} parent=43 // pred_region
          %329 = dma.done [#allocation6], 512
        $region52: #{tpu_custom_call.1} parent=43 // pred_fallthru
          _
        %s330 = sand.u32 %s22, 1
        %s331 = scalar_lea.sflag [#allocation3], %s330
        %s332 = sand.u32 %s72, 1
        %s333 = smul.addr %s332, 4096
        %s334 = scalar_lea.vmem [#allocation7], %s333
        // Predicated region
        $region53: #{tpu_custom_call.1} parent=43 // pred_check
          %p335 = pneg %p85
        $region54: #{tpu_custom_call.1} parent=43 // pred_check_branch
          %337 = sbr.rel (%p335) target = $region56
        $region55: #{tpu_custom_call.1} parent=43 // pred_region
          %339 = dma.done %s331, 65536
        $region56: #{tpu_custom_call.1} parent=43 // pred_fallthru
          _
        %s340 = sand.u32 %s22, 1
        %s341 = scalar_lea.sflag [#allocation3], %s340
        %s342 = sand.u32 %s98, 1
        %s343 = smul.addr %s342, 32
        %s344 = scalar_lea.vmem [#allocation8], %s343
        // Predicated region
        $region57: #{tpu_custom_call.1} parent=43 // pred_check
          %p345 = pneg %p111
        $region58: #{tpu_custom_call.1} parent=43 // pred_check_branch
          %347 = sbr.rel (%p345) target = $region60
        $region59: #{tpu_custom_call.1} parent=43 // pred_region
          %349 = dma.done %s341, 512
        $region60: #{tpu_custom_call.1} parent=43 // pred_fallthru
          _
        %s350 = sand.u32 %s22, 1
        %s351 = scalar_lea.sflag [#allocation3], %s350
        %s352 = sand.u32 %s124, 1
        %s353 = smul.addr %s352, 512
        %s354 = scalar_lea.vmem [#allocation9], %s353
        // Predicated region
        $region61: #{tpu_custom_call.1} parent=43 // pred_check
          %p355 = pneg %p137
        $region62: #{tpu_custom_call.1} parent=43 // pred_check_branch
          %357 = sbr.rel (%p355) target = $region64
        $region63: #{tpu_custom_call.1} parent=43 // pred_region
          %359 = dma.done %s351, 8192
        $region64: #{tpu_custom_call.1} parent=43 // pred_fallthru
          _
        %s360 = sand.u32 %s22, 1
        %s361 = scalar_lea.sflag [#allocation3], %s360
        %s362 = sand.u32 %s150, 1
        %s363 = scalar_lea.vmem [#allocation10], %s362
        // Predicated region
        $region65: #{tpu_custom_call.1} parent=43 // pred_check
          %p364 = pneg %p163
        $region66: #{tpu_custom_call.1} parent=43 // pred_check_branch
          %366 = sbr.rel (%p364) target = $region68
        $region67: #{tpu_custom_call.1} parent=43 // pred_region
          %368 = dma.done %s361, 16
        $region68: #{tpu_custom_call.1} parent=43 // pred_fallthru
          _
        %p369 = pneg %p38
        %p370 = pneg %p35
        %p371 = pneg %p59
        %p372 = pneg %p56
        %s373 = sand.u32 %s22, 1
        %s374 = scalar_lea.sflag [#allocation3], %s373
        %s375 = sand.u32 %s72, 1
        %s376 = smul.addr %s375, 4096
        %s377 = scalar_lea.vmem [#allocation7], %s376
        %p378 = pneg %p85
        %p379 = pneg %p82
        %s380 = sand.u32 %s22, 1
        %s381 = scalar_lea.sflag [#allocation3], %s380
        %s382 = sand.u32 %s98, 1
        %s383 = smul.addr %s382, 32
        %s384 = scalar_lea.vmem [#allocation8], %s383
        %p385 = pneg %p111
        %p386 = pneg %p108
        %s387 = sand.u32 %s22, 1
        %s388 = scalar_lea.sflag [#allocation3], %s387
        %s389 = sand.u32 %s124, 1
        %s390 = smul.addr %s389, 512
        %s391 = scalar_lea.vmem [#allocation9], %s390
        %p392 = pneg %p137
        %p393 = pneg %p134
        %s394 = sand.u32 %s22, 1
        %s395 = scalar_lea.sflag [#allocation3], %s394
        %s396 = sand.u32 %s150, 1
        %s397 = scalar_lea.vmem [#allocation10], %s396
        %p398 = pneg %p163
        %p399 = pneg %p160
        %p400 = pneg %p189
        %p401 = pneg %p186
        %s402 = sand.u32 %s176, 1
        %s403 = scalar_lea.sflag [#allocation4], %s402
        %s404 = sand.u32 %s176, 1
        %s405 = smul.addr %s404, 2
        %s406 = scalar_lea.vmem [#allocation11], %s405
        %s407 = smul.u32 8, %s22
        %s408 = smul.u32 8, %s22
        %s409 = smul.u32 128, %s22
        %v410 = vld [vmem:[#allocation2] sm:$0x3]
        %v411 = vld [vmem:[#allocation5] sm:$0xff]
        %v412 = vld [vmem:[#allocation5 + $0x8] sm:$0xff]
        %v413 = vld [vmem:[#allocation5 + $0x10] sm:$0xff]
        %v414 = vld [vmem:[#allocation5 + $0x18] sm:$0xff]
        %v415 = vunpack.c.l.bf16 %v411
        %v416 = vunpack.c.h.bf16 %v411
        %v417 = vunpack.c.l.bf16 %v412
        %v418 = vunpack.c.h.bf16 %v412
        %v419 = vunpack.c.l.bf16 %v413
        %v420 = vunpack.c.h.bf16 %v413
        %v421 = vunpack.c.l.bf16 %v414
        %v422 = vunpack.c.h.bf16 %v414
        %424 = vset.pattern.permute.xlu0 0
        %425 = vperm.xlu0 %424, %v410
        %v426 = vpop.permute.xlu0 %425
        %v428 = vperm.slane %v415, 0
        %v429 = vperm.slane %v416, 0
        %v430 = vperm.slane %v417, 0
        %v431 = vperm.slane %v418, 0
        %v432 = vperm.slane %v419, 0
        %v433 = vperm.slane %v420, 0
        %v434 = vperm.slane %v421, 0
        %v435 = vperm.slane %v422, 0
        %v436 = vmul.f32 %v426, %v428
        %v437 = vmul.f32 %v426, %v429
        %v438 = vmul.f32 %v426, %v430
        %v439 = vmul.f32 %v426, %v431
        %v440 = vmul.f32 %v426, %v432
        %v441 = vmul.f32 %v426, %v433
        %v442 = vmul.f32 %v426, %v434
        %v443 = vmul.f32 %v426, %v435
        %444 = vset.pattern.permute.xlu0 1
        %445 = vperm.xlu0 %444, %v410
        %v446 = vpop.permute.xlu0 %445
        %v448 = vperm.slane %v415, 1
        %v449 = vperm.slane %v416, 1
        %v450 = vperm.slane %v417, 1
        %v451 = vperm.slane %v418, 1
        %v452 = vperm.slane %v419, 1
        %v453 = vperm.slane %v420, 1
        %v454 = vperm.slane %v421, 1
        %v455 = vperm.slane %v422, 1
        %v456 = vmul.f32 %v446, %v448
        %v457 = vmul.f32 %v446, %v449
        %v458 = vmul.f32 %v446, %v450
        %v459 = vmul.f32 %v446, %v451
        %v460 = vmul.f32 %v446, %v452
        %v461 = vmul.f32 %v446, %v453
        %v462 = vmul.f32 %v446, %v454
        %v463 = vmul.f32 %v446, %v455
        %v464 = vadd.f32 %v436, %v456
        %v465 = vadd.f32 %v437, %v457
        %v466 = vadd.f32 %v438, %v458
        %v467 = vadd.f32 %v439, %v459
        %v468 = vadd.f32 %v440, %v460
        %v469 = vadd.f32 %v441, %v461
        %v470 = vadd.f32 %v442, %v462
        %v471 = vadd.f32 %v443, %v463
        %472 = vset.pattern.permute.xlu0 2
        %473 = vperm.xlu0 %472, %v410
        %v474 = vpop.permute.xlu0 %473
        %v476 = vperm.slane %v415, 2
        %v477 = vperm.slane %v416, 2
        %v478 = vperm.slane %v417, 2
        %v479 = vperm.slane %v418, 2
        %v480 = vperm.slane %v419, 2
        %v481 = vperm.slane %v420, 2
        %v482 = vperm.slane %v421, 2
        %v483 = vperm.slane %v422, 2
        %v484 = vmul.f32 %v474, %v476
        %v485 = vmul.f32 %v474, %v477
        %v486 = vmul.f32 %v474, %v478
        %v487 = vmul.f32 %v474, %v479
        %v488 = vmul.f32 %v474, %v480
        %v489 = vmul.f32 %v474, %v481
        %v490 = vmul.f32 %v474, %v482
        %v491 = vmul.f32 %v474, %v483
        %v492 = vadd.f32 %v464, %v484
        %v493 = vadd.f32 %v465, %v485
        %v494 = vadd.f32 %v466, %v486
        %v495 = vadd.f32 %v467, %v487
        %v496 = vadd.f32 %v468, %v488
        %v497 = vadd.f32 %v469, %v489
        %v498 = vadd.f32 %v470, %v490
        %v499 = vadd.f32 %v471, %v491
        %500 = vset.pattern.permute.xlu0 3
        %501 = vperm.xlu0 %500, %v410
        %v502 = vpop.permute.xlu0 %501
        %v504 = vperm.slane %v415, 3
        %v505 = vperm.slane %v416, 3
        %v506 = vperm.slane %v417, 3
        %v507 = vperm.slane %v418, 3
        %v508 = vperm.slane %v419, 3
        %v509 = vperm.slane %v420, 3
        %v510 = vperm.slane %v421, 3
        %v511 = vperm.slane %v422, 3
        %v512 = vmul.f32 %v502, %v504
        %v513 = vmul.f32 %v502, %v505
        %v514 = vmul.f32 %v502, %v506
        %v515 = vmul.f32 %v502, %v507
        %v516 = vmul.f32 %v502, %v508
        %v517 = vmul.f32 %v502, %v509
        %v518 = vmul.f32 %v502, %v510
        %v519 = vmul.f32 %v502, %v511
        %v520 = vadd.f32 %v492, %v512
        %v521 = vadd.f32 %v493, %v513
        %v522 = vadd.f32 %v494, %v514
        %v523 = vadd.f32 %v495, %v515
        %v524 = vadd.f32 %v496, %v516
        %v525 = vadd.f32 %v497, %v517
        %v526 = vadd.f32 %v498, %v518
        %v527 = vadd.f32 %v499, %v519
        %528 = vset.pattern.permute.xlu0 4
        %529 = vperm.xlu0 %528, %v410
        %v530 = vpop.permute.xlu0 %529
        %v532 = vperm.slane %v415, 4
        %v533 = vperm.slane %v416, 4
        %v534 = vperm.slane %v417, 4
        %v535 = vperm.slane %v418, 4
        %v536 = vperm.slane %v419, 4
        %v537 = vperm.slane %v420, 4
        %v538 = vperm.slane %v421, 4
        %v539 = vperm.slane %v422, 4
        %v540 = vmul.f32 %v530, %v532
        %v541 = vmul.f32 %v530, %v533
        %v542 = vmul.f32 %v530, %v534
        %v543 = vmul.f32 %v530, %v535
        %v544 = vmul.f32 %v530, %v536
        %v545 = vmul.f32 %v530, %v537
        %v546 = vmul.f32 %v530, %v538
        %v547 = vmul.f32 %v530, %v539
        %v548 = vadd.f32 %v520, %v540
        %v549 = vadd.f32 %v521, %v541
        %v550 = vadd.f32 %v522, %v542
        %v551 = vadd.f32 %v523, %v543
        %v552 = vadd.f32 %v524, %v544
        %v553 = vadd.f32 %v525, %v545
        %v554 = vadd.f32 %v526, %v546
        %v555 = vadd.f32 %v527, %v547
        %556 = vset.pattern.permute.xlu0 5
        %557 = vperm.xlu0 %556, %v410
        %v558 = vpop.permute.xlu0 %557
        %v560 = vperm.slane %v415, 5
        %v561 = vperm.slane %v416, 5
        %v562 = vperm.slane %v417, 5
        %v563 = vperm.slane %v418, 5
        %v564 = vperm.slane %v419, 5
        %v565 = vperm.slane %v420, 5
        %v566 = vperm.slane %v421, 5
        %v567 = vperm.slane %v422, 5
        %v568 = vmul.f32 %v558, %v560
        %v569 = vmul.f32 %v558, %v561
        %v570 = vmul.f32 %v558, %v562
        %v571 = vmul.f32 %v558, %v563
        %v572 = vmul.f32 %v558, %v564
        %v573 = vmul.f32 %v558, %v565
        %v574 = vmul.f32 %v558, %v566
        %v575 = vmul.f32 %v558, %v567
        %v576 = vadd.f32 %v548, %v568
        %v577 = vadd.f32 %v549, %v569
        %v578 = vadd.f32 %v550, %v570
        %v579 = vadd.f32 %v551, %v571
        %v580 = vadd.f32 %v552, %v572
        %v581 = vadd.f32 %v553, %v573
        %v582 = vadd.f32 %v554, %v574
        %v583 = vadd.f32 %v555, %v575
        %584 = vset.pattern.permute.xlu0 6
        %585 = vperm.xlu0 %584, %v410
        %v586 = vpop.permute.xlu0 %585
        %v588 = vperm.slane %v415, 6
        %v589 = vperm.slane %v416, 6
        %v590 = vperm.slane %v417, 6
        %v591 = vperm.slane %v418, 6
        %v592 = vperm.slane %v419, 6
        %v593 = vperm.slane %v420, 6
        %v594 = vperm.slane %v421, 6
        %v595 = vperm.slane %v422, 6
        %v596 = vmul.f32 %v586, %v588
        %v597 = vmul.f32 %v586, %v589
        %v598 = vmul.f32 %v586, %v590
        %v599 = vmul.f32 %v586, %v591
        %v600 = vmul.f32 %v586, %v592
        %v601 = vmul.f32 %v586, %v593
        %v602 = vmul.f32 %v586, %v594
        %v603 = vmul.f32 %v586, %v595
        %v604 = vadd.f32 %v576, %v596
        %v605 = vadd.f32 %v577, %v597
        %v606 = vadd.f32 %v578, %v598
        %v607 = vadd.f32 %v579, %v599
        %v608 = vadd.f32 %v580, %v600
        %v609 = vadd.f32 %v581, %v601
        %v610 = vadd.f32 %v582, %v602
        %v611 = vadd.f32 %v583, %v603
        %612 = vset.pattern.permute.xlu0 7
        %613 = vperm.xlu0 %612, %v410
        %v614 = vpop.permute.xlu0 %613
        %v616 = vperm.slane %v415, 7
        %v617 = vperm.slane %v416, 7
        %v618 = vperm.slane %v417, 7
        %v619 = vperm.slane %v418, 7
        %v620 = vperm.slane %v419, 7
        %v621 = vperm.slane %v420, 7
        %v622 = vperm.slane %v421, 7
        %v623 = vperm.slane %v422, 7
        %v624 = vmul.f32 %v614, %v616
        %v625 = vmul.f32 %v614, %v617
        %v626 = vmul.f32 %v614, %v618
        %v627 = vmul.f32 %v614, %v619
        %v628 = vmul.f32 %v614, %v620
        %v629 = vmul.f32 %v614, %v621
        %v630 = vmul.f32 %v614, %v622
        %v631 = vmul.f32 %v614, %v623
        %v632 = vadd.f32 %v604, %v624
        %v633 = vadd.f32 %v605, %v625
        %v634 = vadd.f32 %v606, %v626
        %v635 = vadd.f32 %v607, %v627
        %v636 = vadd.f32 %v608, %v628
        %v637 = vadd.f32 %v609, %v629
        %v638 = vadd.f32 %v610, %v630
        %v639 = vadd.f32 %v611, %v631
        %v640 = vld [vmem:[%s344] ss:$4 sm:$0xff]
        %s641 = scalar_lea.vmem %s344, 1 [#allocation8]
        %v642 = vld [vmem:[%s641] ss:$4 sm:$0xff]
        %s643 = scalar_lea.vmem %s344, 2 [#allocation8]
        %v644 = vld [vmem:[%s643] ss:$4 sm:$0xff]
        %v645 = vpack.c.bf16 %v632, %v632
        %v646 = vpack.c.bf16 %v633, %v633
        %v647 = vpack.c.bf16 %v634, %v634
        %v648 = vpack.c.bf16 %v635, %v635
        %v649 = vpack.c.bf16 %v636, %v636
        %v650 = vpack.c.bf16 %v637, %v637
        %v651 = vpack.c.bf16 %v638, %v638
        %v652 = vpack.c.bf16 %v639, %v639
        %v653 = vld [vmem:[%s334] sm:$0xff]
        %v654 = vld [vmem:[%s334 + $0x8] sm:$0xff]
        %v655 = vld [vmem:[%s334 + $0x10] sm:$0xff]
        %v656 = vld [vmem:[%s334 + $0x18] sm:$0xff]
        %v657 = vld [vmem:[%s334 + $0x20] sm:$0xff]
        %v658 = vld [vmem:[%s334 + $0x28] sm:$0xff]
        %v659 = vld [vmem:[%s334 + $0x30] sm:$0xff]
        %v660 = vld [vmem:[%s334 + $0x38] sm:$0xff]
        %v661 = vld [vmem:[%s334 + $0x40] sm:$0xff]
        %v662 = vld [vmem:[%s334 + $0x48] sm:$0xff]
        %v663 = vld [vmem:[%s334 + $0x50] sm:$0xff]
        %v664 = vld [vmem:[%s334 + $0x58] sm:$0xff]
        %v665 = vld [vmem:[%s334 + $0x60] sm:$0xff]
        %v666 = vld [vmem:[%s334 + $0x68] sm:$0xff]
        %v667 = vld [vmem:[%s334 + $0x70] sm:$0xff]
        %v668 = vld [vmem:[%s334 + $0x78] sm:$0xff]
        %v669 = vld [vmem:[%s334 + $0x80] sm:$0xff]
        %v670 = vld [vmem:[%s334 + $0x88] sm:$0xff]
        %v671 = vld [vmem:[%s334 + $0x90] sm:$0xff]
        %v672 = vld [vmem:[%s334 + $0x98] sm:$0xff]
        %v673 = vld [vmem:[%s334 + $0xa0] sm:$0xff]
        %v674 = vld [vmem:[%s334 + $0xa8] sm:$0xff]
        %v675 = vld [vmem:[%s334 + $0xb0] sm:$0xff]
        %v676 = vld [vmem:[%s334 + $0xb8] sm:$0xff]
        %v677 = vld [vmem:[%s334 + $0xc0] sm:$0xff]
        %v678 = vld [vmem:[%s334 + $0xc8] sm:$0xff]
        %v679 = vld [vmem:[%s334 + $0xd0] sm:$0xff]
        %v680 = vld [vmem:[%s334 + $0xd8] sm:$0xff]
        %v681 = vld [vmem:[%s334 + $0xe0] sm:$0xff]
        %v682 = vld [vmem:[%s334 + $0xe8] sm:$0xff]
        %v683 = vld [vmem:[%s334 + $0xf0] sm:$0xff]
        %v684 = vld [vmem:[%s334 + $0xf8] sm:$0xff]
        %v685 = vld [vmem:[%s334 + $0x100] sm:$0xff]
        %v686 = vld [vmem:[%s334 + $0x108] sm:$0xff]
        %v687 = vld [vmem:[%s334 + $0x110] sm:$0xff]
        %v688 = vld [vmem:[%s334 + $0x118] sm:$0xff]
        %v689 = vld [vmem:[%s334 + $0x120] sm:$0xff]
        %v690 = vld [vmem:[%s334 + $0x128] sm:$0xff]
        %v691 = vld [vmem:[%s334 + $0x130] sm:$0xff]
        %v692 = vld [vmem:[%s334 + $0x138] sm:$0xff]
        %v693 = vld [vmem:[%s334 + $0x140] sm:$0xff]
        %v694 = vld [vmem:[%s334 + $0x148] sm:$0xff]
        %v695 = vld [vmem:[%s334 + $0x150] sm:$0xff]
        %v696 = vld [vmem:[%s334 + $0x158] sm:$0xff]
        %v697 = vld [vmem:[%s334 + $0x160] sm:$0xff]
        %v698 = vld [vmem:[%s334 + $0x168] sm:$0xff]
        %v699 = vld [vmem:[%s334 + $0x170] sm:$0xff]
        %v700 = vld [vmem:[%s334 + $0x178] sm:$0xff]
        %v701 = vld [vmem:[%s334 + $0x180] sm:$0xff]
        %v702 = vld [vmem:[%s334 + $0x188] sm:$0xff]
        %v703 = vld [vmem:[%s334 + $0x190] sm:$0xff]
        %v704 = vld [vmem:[%s334 + $0x198] sm:$0xff]
        %v705 = vld [vmem:[%s334 + $0x1a0] sm:$0xff]
        %v706 = vld [vmem:[%s334 + $0x1a8] sm:$0xff]
        %v707 = vld [vmem:[%s334 + $0x1b0] sm:$0xff]
        %v708 = vld [vmem:[%s334 + $0x1b8] sm:$0xff]
        %v709 = vld [vmem:[%s334 + $0x1c0] sm:$0xff]
        %v710 = vld [vmem:[%s334 + $0x1c8] sm:$0xff]
        %v711 = vld [vmem:[%s334 + $0x1d0] sm:$0xff]
        %v712 = vld [vmem:[%s334 + $0x1d8] sm:$0xff]
        %v713 = vld [vmem:[%s334 + $0x1e0] sm:$0xff]
        %v714 = vld [vmem:[%s334 + $0x1e8] sm:$0xff]
        %v715 = vld [vmem:[%s334 + $0x1f0] sm:$0xff]
        %v716 = vld [vmem:[%s334 + $0x1f8] sm:$0xff]
        %v717 = vld [vmem:[%s334 + $0x200] sm:$0xff]
        %v718 = vld [vmem:[%s334 + $0x208] sm:$0xff]
        %v719 = vld [vmem:[%s334 + $0x210] sm:$0xff]
        %v720 = vld [vmem:[%s334 + $0x218] sm:$0xff]
        %v721 = vld [vmem:[%s334 + $0x220] sm:$0xff]
        %v722 = vld [vmem:[%s334 + $0x228] sm:$0xff]
        %v723 = vld [vmem:[%s334 + $0x230] sm:$0xff]
        %v724 = vld [vmem:[%s334 + $0x238] sm:$0xff]
        %v725 = vld [vmem:[%s334 + $0x240] sm:$0xff]
        %v726 = vld [vmem:[%s334 + $0x248] sm:$0xff]
        %v727 = vld [vmem:[%s334 + $0x250] sm:$0xff]
        %v728 = vld [vmem:[%s334 + $0x258] sm:$0xff]
        %v729 = vld [vmem:[%s334 + $0x260] sm:$0xff]
        %v730 = vld [vmem:[%s334 + $0x268] sm:$0xff]
        %v731 = vld [vmem:[%s334 + $0x270] sm:$0xff]
        %v732 = vld [vmem:[%s334 + $0x278] sm:$0xff]
        %v733 = vld [vmem:[%s334 + $0x280] sm:$0xff]
        %v734 = vld [vmem:[%s334 + $0x288] sm:$0xff]
        %v735 = vld [vmem:[%s334 + $0x290] sm:$0xff]
        %v736 = vld [vmem:[%s334 + $0x298] sm:$0xff]
        %v737 = vld [vmem:[%s334 + $0x2a0] sm:$0xff]
        %v738 = vld [vmem:[%s334 + $0x2a8] sm:$0xff]
        %v739 = vld [vmem:[%s334 + $0x2b0] sm:$0xff]
        %v740 = vld [vmem:[%s334 + $0x2b8] sm:$0xff]
        %v741 = vld [vmem:[%s334 + $0x2c0] sm:$0xff]
        %v742 = vld [vmem:[%s334 + $0x2c8] sm:$0xff]
        %v743 = vld [vmem:[%s334 + $0x2d0] sm:$0xff]
        %v744 = vld [vmem:[%s334 + $0x2d8] sm:$0xff]
        %v745 = vld [vmem:[%s334 + $0x2e0] sm:$0xff]
        %v746 = vld [vmem:[%s334 + $0x2e8] sm:$0xff]
        %v747 = vld [vmem:[%s334 + $0x2f0] sm:$0xff]
        %v748 = vld [vmem:[%s334 + $0x2f8] sm:$0xff]
        %v749 = vld [vmem:[%s334 + $0x300] sm:$0xff]
        %v750 = vld [vmem:[%s334 + $0x308] sm:$0xff]
        %v751 = vld [vmem:[%s334 + $0x310] sm:$0xff]
        %v752 = vld [vmem:[%s334 + $0x318] sm:$0xff]
        %v753 = vld [vmem:[%s334 + $0x320] sm:$0xff]
        %v754 = vld [vmem:[%s334 + $0x328] sm:$0xff]
        %v755 = vld [vmem:[%s334 + $0x330] sm:$0xff]
        %v756 = vld [vmem:[%s334 + $0x338] sm:$0xff]
        %v757 = vld [vmem:[%s334 + $0x340] sm:$0xff]
        %v758 = vld [vmem:[%s334 + $0x348] sm:$0xff]
        %v759 = vld [vmem:[%s334 + $0x350] sm:$0xff]
        %v760 = vld [vmem:[%s334 + $0x358] sm:$0xff]
        %v761 = vld [vmem:[%s334 + $0x360] sm:$0xff]
        %v762 = vld [vmem:[%s334 + $0x368] sm:$0xff]
        %v763 = vld [vmem:[%s334 + $0x370] sm:$0xff]
        %v764 = vld [vmem:[%s334 + $0x378] sm:$0xff]
        %v765 = vld [vmem:[%s334 + $0x380] sm:$0xff]
        %v766 = vld [vmem:[%s334 + $0x388] sm:$0xff]
        %v767 = vld [vmem:[%s334 + $0x390] sm:$0xff]
        %v768 = vld [vmem:[%s334 + $0x398] sm:$0xff]
        %v769 = vld [vmem:[%s334 + $0x3a0] sm:$0xff]
        %v770 = vld [vmem:[%s334 + $0x3a8] sm:$0xff]
        %v771 = vld [vmem:[%s334 + $0x3b0] sm:$0xff]
        %v772 = vld [vmem:[%s334 + $0x3b8] sm:$0xff]
        %v773 = vld [vmem:[%s334 + $0x3c0] sm:$0xff]
        %v774 = vld [vmem:[%s334 + $0x3c8] sm:$0xff]
        %v775 = vld [vmem:[%s334 + $0x3d0] sm:$0xff]
        %v776 = vld [vmem:[%s334 + $0x3d8] sm:$0xff]
        %v777 = vld [vmem:[%s334 + $0x3e0] sm:$0xff]
        %v778 = vld [vmem:[%s334 + $0x3e8] sm:$0xff]
        %v779 = vld [vmem:[%s334 + $0x3f0] sm:$0xff]
        %v780 = vld [vmem:[%s334 + $0x3f8] sm:$0xff]
        %v781 = vld [vmem:[%s334 + $0x400] sm:$0xff]
        %v782 = vld [vmem:[%s334 + $0x408] sm:$0xff]
        %v783 = vld [vmem:[%s334 + $0x410] sm:$0xff]
        %v784 = vld [vmem:[%s334 + $0x418] sm:$0xff]
        %v785 = vld [vmem:[%s334 + $0x420] sm:$0xff]
        %v786 = vld [vmem:[%s334 + $0x428] sm:$0xff]
        %v787 = vld [vmem:[%s334 + $0x430] sm:$0xff]
        %v788 = vld [vmem:[%s334 + $0x438] sm:$0xff]
        %v789 = vld [vmem:[%s334 + $0x440] sm:$0xff]
        %v790 = vld [vmem:[%s334 + $0x448] sm:$0xff]
        %v791 = vld [vmem:[%s334 + $0x450] sm:$0xff]
        %v792 = vld [vmem:[%s334 + $0x458] sm:$0xff]
        %v793 = vld [vmem:[%s334 + $0x460] sm:$0xff]
        %v794 = vld [vmem:[%s334 + $0x468] sm:$0xff]
        %v795 = vld [vmem:[%s334 + $0x470] sm:$0xff]
        %v796 = vld [vmem:[%s334 + $0x478] sm:$0xff]
        %v797 = vld [vmem:[%s334 + $0x480] sm:$0xff]
        %v798 = vld [vmem:[%s334 + $0x488] sm:$0xff]
        %v799 = vld [vmem:[%s334 + $0x490] sm:$0xff]
        %v800 = vld [vmem:[%s334 + $0x498] sm:$0xff]
        %v801 = vld [vmem:[%s334 + $0x4a0] sm:$0xff]
        %v802 = vld [vmem:[%s334 + $0x4a8] sm:$0xff]
        %v803 = vld [vmem:[%s334 + $0x4b0] sm:$0xff]
        %v804 = vld [vmem:[%s334 + $0x4b8] sm:$0xff]
        %v805 = vld [vmem:[%s334 + $0x4c0] sm:$0xff]
        %v806 = vld [vmem:[%s334 + $0x4c8] sm:$0xff]
        %v807 = vld [vmem:[%s334 + $0x4d0] sm:$0xff]
        %v808 = vld [vmem:[%s334 + $0x4d8] sm:$0xff]
        %v809 = vld [vmem:[%s334 + $0x4e0] sm:$0xff]
        %v810 = vld [vmem:[%s334 + $0x4e8] sm:$0xff]
        %v811 = vld [vmem:[%s334 + $0x4f0] sm:$0xff]
        %v812 = vld [vmem:[%s334 + $0x4f8] sm:$0xff]
        %v813 = vld [vmem:[%s334 + $0x500] sm:$0xff]
        %v814 = vld [vmem:[%s334 + $0x508] sm:$0xff]
        %v815 = vld [vmem:[%s334 + $0x510] sm:$0xff]
        %v816 = vld [vmem:[%s334 + $0x518] sm:$0xff]
        %v817 = vld [vmem:[%s334 + $0x520] sm:$0xff]
        %v818 = vld [vmem:[%s334 + $0x528] sm:$0xff]
        %v819 = vld [vmem:[%s334 + $0x530] sm:$0xff]
        %v820 = vld [vmem:[%s334 + $0x538] sm:$0xff]
        %v821 = vld [vmem:[%s334 + $0x540] sm:$0xff]
        %v822 = vld [vmem:[%s334 + $0x548] sm:$0xff]
        %v823 = vld [vmem:[%s334 + $0x550] sm:$0xff]
        %v824 = vld [vmem:[%s334 + $0x558] sm:$0xff]
        %v825 = vld [vmem:[%s334 + $0x560] sm:$0xff]
        %v826 = vld [vmem:[%s334 + $0x568] sm:$0xff]
        %v827 = vld [vmem:[%s334 + $0x570] sm:$0xff]
        %v828 = vld [vmem:[%s334 + $0x578] sm:$0xff]
        %v829 = vld [vmem:[%s334 + $0x580] sm:$0xff]
        %v830 = vld [vmem:[%s334 + $0x588] sm:$0xff]
        %v831 = vld [vmem:[%s334 + $0x590] sm:$0xff]
        %v832 = vld [vmem:[%s334 + $0x598] sm:$0xff]
        %v833 = vld [vmem:[%s334 + $0x5a0] sm:$0xff]
        %v834 = vld [vmem:[%s334 + $0x5a8] sm:$0xff]
        %v835 = vld [vmem:[%s334 + $0x5b0] sm:$0xff]
        %v836 = vld [vmem:[%s334 + $0x5b8] sm:$0xff]
        %v837 = vld [vmem:[%s334 + $0x5c0] sm:$0xff]
        %v838 = vld [vmem:[%s334 + $0x5c8] sm:$0xff]
        %v839 = vld [vmem:[%s334 + $0x5d0] sm:$0xff]
        %v840 = vld [vmem:[%s334 + $0x5d8] sm:$0xff]
        %v841 = vld [vmem:[%s334 + $0x5e0] sm:$0xff]
        %v842 = vld [vmem:[%s334 + $0x5e8] sm:$0xff]
        %v843 = vld [vmem:[%s334 + $0x5f0] sm:$0xff]
        %v844 = vld [vmem:[%s334 + $0x5f8] sm:$0xff]
        %v845 = vld [vmem:[%s334 + $0x600] sm:$0xff]
        %v846 = vld [vmem:[%s334 + $0x608] sm:$0xff]
        %v847 = vld [vmem:[%s334 + $0x610] sm:$0xff]
        %v848 = vld [vmem:[%s334 + $0x618] sm:$0xff]
        %v849 = vld [vmem:[%s334 + $0x620] sm:$0xff]
        %v850 = vld [vmem:[%s334 + $0x628] sm:$0xff]
        %v851 = vld [vmem:[%s334 + $0x630] sm:$0xff]
        %v852 = vld [vmem:[%s334 + $0x638] sm:$0xff]
        %v853 = vld [vmem:[%s334 + $0x640] sm:$0xff]
        %v854 = vld [vmem:[%s334 + $0x648] sm:$0xff]
        %v855 = vld [vmem:[%s334 + $0x650] sm:$0xff]
        %v856 = vld [vmem:[%s334 + $0x658] sm:$0xff]
        %v857 = vld [vmem:[%s334 + $0x660] sm:$0xff]
        %v858 = vld [vmem:[%s334 + $0x668] sm:$0xff]
        %v859 = vld [vmem:[%s334 + $0x670] sm:$0xff]
        %v860 = vld [vmem:[%s334 + $0x678] sm:$0xff]
        %v861 = vld [vmem:[%s334 + $0x680] sm:$0xff]
        %v862 = vld [vmem:[%s334 + $0x688] sm:$0xff]
        %v863 = vld [vmem:[%s334 + $0x690] sm:$0xff]
        %v864 = vld [vmem:[%s334 + $0x698] sm:$0xff]
        %v865 = vld [vmem:[%s334 + $0x6a0] sm:$0xff]
        %v866 = vld [vmem:[%s334 + $0x6a8] sm:$0xff]
        %v867 = vld [vmem:[%s334 + $0x6b0] sm:$0xff]
        %v868 = vld [vmem:[%s334 + $0x6b8] sm:$0xff]
        %v869 = vld [vmem:[%s334 + $0x6c0] sm:$0xff]
        %v870 = vld [vmem:[%s334 + $0x6c8] sm:$0xff]
        %v871 = vld [vmem:[%s334 + $0x6d0] sm:$0xff]
        %v872 = vld [vmem:[%s334 + $0x6d8] sm:$0xff]
        %v873 = vld [vmem:[%s334 + $0x6e0] sm:$0xff]
        %v874 = vld [vmem:[%s334 + $0x6e8] sm:$0xff]
        %v875 = vld [vmem:[%s334 + $0x6f0] sm:$0xff]
        %v876 = vld [vmem:[%s334 + $0x6f8] sm:$0xff]
        %v877 = vld [vmem:[%s334 + $0x700] sm:$0xff]
        %v878 = vld [vmem:[%s334 + $0x708] sm:$0xff]
        %v879 = vld [vmem:[%s334 + $0x710] sm:$0xff]
        %v880 = vld [vmem:[%s334 + $0x718] sm:$0xff]
        %v881 = vld [vmem:[%s334 + $0x720] sm:$0xff]
        %v882 = vld [vmem:[%s334 + $0x728] sm:$0xff]
        %v883 = vld [vmem:[%s334 + $0x730] sm:$0xff]
        %v884 = vld [vmem:[%s334 + $0x738] sm:$0xff]
        %v885 = vld [vmem:[%s334 + $0x740] sm:$0xff]
        %v886 = vld [vmem:[%s334 + $0x748] sm:$0xff]
        %v887 = vld [vmem:[%s334 + $0x750] sm:$0xff]
        %v888 = vld [vmem:[%s334 + $0x758] sm:$0xff]
        %v889 = vld [vmem:[%s334 + $0x760] sm:$0xff]
        %v890 = vld [vmem:[%s334 + $0x768] sm:$0xff]
        %v891 = vld [vmem:[%s334 + $0x770] sm:$0xff]
        %v892 = vld [vmem:[%s334 + $0x778] sm:$0xff]
        %v893 = vld [vmem:[%s334 + $0x780] sm:$0xff]
        %v894 = vld [vmem:[%s334 + $0x788] sm:$0xff]
        %v895 = vld [vmem:[%s334 + $0x790] sm:$0xff]
        %v896 = vld [vmem:[%s334 + $0x798] sm:$0xff]
        %v897 = vld [vmem:[%s334 + $0x7a0] sm:$0xff]
        %v898 = vld [vmem:[%s334 + $0x7a8] sm:$0xff]
        %v899 = vld [vmem:[%s334 + $0x7b0] sm:$0xff]
        %v900 = vld [vmem:[%s334 + $0x7b8] sm:$0xff]
        %v901 = vld [vmem:[%s334 + $0x7c0] sm:$0xff]
        %v902 = vld [vmem:[%s334 + $0x7c8] sm:$0xff]
        %v903 = vld [vmem:[%s334 + $0x7d0] sm:$0xff]
        %v904 = vld [vmem:[%s334 + $0x7d8] sm:$0xff]
        %v905 = vld [vmem:[%s334 + $0x7e0] sm:$0xff]
        %v906 = vld [vmem:[%s334 + $0x7e8] sm:$0xff]
        %v907 = vld [vmem:[%s334 + $0x7f0] sm:$0xff]
        %v908 = vld [vmem:[%s334 + $0x7f8] sm:$0xff]
        %v909 = vld [vmem:[%s334 + $0x800] sm:$0xff]
        %v910 = vld [vmem:[%s334 + $0x808] sm:$0xff]
        %v911 = vld [vmem:[%s334 + $0x810] sm:$0xff]
        %v912 = vld [vmem:[%s334 + $0x818] sm:$0xff]
        %v913 = vld [vmem:[%s334 + $0x820] sm:$0xff]
        %v914 = vld [vmem:[%s334 + $0x828] sm:$0xff]
        %v915 = vld [vmem:[%s334 + $0x830] sm:$0xff]
        %v916 = vld [vmem:[%s334 + $0x838] sm:$0xff]
        %v917 = vld [vmem:[%s334 + $0x840] sm:$0xff]
        %v918 = vld [vmem:[%s334 + $0x848] sm:$0xff]
        %v919 = vld [vmem:[%s334 + $0x850] sm:$0xff]
        %v920 = vld [vmem:[%s334 + $0x858] sm:$0xff]
        %v921 = vld [vmem:[%s334 + $0x860] sm:$0xff]
        %v922 = vld [vmem:[%s334 + $0x868] sm:$0xff]
        %v923 = vld [vmem:[%s334 + $0x870] sm:$0xff]
        %v924 = vld [vmem:[%s334 + $0x878] sm:$0xff]
        %v925 = vld [vmem:[%s334 + $0x880] sm:$0xff]
        %v926 = vld [vmem:[%s334 + $0x888] sm:$0xff]
        %v927 = vld [vmem:[%s334 + $0x890] sm:$0xff]
        %v928 = vld [vmem:[%s334 + $0x898] sm:$0xff]
        %v929 = vld [vmem:[%s334 + $0x8a0] sm:$0xff]
        %v930 = vld [vmem:[%s334 + $0x8a8] sm:$0xff]
        %v931 = vld [vmem:[%s334 + $0x8b0] sm:$0xff]
        %v932 = vld [vmem:[%s334 + $0x8b8] sm:$0xff]
        %v933 = vld [vmem:[%s334 + $0x8c0] sm:$0xff]
        %v934 = vld [vmem:[%s334 + $0x8c8] sm:$0xff]
        %v935 = vld [vmem:[%s334 + $0x8d0] sm:$0xff]
        %v936 = vld [vmem:[%s334 + $0x8d8] sm:$0xff]
        %v937 = vld [vmem:[%s334 + $0x8e0] sm:$0xff]
        %v938 = vld [vmem:[%s334 + $0x8e8] sm:$0xff]
        %v939 = vld [vmem:[%s334 + $0x8f0] sm:$0xff]
        %v940 = vld [vmem:[%s334 + $0x8f8] sm:$0xff]
        %v941 = vld [vmem:[%s334 + $0x900] sm:$0xff]
        %v942 = vld [vmem:[%s334 + $0x908] sm:$0xff]
        %v943 = vld [vmem:[%s334 + $0x910] sm:$0xff]
        %v944 = vld [vmem:[%s334 + $0x918] sm:$0xff]
        %v945 = vld [vmem:[%s334 + $0x920] sm:$0xff]
        %v946 = vld [vmem:[%s334 + $0x928] sm:$0xff]
        %v947 = vld [vmem:[%s334 + $0x930] sm:$0xff]
        %v948 = vld [vmem:[%s334 + $0x938] sm:$0xff]
        %v949 = vld [vmem:[%s334 + $0x940] sm:$0xff]
        %v950 = vld [vmem:[%s334 + $0x948] sm:$0xff]
        %v951 = vld [vmem:[%s334 + $0x950] sm:$0xff]
        %v952 = vld [vmem:[%s334 + $0x958] sm:$0xff]
        %v953 = vld [vmem:[%s334 + $0x960] sm:$0xff]
        %v954 = vld [vmem:[%s334 + $0x968] sm:$0xff]
        %v955 = vld [vmem:[%s334 + $0x970] sm:$0xff]
        %v956 = vld [vmem:[%s334 + $0x978] sm:$0xff]
        %v957 = vld [vmem:[%s334 + $0x980] sm:$0xff]
        %v958 = vld [vmem:[%s334 + $0x988] sm:$0xff]
        %v959 = vld [vmem:[%s334 + $0x990] sm:$0xff]
        %v960 = vld [vmem:[%s334 + $0x998] sm:$0xff]
        %v961 = vld [vmem:[%s334 + $0x9a0] sm:$0xff]
        %v962 = vld [vmem:[%s334 + $0x9a8] sm:$0xff]
        %v963 = vld [vmem:[%s334 + $0x9b0] sm:$0xff]
        %v964 = vld [vmem:[%s334 + $0x9b8] sm:$0xff]
        %v965 = vld [vmem:[%s334 + $0x9c0] sm:$0xff]
        %v966 = vld [vmem:[%s334 + $0x9c8] sm:$0xff]
        %v967 = vld [vmem:[%s334 + $0x9d0] sm:$0xff]
        %v968 = vld [vmem:[%s334 + $0x9d8] sm:$0xff]
        %v969 = vld [vmem:[%s334 + $0x9e0] sm:$0xff]
        %v970 = vld [vmem:[%s334 + $0x9e8] sm:$0xff]
        %v971 = vld [vmem:[%s334 + $0x9f0] sm:$0xff]
        %v972 = vld [vmem:[%s334 + $0x9f8] sm:$0xff]
        %v973 = vld [vmem:[%s334 + $0xa00] sm:$0xff]
        %v974 = vld [vmem:[%s334 + $0xa08] sm:$0xff]
        %v975 = vld [vmem:[%s334 + $0xa10] sm:$0xff]
        %v976 = vld [vmem:[%s334 + $0xa18] sm:$0xff]
        %v977 = vld [vmem:[%s334 + $0xa20] sm:$0xff]
        %v978 = vld [vmem:[%s334 + $0xa28] sm:$0xff]
        %v979 = vld [vmem:[%s334 + $0xa30] sm:$0xff]
        %v980 = vld [vmem:[%s334 + $0xa38] sm:$0xff]
        %v981 = vld [vmem:[%s334 + $0xa40] sm:$0xff]
        %v982 = vld [vmem:[%s334 + $0xa48] sm:$0xff]
        %v983 = vld [vmem:[%s334 + $0xa50] sm:$0xff]
        %v984 = vld [vmem:[%s334 + $0xa58] sm:$0xff]
        %v985 = vld [vmem:[%s334 + $0xa60] sm:$0xff]
        %v986 = vld [vmem:[%s334 + $0xa68] sm:$0xff]
        %v987 = vld [vmem:[%s334 + $0xa70] sm:$0xff]
        %v988 = vld [vmem:[%s334 + $0xa78] sm:$0xff]
        %v989 = vld [vmem:[%s334 + $0xa80] sm:$0xff]
        %v990 = vld [vmem:[%s334 + $0xa88] sm:$0xff]
        %v991 = vld [vmem:[%s334 + $0xa90] sm:$0xff]
        %v992 = vld [vmem:[%s334 + $0xa98] sm:$0xff]
        %v993 = vld [vmem:[%s334 + $0xaa0] sm:$0xff]
        %v994 = vld [vmem:[%s334 + $0xaa8] sm:$0xff]
        %v995 = vld [vmem:[%s334 + $0xab0] sm:$0xff]
        %v996 = vld [vmem:[%s334 + $0xab8] sm:$0xff]
        %v997 = vld [vmem:[%s334 + $0xac0] sm:$0xff]
        %v998 = vld [vmem:[%s334 + $0xac8] sm:$0xff]
        %v999 = vld [vmem:[%s334 + $0xad0] sm:$0xff]
        %v1000 = vld [vmem:[%s334 + $0xad8] sm:$0xff]
        %v1001 = vld [vmem:[%s334 + $0xae0] sm:$0xff]
        %v1002 = vld [vmem:[%s334 + $0xae8] sm:$0xff]
        %v1003 = vld [vmem:[%s334 + $0xaf0] sm:$0xff]
        %v1004 = vld [vmem:[%s334 + $0xaf8] sm:$0xff]
        %v1005 = vld [vmem:[%s334 + $0xb00] sm:$0xff]
        %v1006 = vld [vmem:[%s334 + $0xb08] sm:$0xff]
        %v1007 = vld [vmem:[%s334 + $0xb10] sm:$0xff]
        %v1008 = vld [vmem:[%s334 + $0xb18] sm:$0xff]
        %v1009 = vld [vmem:[%s334 + $0xb20] sm:$0xff]
        %v1010 = vld [vmem:[%s334 + $0xb28] sm:$0xff]
        %v1011 = vld [vmem:[%s334 + $0xb30] sm:$0xff]
        %v1012 = vld [vmem:[%s334 + $0xb38] sm:$0xff]
        %v1013 = vld [vmem:[%s334 + $0xb40] sm:$0xff]
        %v1014 = vld [vmem:[%s334 + $0xb48] sm:$0xff]
        %v1015 = vld [vmem:[%s334 + $0xb50] sm:$0xff]
        %v1016 = vld [vmem:[%s334 + $0xb58] sm:$0xff]
        %v1017 = vld [vmem:[%s334 + $0xb60] sm:$0xff]
        %v1018 = vld [vmem:[%s334 + $0xb68] sm:$0xff]
        %v1019 = vld [vmem:[%s334 + $0xb70] sm:$0xff]
        %v1020 = vld [vmem:[%s334 + $0xb78] sm:$0xff]
        %v1021 = vld [vmem:[%s334 + $0xb80] sm:$0xff]
        %v1022 = vld [vmem:[%s334 + $0xb88] sm:$0xff]
        %v1023 = vld [vmem:[%s334 + $0xb90] sm:$0xff]
        %v1024 = vld [vmem:[%s334 + $0xb98] sm:$0xff]
        %v1025 = vld [vmem:[%s334 + $0xba0] sm:$0xff]
        %v1026 = vld [vmem:[%s334 + $0xba8] sm:$0xff]
        %v1027 = vld [vmem:[%s334 + $0xbb0] sm:$0xff]
        %v1028 = vld [vmem:[%s334 + $0xbb8] sm:$0xff]
        %v1029 = vld [vmem:[%s334 + $0xbc0] sm:$0xff]
        %v1030 = vld [vmem:[%s334 + $0xbc8] sm:$0xff]
        %v1031 = vld [vmem:[%s334 + $0xbd0] sm:$0xff]
        %v1032 = vld [vmem:[%s334 + $0xbd8] sm:$0xff]
        %v1033 = vld [vmem:[%s334 + $0xbe0] sm:$0xff]
        %v1034 = vld [vmem:[%s334 + $0xbe8] sm:$0xff]
        %v1035 = vld [vmem:[%s334 + $0xbf0] sm:$0xff]
        %v1036 = vld [vmem:[%s334 + $0xbf8] sm:$0xff]
        %v1037 = vld [vmem:[%s334 + $0xc00] sm:$0xff]
        %v1038 = vld [vmem:[%s334 + $0xc08] sm:$0xff]
        %v1039 = vld [vmem:[%s334 + $0xc10] sm:$0xff]
        %v1040 = vld [vmem:[%s334 + $0xc18] sm:$0xff]
        %v1041 = vld [vmem:[%s334 + $0xc20] sm:$0xff]
        %v1042 = vld [vmem:[%s334 + $0xc28] sm:$0xff]
        %v1043 = vld [vmem:[%s334 + $0xc30] sm:$0xff]
        %v1044 = vld [vmem:[%s334 + $0xc38] sm:$0xff]
        %v1045 = vld [vmem:[%s334 + $0xc40] sm:$0xff]
        %v1046 = vld [vmem:[%s334 + $0xc48] sm:$0xff]
        %v1047 = vld [vmem:[%s334 + $0xc50] sm:$0xff]
        %v1048 = vld [vmem:[%s334 + $0xc58] sm:$0xff]
        %v1049 = vld [vmem:[%s334 + $0xc60] sm:$0xff]
        %v1050 = vld [vmem:[%s334 + $0xc68] sm:$0xff]
        %v1051 = vld [vmem:[%s334 + $0xc70] sm:$0xff]
        %v1052 = vld [vmem:[%s334 + $0xc78] sm:$0xff]
        %v1053 = vld [vmem:[%s334 + $0xc80] sm:$0xff]
        %v1054 = vld [vmem:[%s334 + $0xc88] sm:$0xff]
        %v1055 = vld [vmem:[%s334 + $0xc90] sm:$0xff]
        %v1056 = vld [vmem:[%s334 + $0xc98] sm:$0xff]
        %v1057 = vld [vmem:[%s334 + $0xca0] sm:$0xff]
        %v1058 = vld [vmem:[%s334 + $0xca8] sm:$0xff]
        %v1059 = vld [vmem:[%s334 + $0xcb0] sm:$0xff]
        %v1060 = vld [vmem:[%s334 + $0xcb8] sm:$0xff]
        %v1061 = vld [vmem:[%s334 + $0xcc0] sm:$0xff]
        %v1062 = vld [vmem:[%s334 + $0xcc8] sm:$0xff]
        %v1063 = vld [vmem:[%s334 + $0xcd0] sm:$0xff]
        %v1064 = vld [vmem:[%s334 + $0xcd8] sm:$0xff]
        %v1065 = vld [vmem:[%s334 + $0xce0] sm:$0xff]
        %v1066 = vld [vmem:[%s334 + $0xce8] sm:$0xff]
        %v1067 = vld [vmem:[%s334 + $0xcf0] sm:$0xff]
        %v1068 = vld [vmem:[%s334 + $0xcf8] sm:$0xff]
        %v1069 = vld [vmem:[%s334 + $0xd00] sm:$0xff]
        %v1070 = vld [vmem:[%s334 + $0xd08] sm:$0xff]
        %v1071 = vld [vmem:[%s334 + $0xd10] sm:$0xff]
        %v1072 = vld [vmem:[%s334 + $0xd18] sm:$0xff]
        %v1073 = vld [vmem:[%s334 + $0xd20] sm:$0xff]
        %v1074 = vld [vmem:[%s334 + $0xd28] sm:$0xff]
        %v1075 = vld [vmem:[%s334 + $0xd30] sm:$0xff]
        %v1076 = vld [vmem:[%s334 + $0xd38] sm:$0xff]
        %v1077 = vld [vmem:[%s334 + $0xd40] sm:$0xff]
        %v1078 = vld [vmem:[%s334 + $0xd48] sm:$0xff]
        %v1079 = vld [vmem:[%s334 + $0xd50] sm:$0xff]
        %v1080 = vld [vmem:[%s334 + $0xd58] sm:$0xff]
        %v1081 = vld [vmem:[%s334 + $0xd60] sm:$0xff]
        %v1082 = vld [vmem:[%s334 + $0xd68] sm:$0xff]
        %v1083 = vld [vmem:[%s334 + $0xd70] sm:$0xff]
        %v1084 = vld [vmem:[%s334 + $0xd78] sm:$0xff]
        %v1085 = vld [vmem:[%s334 + $0xd80] sm:$0xff]
        %v1086 = vld [vmem:[%s334 + $0xd88] sm:$0xff]
        %v1087 = vld [vmem:[%s334 + $0xd90] sm:$0xff]
        %v1088 = vld [vmem:[%s334 + $0xd98] sm:$0xff]
        %v1089 = vld [vmem:[%s334 + $0xda0] sm:$0xff]
        %v1090 = vld [vmem:[%s334 + $0xda8] sm:$0xff]
        %v1091 = vld [vmem:[%s334 + $0xdb0] sm:$0xff]
        %v1092 = vld [vmem:[%s334 + $0xdb8] sm:$0xff]
        %v1093 = vld [vmem:[%s334 + $0xdc0] sm:$0xff]
        %v1094 = vld [vmem:[%s334 + $0xdc8] sm:$0xff]
        %v1095 = vld [vmem:[%s334 + $0xdd0] sm:$0xff]
        %v1096 = vld [vmem:[%s334 + $0xdd8] sm:$0xff]
        %v1097 = vld [vmem:[%s334 + $0xde0] sm:$0xff]
        %v1098 = vld [vmem:[%s334 + $0xde8] sm:$0xff]
        %v1099 = vld [vmem:[%s334 + $0xdf0] sm:$0xff]
        %v1100 = vld [vmem:[%s334 + $0xdf8] sm:$0xff]
        %v1101 = vld [vmem:[%s334 + $0xe00] sm:$0xff]
        %v1102 = vld [vmem:[%s334 + $0xe08] sm:$0xff]
        %v1103 = vld [vmem:[%s334 + $0xe10] sm:$0xff]
        %v1104 = vld [vmem:[%s334 + $0xe18] sm:$0xff]
        %v1105 = vld [vmem:[%s334 + $0xe20] sm:$0xff]
        %v1106 = vld [vmem:[%s334 + $0xe28] sm:$0xff]
        %v1107 = vld [vmem:[%s334 + $0xe30] sm:$0xff]
        %v1108 = vld [vmem:[%s334 + $0xe38] sm:$0xff]
        %v1109 = vld [vmem:[%s334 + $0xe40] sm:$0xff]
        %v1110 = vld [vmem:[%s334 + $0xe48] sm:$0xff]
        %v1111 = vld [vmem:[%s334 + $0xe50] sm:$0xff]
        %v1112 = vld [vmem:[%s334 + $0xe58] sm:$0xff]
        %v1113 = vld [vmem:[%s334 + $0xe60] sm:$0xff]
        %v1114 = vld [vmem:[%s334 + $0xe68] sm:$0xff]
        %v1115 = vld [vmem:[%s334 + $0xe70] sm:$0xff]
        %v1116 = vld [vmem:[%s334 + $0xe78] sm:$0xff]
        %v1117 = vld [vmem:[%s334 + $0xe80] sm:$0xff]
        %v1118 = vld [vmem:[%s334 + $0xe88] sm:$0xff]
        %v1119 = vld [vmem:[%s334 + $0xe90] sm:$0xff]
        %v1120 = vld [vmem:[%s334 + $0xe98] sm:$0xff]
        %v1121 = vld [vmem:[%s334 + $0xea0] sm:$0xff]
        %v1122 = vld [vmem:[%s334 + $0xea8] sm:$0xff]
        %v1123 = vld [vmem:[%s334 + $0xeb0] sm:$0xff]
        %v1124 = vld [vmem:[%s334 + $0xeb8] sm:$0xff]
        %v1125 = vld [vmem:[%s334 + $0xec0] sm:$0xff]
        %v1126 = vld [vmem:[%s334 + $0xec8] sm:$0xff]
        %v1127 = vld [vmem:[%s334 + $0xed0] sm:$0xff]
        %v1128 = vld [vmem:[%s334 + $0xed8] sm:$0xff]
        %v1129 = vld [vmem:[%s334 + $0xee0] sm:$0xff]
        %v1130 = vld [vmem:[%s334 + $0xee8] sm:$0xff]
        %v1131 = vld [vmem:[%s334 + $0xef0] sm:$0xff]
        %v1132 = vld [vmem:[%s334 + $0xef8] sm:$0xff]
        %v1133 = vld [vmem:[%s334 + $0xf00] sm:$0xff]
        %v1134 = vld [vmem:[%s334 + $0xf08] sm:$0xff]
        %v1135 = vld [vmem:[%s334 + $0xf10] sm:$0xff]
        %v1136 = vld [vmem:[%s334 + $0xf18] sm:$0xff]
        %v1137 = vld [vmem:[%s334 + $0xf20] sm:$0xff]
        %v1138 = vld [vmem:[%s334 + $0xf28] sm:$0xff]
        %v1139 = vld [vmem:[%s334 + $0xf30] sm:$0xff]
        %v1140 = vld [vmem:[%s334 + $0xf38] sm:$0xff]
        %v1141 = vld [vmem:[%s334 + $0xf40] sm:$0xff]
        %v1142 = vld [vmem:[%s334 + $0xf48] sm:$0xff]
        %v1143 = vld [vmem:[%s334 + $0xf50] sm:$0xff]
        %v1144 = vld [vmem:[%s334 + $0xf58] sm:$0xff]
        %v1145 = vld [vmem:[%s334 + $0xf60] sm:$0xff]
        %v1146 = vld [vmem:[%s334 + $0xf68] sm:$0xff]
        %v1147 = vld [vmem:[%s334 + $0xf70] sm:$0xff]
        %v1148 = vld [vmem:[%s334 + $0xf78] sm:$0xff]
        %v1149 = vld [vmem:[%s334 + $0xf80] sm:$0xff]
        %v1150 = vld [vmem:[%s334 + $0xf88] sm:$0xff]
        %v1151 = vld [vmem:[%s334 + $0xf90] sm:$0xff]
        %v1152 = vld [vmem:[%s334 + $0xf98] sm:$0xff]
        %v1153 = vld [vmem:[%s334 + $0xfa0] sm:$0xff]
        %v1154 = vld [vmem:[%s334 + $0xfa8] sm:$0xff]
        %v1155 = vld [vmem:[%s334 + $0xfb0] sm:$0xff]
        %v1156 = vld [vmem:[%s334 + $0xfb8] sm:$0xff]
        %v1157 = vld [vmem:[%s334 + $0xfc0] sm:$0xff]
        %v1158 = vld [vmem:[%s334 + $0xfc8] sm:$0xff]
        %v1159 = vld [vmem:[%s334 + $0xfd0] sm:$0xff]
        %v1160 = vld [vmem:[%s334 + $0xfd8] sm:$0xff]
        %v1161 = vld [vmem:[%s334 + $0xfe0] sm:$0xff]
        %v1162 = vld [vmem:[%s334 + $0xfe8] sm:$0xff]
        %v1163 = vld [vmem:[%s334 + $0xff0] sm:$0xff]
        %v1164 = vld [vmem:[%s334 + $0xff8] sm:$0xff]
        %v1166 = vperm.slane %v640, 0
        %v1167 = vperm.slane %v640, 1
        %v1168 = vperm.slane %v640, 2
        %v1169 = vperm.slane %v640, 3
        %v1170 = vperm.slane %v640, 4
        %v1171 = vperm.slane %v640, 5
        %v1172 = vperm.slane %v640, 6
        %v1173 = vperm.slane %v640, 7
        %v1694 = vunpack.c.l.b16 %v653
        %v1695 = vunpack.c.h.b16 %v653
        %v1696 = vunpack.c.l.b16 %v654
        %v1697 = vunpack.c.h.b16 %v654
        %v1698 = vunpack.c.l.b16 %v655
        %v1699 = vunpack.c.h.b16 %v655
        %v1700 = vunpack.c.l.b16 %v656
        %v1701 = vunpack.c.h.b16 %v656
        %v1702 = vunpack.c.l.b16 %v657
        %v1703 = vunpack.c.h.b16 %v657
        %v1704 = vunpack.c.l.b16 %v658
        %v1705 = vunpack.c.h.b16 %v658
        %v1706 = vunpack.c.l.b16 %v659
        %v1707 = vunpack.c.h.b16 %v659
        %v1708 = vunpack.c.l.b16 %v660
        %v1709 = vunpack.c.h.b16 %v660
        %v1710 = vunpack.c.l.b16 %v661
        %v1711 = vunpack.c.h.b16 %v661
        %v1712 = vunpack.c.l.b16 %v662
        %v1713 = vunpack.c.h.b16 %v662
        %v1714 = vunpack.c.l.b16 %v663
        %v1715 = vunpack.c.h.b16 %v663
        %v1716 = vunpack.c.l.b16 %v664
        %v1717 = vunpack.c.h.b16 %v664
        %v1718 = vunpack.c.l.b16 %v665
        %v1719 = vunpack.c.h.b16 %v665
        %v1720 = vunpack.c.l.b16 %v666
        %v1721 = vunpack.c.h.b16 %v666
        %v1722 = vunpack.c.l.b16 %v667
        %v1723 = vunpack.c.h.b16 %v667
        %v1724 = vunpack.c.l.b16 %v668
        %v1725 = vunpack.c.h.b16 %v668
        %v1726 = vunpack.c.l.b16 %v669
        %v1727 = vunpack.c.h.b16 %v669
        %v1728 = vunpack.c.l.b16 %v670
        %v1729 = vunpack.c.h.b16 %v670
        %v1730 = vunpack.c.l.b16 %v671
        %v1731 = vunpack.c.h.b16 %v671
        %v1732 = vunpack.c.l.b16 %v672
        %v1733 = vunpack.c.h.b16 %v672
        %v1734 = vunpack.c.l.b16 %v673
        %v1735 = vunpack.c.h.b16 %v673
        %v1736 = vunpack.c.l.b16 %v674
        %v1737 = vunpack.c.h.b16 %v674
        %v1738 = vunpack.c.l.b16 %v675
        %v1739 = vunpack.c.h.b16 %v675
        %v1740 = vunpack.c.l.b16 %v676
        %v1741 = vunpack.c.h.b16 %v676
        %v1742 = vunpack.c.l.b16 %v677
        %v1743 = vunpack.c.h.b16 %v677
        %v1744 = vunpack.c.l.b16 %v678
        %v1745 = vunpack.c.h.b16 %v678
        %v1746 = vunpack.c.l.b16 %v679
        %v1747 = vunpack.c.h.b16 %v679
        %v1748 = vunpack.c.l.b16 %v680
        %v1749 = vunpack.c.h.b16 %v680
        %v1750 = vunpack.c.l.b16 %v681
        %v1751 = vunpack.c.h.b16 %v681
        %v1752 = vunpack.c.l.b16 %v682
        %v1753 = vunpack.c.h.b16 %v682
        %v1754 = vunpack.c.l.b16 %v683
        %v1755 = vunpack.c.h.b16 %v683
        %v1756 = vunpack.c.l.b16 %v684
        %v1757 = vunpack.c.h.b16 %v684
        %v1758 = vunpack.c.l.b16 %v685
        %v1759 = vunpack.c.h.b16 %v685
        %v1760 = vunpack.c.l.b16 %v686
        %v1761 = vunpack.c.h.b16 %v686
        %v1762 = vunpack.c.l.b16 %v687
        %v1763 = vunpack.c.h.b16 %v687
        %v1764 = vunpack.c.l.b16 %v688
        %v1765 = vunpack.c.h.b16 %v688
        %v1766 = vunpack.c.l.b16 %v689
        %v1767 = vunpack.c.h.b16 %v689
        %v1768 = vunpack.c.l.b16 %v690
        %v1769 = vunpack.c.h.b16 %v690
        %v1770 = vunpack.c.l.b16 %v691
        %v1771 = vunpack.c.h.b16 %v691
        %v1772 = vunpack.c.l.b16 %v692
        %v1773 = vunpack.c.h.b16 %v692
        %v1774 = vunpack.c.l.b16 %v693
        %v1775 = vunpack.c.h.b16 %v693
        %v1776 = vunpack.c.l.b16 %v694
        %v1777 = vunpack.c.h.b16 %v694
        %v1778 = vunpack.c.l.b16 %v695
        %v1779 = vunpack.c.h.b16 %v695
        %v1780 = vunpack.c.l.b16 %v696
        %v1781 = vunpack.c.h.b16 %v696
        %v1782 = vunpack.c.l.b16 %v697
        %v1783 = vunpack.c.h.b16 %v697
        %v1784 = vunpack.c.l.b16 %v698
        %v1785 = vunpack.c.h.b16 %v698
        %v1786 = vunpack.c.l.b16 %v699
        %v1787 = vunpack.c.h.b16 %v699
        %v1788 = vunpack.c.l.b16 %v700
        %v1789 = vunpack.c.h.b16 %v700
        %v1790 = vunpack.c.l.b16 %v701
        %v1791 = vunpack.c.h.b16 %v701
        %v1792 = vunpack.c.l.b16 %v702
        %v1793 = vunpack.c.h.b16 %v702
        %v1794 = vunpack.c.l.b16 %v703
        %v1795 = vunpack.c.h.b16 %v703
        %v1796 = vunpack.c.l.b16 %v704
        %v1797 = vunpack.c.h.b16 %v704
        %v1798 = vunpack.c.l.b16 %v705
        %v1799 = vunpack.c.h.b16 %v705
        %v1800 = vunpack.c.l.b16 %v706
        %v1801 = vunpack.c.h.b16 %v706
        %v1802 = vunpack.c.l.b16 %v707
        %v1803 = vunpack.c.h.b16 %v707
        %v1804 = vunpack.c.l.b16 %v708
        %v1805 = vunpack.c.h.b16 %v708
        %v1806 = vunpack.c.l.b16 %v709
        %v1807 = vunpack.c.h.b16 %v709
        %v1808 = vunpack.c.l.b16 %v710
        %v1809 = vunpack.c.h.b16 %v710
        %v1810 = vunpack.c.l.b16 %v711
        %v1811 = vunpack.c.h.b16 %v711
        %v1812 = vunpack.c.l.b16 %v712
        %v1813 = vunpack.c.h.b16 %v712
        %v1814 = vunpack.c.l.b16 %v713
        %v1815 = vunpack.c.h.b16 %v713
        %v1816 = vunpack.c.l.b16 %v714
        %v1817 = vunpack.c.h.b16 %v714
        %v1818 = vunpack.c.l.b16 %v715
        %v1819 = vunpack.c.h.b16 %v715
        %v1820 = vunpack.c.l.b16 %v716
        %v1821 = vunpack.c.h.b16 %v716
        %v1822 = vunpack.c.l.b16 %v717
        %v1823 = vunpack.c.h.b16 %v717
        %v1824 = vunpack.c.l.b16 %v718
        %v1825 = vunpack.c.h.b16 %v718
        %v1826 = vunpack.c.l.b16 %v719
        %v1827 = vunpack.c.h.b16 %v719
        %v1828 = vunpack.c.l.b16 %v720
        %v1829 = vunpack.c.h.b16 %v720
        %v1830 = vunpack.c.l.b16 %v721
        %v1831 = vunpack.c.h.b16 %v721
        %v1832 = vunpack.c.l.b16 %v722
        %v1833 = vunpack.c.h.b16 %v722
        %v1834 = vunpack.c.l.b16 %v723
        %v1835 = vunpack.c.h.b16 %v723
        %v1836 = vunpack.c.l.b16 %v724
        %v1837 = vunpack.c.h.b16 %v724
        %v1838 = vunpack.c.l.b16 %v725
        %v1839 = vunpack.c.h.b16 %v725
        %v1840 = vunpack.c.l.b16 %v726
        %v1841 = vunpack.c.h.b16 %v726
        %v1842 = vunpack.c.l.b16 %v727
        %v1843 = vunpack.c.h.b16 %v727
        %v1844 = vunpack.c.l.b16 %v728
        %v1845 = vunpack.c.h.b16 %v728
        %v1846 = vunpack.c.l.b16 %v729
        %v1847 = vunpack.c.h.b16 %v729
        %v1848 = vunpack.c.l.b16 %v730
        %v1849 = vunpack.c.h.b16 %v730
        %v1850 = vunpack.c.l.b16 %v731
        %v1851 = vunpack.c.h.b16 %v731
        %v1852 = vunpack.c.l.b16 %v732
        %v1853 = vunpack.c.h.b16 %v732
        %v1854 = vunpack.c.l.b16 %v733
        %v1855 = vunpack.c.h.b16 %v733
        %v1856 = vunpack.c.l.b16 %v734
        %v1857 = vunpack.c.h.b16 %v734
        %v1858 = vunpack.c.l.b16 %v735
        %v1859 = vunpack.c.h.b16 %v735
        %v1860 = vunpack.c.l.b16 %v736
        %v1861 = vunpack.c.h.b16 %v736
        %v1862 = vunpack.c.l.b16 %v737
        %v1863 = vunpack.c.h.b16 %v737
        %v1864 = vunpack.c.l.b16 %v738
        %v1865 = vunpack.c.h.b16 %v738
        %v1866 = vunpack.c.l.b16 %v739
        %v1867 = vunpack.c.h.b16 %v739
        %v1868 = vunpack.c.l.b16 %v740
        %v1869 = vunpack.c.h.b16 %v740
        %v1870 = vunpack.c.l.b16 %v741
        %v1871 = vunpack.c.h.b16 %v741
        %v1872 = vunpack.c.l.b16 %v742
        %v1873 = vunpack.c.h.b16 %v742
        %v1874 = vunpack.c.l.b16 %v743
        %v1875 = vunpack.c.h.b16 %v743
        %v1876 = vunpack.c.l.b16 %v744
        %v1877 = vunpack.c.h.b16 %v744
        %v1878 = vunpack.c.l.b16 %v745
        %v1879 = vunpack.c.h.b16 %v745
        %v1880 = vunpack.c.l.b16 %v746
        %v1881 = vunpack.c.h.b16 %v746
        %v1882 = vunpack.c.l.b16 %v747
        %v1883 = vunpack.c.h.b16 %v747
        %v1884 = vunpack.c.l.b16 %v748
        %v1885 = vunpack.c.h.b16 %v748
        %v1886 = vunpack.c.l.b16 %v749
        %v1887 = vunpack.c.h.b16 %v749
        %v1888 = vunpack.c.l.b16 %v750
        %v1889 = vunpack.c.h.b16 %v750
        %v1890 = vunpack.c.l.b16 %v751
        %v1891 = vunpack.c.h.b16 %v751
        %v1892 = vunpack.c.l.b16 %v752
        %v1893 = vunpack.c.h.b16 %v752
        %v1894 = vunpack.c.l.b16 %v753
        %v1895 = vunpack.c.h.b16 %v753
        %v1896 = vunpack.c.l.b16 %v754
        %v1897 = vunpack.c.h.b16 %v754
        %v1898 = vunpack.c.l.b16 %v755
        %v1899 = vunpack.c.h.b16 %v755
        %v1900 = vunpack.c.l.b16 %v756
        %v1901 = vunpack.c.h.b16 %v756
        %v1902 = vunpack.c.l.b16 %v757
        %v1903 = vunpack.c.h.b16 %v757
        %v1904 = vunpack.c.l.b16 %v758
        %v1905 = vunpack.c.h.b16 %v758
        %v1906 = vunpack.c.l.b16 %v759
        %v1907 = vunpack.c.h.b16 %v759
        %v1908 = vunpack.c.l.b16 %v760
        %v1909 = vunpack.c.h.b16 %v760
        %v1910 = vunpack.c.l.b16 %v761
        %v1911 = vunpack.c.h.b16 %v761
        %v1912 = vunpack.c.l.b16 %v762
        %v1913 = vunpack.c.h.b16 %v762
        %v1914 = vunpack.c.l.b16 %v763
        %v1915 = vunpack.c.h.b16 %v763
        %v1916 = vunpack.c.l.b16 %v764
        %v1917 = vunpack.c.h.b16 %v764
        %v1918 = vunpack.c.l.b16 %v765
        %v1919 = vunpack.c.h.b16 %v765
        %v1920 = vunpack.c.l.b16 %v766
        %v1921 = vunpack.c.h.b16 %v766
        %v1922 = vunpack.c.l.b16 %v767
        %v1923 = vunpack.c.h.b16 %v767
        %v1924 = vunpack.c.l.b16 %v768
        %v1925 = vunpack.c.h.b16 %v768
        %v1926 = vunpack.c.l.b16 %v769
        %v1927 = vunpack.c.h.b16 %v769
        %v1928 = vunpack.c.l.b16 %v770
        %v1929 = vunpack.c.h.b16 %v770
        %v1930 = vunpack.c.l.b16 %v771
        %v1931 = vunpack.c.h.b16 %v771
        %v1932 = vunpack.c.l.b16 %v772
        %v1933 = vunpack.c.h.b16 %v772
        %v1934 = vunpack.c.l.b16 %v773
        %v1935 = vunpack.c.h.b16 %v773
        %v1936 = vunpack.c.l.b16 %v774
        %v1937 = vunpack.c.h.b16 %v774
        %v1938 = vunpack.c.l.b16 %v775
        %v1939 = vunpack.c.h.b16 %v775
        %v1940 = vunpack.c.l.b16 %v776
        %v1941 = vunpack.c.h.b16 %v776
        %v1942 = vunpack.c.l.b16 %v777
        %v1943 = vunpack.c.h.b16 %v777
        %v1944 = vunpack.c.l.b16 %v778
        %v1945 = vunpack.c.h.b16 %v778
        %v1946 = vunpack.c.l.b16 %v779
        %v1947 = vunpack.c.h.b16 %v779
        %v1948 = vunpack.c.l.b16 %v780
        %v1949 = vunpack.c.h.b16 %v780
        %v1950 = vunpack.c.l.b16 %v781
        %v1951 = vunpack.c.h.b16 %v781
        %v1952 = vunpack.c.l.b16 %v782
        %v1953 = vunpack.c.h.b16 %v782
        %v1954 = vunpack.c.l.b16 %v783
        %v1955 = vunpack.c.h.b16 %v783
        %v1956 = vunpack.c.l.b16 %v784
        %v1957 = vunpack.c.h.b16 %v784
        %v1958 = vunpack.c.l.b16 %v785
        %v1959 = vunpack.c.h.b16 %v785
        %v1960 = vunpack.c.l.b16 %v786
        %v1961 = vunpack.c.h.b16 %v786
        %v1962 = vunpack.c.l.b16 %v787
        %v1963 = vunpack.c.h.b16 %v787
        %v1964 = vunpack.c.l.b16 %v788
        %v1965 = vunpack.c.h.b16 %v788
        %v1966 = vunpack.c.l.b16 %v789
        %v1967 = vunpack.c.h.b16 %v789
        %v1968 = vunpack.c.l.b16 %v790
        %v1969 = vunpack.c.h.b16 %v790
        %v1970 = vunpack.c.l.b16 %v791
        %v1971 = vunpack.c.h.b16 %v791
        %v1972 = vunpack.c.l.b16 %v792
        %v1973 = vunpack.c.h.b16 %v792
        %v1974 = vunpack.c.l.b16 %v793
        %v1975 = vunpack.c.h.b16 %v793
        %v1976 = vunpack.c.l.b16 %v794
        %v1977 = vunpack.c.h.b16 %v794
        %v1978 = vunpack.c.l.b16 %v795
        %v1979 = vunpack.c.h.b16 %v795
        %v1980 = vunpack.c.l.b16 %v796
        %v1981 = vunpack.c.h.b16 %v796
        %v1982 = vunpack.c.l.b16 %v797
        %v1983 = vunpack.c.h.b16 %v797
        %v1984 = vunpack.c.l.b16 %v798
        %v1985 = vunpack.c.h.b16 %v798
        %v1986 = vunpack.c.l.b16 %v799
        %v1987 = vunpack.c.h.b16 %v799
        %v1988 = vunpack.c.l.b16 %v800
        %v1989 = vunpack.c.h.b16 %v800
        %v1990 = vunpack.c.l.b16 %v801
        %v1991 = vunpack.c.h.b16 %v801
        %v1992 = vunpack.c.l.b16 %v802
        %v1993 = vunpack.c.h.b16 %v802
        %v1994 = vunpack.c.l.b16 %v803
        %v1995 = vunpack.c.h.b16 %v803
        %v1996 = vunpack.c.l.b16 %v804
        %v1997 = vunpack.c.h.b16 %v804
        %v1998 = vunpack.c.l.b16 %v805
        %v1999 = vunpack.c.h.b16 %v805
        %v2000 = vunpack.c.l.b16 %v806
        %v2001 = vunpack.c.h.b16 %v806
        %v2002 = vunpack.c.l.b16 %v807
        %v2003 = vunpack.c.h.b16 %v807
        %v2004 = vunpack.c.l.b16 %v808
        %v2005 = vunpack.c.h.b16 %v808
        %v2006 = vunpack.c.l.b16 %v809
        %v2007 = vunpack.c.h.b16 %v809
        %v2008 = vunpack.c.l.b16 %v810
        %v2009 = vunpack.c.h.b16 %v810
        %v2010 = vunpack.c.l.b16 %v811
        %v2011 = vunpack.c.h.b16 %v811
        %v2012 = vunpack.c.l.b16 %v812
        %v2013 = vunpack.c.h.b16 %v812
        %v2014 = vunpack.c.l.b16 %v813
        %v2015 = vunpack.c.h.b16 %v813
        %v2016 = vunpack.c.l.b16 %v814
        %v2017 = vunpack.c.h.b16 %v814
        %v2018 = vunpack.c.l.b16 %v815
        %v2019 = vunpack.c.h.b16 %v815
        %v2020 = vunpack.c.l.b16 %v816
        %v2021 = vunpack.c.h.b16 %v816
        %v2022 = vunpack.c.l.b16 %v817
        %v2023 = vunpack.c.h.b16 %v817
        %v2024 = vunpack.c.l.b16 %v818
        %v2025 = vunpack.c.h.b16 %v818
        %v2026 = vunpack.c.l.b16 %v819
        %v2027 = vunpack.c.h.b16 %v819
        %v2028 = vunpack.c.l.b16 %v820
        %v2029 = vunpack.c.h.b16 %v820
        %v2030 = vunpack.c.l.b16 %v821
        %v2031 = vunpack.c.h.b16 %v821
        %v2032 = vunpack.c.l.b16 %v822
        %v2033 = vunpack.c.h.b16 %v822
        %v2034 = vunpack.c.l.b16 %v823
        %v2035 = vunpack.c.h.b16 %v823
        %v2036 = vunpack.c.l.b16 %v824
        %v2037 = vunpack.c.h.b16 %v824
        %v2038 = vunpack.c.l.b16 %v825
        %v2039 = vunpack.c.h.b16 %v825
        %v2040 = vunpack.c.l.b16 %v826
        %v2041 = vunpack.c.h.b16 %v826
        %v2042 = vunpack.c.l.b16 %v827
        %v2043 = vunpack.c.h.b16 %v827
        %v2044 = vunpack.c.l.b16 %v828
        %v2045 = vunpack.c.h.b16 %v828
        %v2046 = vunpack.c.l.b16 %v829
        %v2047 = vunpack.c.h.b16 %v829
        %v2048 = vunpack.c.l.b16 %v830
        %v2049 = vunpack.c.h.b16 %v830
        %v2050 = vunpack.c.l.b16 %v831
        %v2051 = vunpack.c.h.b16 %v831
        %v2052 = vunpack.c.l.b16 %v832
        %v2053 = vunpack.c.h.b16 %v832
        %v2054 = vunpack.c.l.b16 %v833
        %v2055 = vunpack.c.h.b16 %v833
        %v2056 = vunpack.c.l.b16 %v834
        %v2057 = vunpack.c.h.b16 %v834
        %v2058 = vunpack.c.l.b16 %v835
        %v2059 = vunpack.c.h.b16 %v835
        %v2060 = vunpack.c.l.b16 %v836
        %v2061 = vunpack.c.h.b16 %v836
        %v2062 = vunpack.c.l.b16 %v837
        %v2063 = vunpack.c.h.b16 %v837
        %v2064 = vunpack.c.l.b16 %v838
        %v2065 = vunpack.c.h.b16 %v838
        %v2066 = vunpack.c.l.b16 %v839
        %v2067 = vunpack.c.h.b16 %v839
        %v2068 = vunpack.c.l.b16 %v840
        %v2069 = vunpack.c.h.b16 %v840
        %v2070 = vunpack.c.l.b16 %v841
        %v2071 = vunpack.c.h.b16 %v841
        %v2072 = vunpack.c.l.b16 %v842
        %v2073 = vunpack.c.h.b16 %v842
        %v2074 = vunpack.c.l.b16 %v843
        %v2075 = vunpack.c.h.b16 %v843
        %v2076 = vunpack.c.l.b16 %v844
        %v2077 = vunpack.c.h.b16 %v844
        %v2078 = vunpack.c.l.b16 %v845
        %v2079 = vunpack.c.h.b16 %v845
        %v2080 = vunpack.c.l.b16 %v846
        %v2081 = vunpack.c.h.b16 %v846
        %v2082 = vunpack.c.l.b16 %v847
        %v2083 = vunpack.c.h.b16 %v847
        %v2084 = vunpack.c.l.b16 %v848
        %v2085 = vunpack.c.h.b16 %v848
        %v2086 = vunpack.c.l.b16 %v849
        %v2087 = vunpack.c.h.b16 %v849
        %v2088 = vunpack.c.l.b16 %v850
        %v2089 = vunpack.c.h.b16 %v850
        %v2090 = vunpack.c.l.b16 %v851
        %v2091 = vunpack.c.h.b16 %v851
        %v2092 = vunpack.c.l.b16 %v852
        %v2093 = vunpack.c.h.b16 %v852
        %v2094 = vunpack.c.l.b16 %v853
        %v2095 = vunpack.c.h.b16 %v853
        %v2096 = vunpack.c.l.b16 %v854
        %v2097 = vunpack.c.h.b16 %v854
        %v2098 = vunpack.c.l.b16 %v855
        %v2099 = vunpack.c.h.b16 %v855
        %v2100 = vunpack.c.l.b16 %v856
        %v2101 = vunpack.c.h.b16 %v856
        %v2102 = vunpack.c.l.b16 %v857
        %v2103 = vunpack.c.h.b16 %v857
        %v2104 = vunpack.c.l.b16 %v858
        %v2105 = vunpack.c.h.b16 %v858
        %v2106 = vunpack.c.l.b16 %v859
        %v2107 = vunpack.c.h.b16 %v859
        %v2108 = vunpack.c.l.b16 %v860
        %v2109 = vunpack.c.h.b16 %v860
        %v2110 = vunpack.c.l.b16 %v861
        %v2111 = vunpack.c.h.b16 %v861
        %v2112 = vunpack.c.l.b16 %v862
        %v2113 = vunpack.c.h.b16 %v862
        %v2114 = vunpack.c.l.b16 %v863
        %v2115 = vunpack.c.h.b16 %v863
        %v2116 = vunpack.c.l.b16 %v864
        %v2117 = vunpack.c.h.b16 %v864
        %v2118 = vunpack.c.l.b16 %v865
        %v2119 = vunpack.c.h.b16 %v865
        %v2120 = vunpack.c.l.b16 %v866
        %v2121 = vunpack.c.h.b16 %v866
        %v2122 = vunpack.c.l.b16 %v867
        %v2123 = vunpack.c.h.b16 %v867
        %v2124 = vunpack.c.l.b16 %v868
        %v2125 = vunpack.c.h.b16 %v868
        %v2126 = vunpack.c.l.b16 %v869
        %v2127 = vunpack.c.h.b16 %v869
        %v2128 = vunpack.c.l.b16 %v870
        %v2129 = vunpack.c.h.b16 %v870
        %v2130 = vunpack.c.l.b16 %v871
        %v2131 = vunpack.c.h.b16 %v871
        %v2132 = vunpack.c.l.b16 %v872
        %v2133 = vunpack.c.h.b16 %v872
        %v2134 = vunpack.c.l.b16 %v873
        %v2135 = vunpack.c.h.b16 %v873
        %v2136 = vunpack.c.l.b16 %v874
        %v2137 = vunpack.c.h.b16 %v874
        %v2138 = vunpack.c.l.b16 %v875
        %v2139 = vunpack.c.h.b16 %v875
        %v2140 = vunpack.c.l.b16 %v876
        %v2141 = vunpack.c.h.b16 %v876
        %v2142 = vunpack.c.l.b16 %v877
        %v2143 = vunpack.c.h.b16 %v877
        %v2144 = vunpack.c.l.b16 %v878
        %v2145 = vunpack.c.h.b16 %v878
        %v2146 = vunpack.c.l.b16 %v879
        %v2147 = vunpack.c.h.b16 %v879
        %v2148 = vunpack.c.l.b16 %v880
        %v2149 = vunpack.c.h.b16 %v880
        %v2150 = vunpack.c.l.b16 %v881
        %v2151 = vunpack.c.h.b16 %v881
        %v2152 = vunpack.c.l.b16 %v882
        %v2153 = vunpack.c.h.b16 %v882
        %v2154 = vunpack.c.l.b16 %v883
        %v2155 = vunpack.c.h.b16 %v883
        %v2156 = vunpack.c.l.b16 %v884
        %v2157 = vunpack.c.h.b16 %v884
        %v2158 = vunpack.c.l.b16 %v885
        %v2159 = vunpack.c.h.b16 %v885
        %v2160 = vunpack.c.l.b16 %v886
        %v2161 = vunpack.c.h.b16 %v886
        %v2162 = vunpack.c.l.b16 %v887
        %v2163 = vunpack.c.h.b16 %v887
        %v2164 = vunpack.c.l.b16 %v888
        %v2165 = vunpack.c.h.b16 %v888
        %v2166 = vunpack.c.l.b16 %v889
        %v2167 = vunpack.c.h.b16 %v889
        %v2168 = vunpack.c.l.b16 %v890
        %v2169 = vunpack.c.h.b16 %v890
        %v2170 = vunpack.c.l.b16 %v891
        %v2171 = vunpack.c.h.b16 %v891
        %v2172 = vunpack.c.l.b16 %v892
        %v2173 = vunpack.c.h.b16 %v892
        %v2174 = vunpack.c.l.b16 %v893
        %v2175 = vunpack.c.h.b16 %v893
        %v2176 = vunpack.c.l.b16 %v894
        %v2177 = vunpack.c.h.b16 %v894
        %v2178 = vunpack.c.l.b16 %v895
        %v2179 = vunpack.c.h.b16 %v895
        %v2180 = vunpack.c.l.b16 %v896
        %v2181 = vunpack.c.h.b16 %v896
        %v2182 = vunpack.c.l.b16 %v897
        %v2183 = vunpack.c.h.b16 %v897
        %v2184 = vunpack.c.l.b16 %v898
        %v2185 = vunpack.c.h.b16 %v898
        %v2186 = vunpack.c.l.b16 %v899
        %v2187 = vunpack.c.h.b16 %v899
        %v2188 = vunpack.c.l.b16 %v900
        %v2189 = vunpack.c.h.b16 %v900
        %v2190 = vunpack.c.l.b16 %v901
        %v2191 = vunpack.c.h.b16 %v901
        %v2192 = vunpack.c.l.b16 %v902
        %v2193 = vunpack.c.h.b16 %v902
        %v2194 = vunpack.c.l.b16 %v903
        %v2195 = vunpack.c.h.b16 %v903
        %v2196 = vunpack.c.l.b16 %v904
        %v2197 = vunpack.c.h.b16 %v904
        %v2198 = vunpack.c.l.b16 %v905
        %v2199 = vunpack.c.h.b16 %v905
        %v2200 = vunpack.c.l.b16 %v906
        %v2201 = vunpack.c.h.b16 %v906
        %v2202 = vunpack.c.l.b16 %v907
        %v2203 = vunpack.c.h.b16 %v907
        %v2204 = vunpack.c.l.b16 %v908
        %v2205 = vunpack.c.h.b16 %v908
        %v2206 = vunpack.c.l.b16 %v909
        %v2207 = vunpack.c.h.b16 %v909
        %v2208 = vunpack.c.l.b16 %v910
        %v2209 = vunpack.c.h.b16 %v910
        %v2210 = vunpack.c.l.b16 %v911
        %v2211 = vunpack.c.h.b16 %v911
        %v2212 = vunpack.c.l.b16 %v912
        %v2213 = vunpack.c.h.b16 %v912
        %v2214 = vunpack.c.l.b16 %v913
        %v2215 = vunpack.c.h.b16 %v913
        %v2216 = vunpack.c.l.b16 %v914
        %v2217 = vunpack.c.h.b16 %v914
        %v2218 = vunpack.c.l.b16 %v915
        %v2219 = vunpack.c.h.b16 %v915
        %v2220 = vunpack.c.l.b16 %v916
        %v2221 = vunpack.c.h.b16 %v916
        %v2222 = vunpack.c.l.b16 %v917
        %v2223 = vunpack.c.h.b16 %v917
        %v2224 = vunpack.c.l.b16 %v918
        %v2225 = vunpack.c.h.b16 %v918
        %v2226 = vunpack.c.l.b16 %v919
        %v2227 = vunpack.c.h.b16 %v919
        %v2228 = vunpack.c.l.b16 %v920
        %v2229 = vunpack.c.h.b16 %v920
        %v2230 = vunpack.c.l.b16 %v921
        %v2231 = vunpack.c.h.b16 %v921
        %v2232 = vunpack.c.l.b16 %v922
        %v2233 = vunpack.c.h.b16 %v922
        %v2234 = vunpack.c.l.b16 %v923
        %v2235 = vunpack.c.h.b16 %v923
        %v2236 = vunpack.c.l.b16 %v924
        %v2237 = vunpack.c.h.b16 %v924
        %v2238 = vunpack.c.l.b16 %v925
        %v2239 = vunpack.c.h.b16 %v925
        %v2240 = vunpack.c.l.b16 %v926
        %v2241 = vunpack.c.h.b16 %v926
        %v2242 = vunpack.c.l.b16 %v927
        %v2243 = vunpack.c.h.b16 %v927
        %v2244 = vunpack.c.l.b16 %v928
        %v2245 = vunpack.c.h.b16 %v928
        %v2246 = vunpack.c.l.b16 %v929
        %v2247 = vunpack.c.h.b16 %v929
        %v2248 = vunpack.c.l.b16 %v930
        %v2249 = vunpack.c.h.b16 %v930
        %v2250 = vunpack.c.l.b16 %v931
        %v2251 = vunpack.c.h.b16 %v931
        %v2252 = vunpack.c.l.b16 %v932
        %v2253 = vunpack.c.h.b16 %v932
        %v2254 = vunpack.c.l.b16 %v933
        %v2255 = vunpack.c.h.b16 %v933
        %v2256 = vunpack.c.l.b16 %v934
        %v2257 = vunpack.c.h.b16 %v934
        %v2258 = vunpack.c.l.b16 %v935
        %v2259 = vunpack.c.h.b16 %v935
        %v2260 = vunpack.c.l.b16 %v936
        %v2261 = vunpack.c.h.b16 %v936
        %v2262 = vunpack.c.l.b16 %v937
        %v2263 = vunpack.c.h.b16 %v937
        %v2264 = vunpack.c.l.b16 %v938
        %v2265 = vunpack.c.h.b16 %v938
        %v2266 = vunpack.c.l.b16 %v939
        %v2267 = vunpack.c.h.b16 %v939
        %v2268 = vunpack.c.l.b16 %v940
        %v2269 = vunpack.c.h.b16 %v940
        %v2270 = vunpack.c.l.b16 %v941
        %v2271 = vunpack.c.h.b16 %v941
        %v2272 = vunpack.c.l.b16 %v942
        %v2273 = vunpack.c.h.b16 %v942
        %v2274 = vunpack.c.l.b16 %v943
        %v2275 = vunpack.c.h.b16 %v943
        %v2276 = vunpack.c.l.b16 %v944
        %v2277 = vunpack.c.h.b16 %v944
        %v2278 = vunpack.c.l.b16 %v945
        %v2279 = vunpack.c.h.b16 %v945
        %v2280 = vunpack.c.l.b16 %v946
        %v2281 = vunpack.c.h.b16 %v946
        %v2282 = vunpack.c.l.b16 %v947
        %v2283 = vunpack.c.h.b16 %v947
        %v2284 = vunpack.c.l.b16 %v948
        %v2285 = vunpack.c.h.b16 %v948
        %v2286 = vunpack.c.l.b16 %v949
        %v2287 = vunpack.c.h.b16 %v949
        %v2288 = vunpack.c.l.b16 %v950
        %v2289 = vunpack.c.h.b16 %v950
        %v2290 = vunpack.c.l.b16 %v951
        %v2291 = vunpack.c.h.b16 %v951
        %v2292 = vunpack.c.l.b16 %v952
        %v2293 = vunpack.c.h.b16 %v952
        %v2294 = vunpack.c.l.b16 %v953
        %v2295 = vunpack.c.h.b16 %v953
        %v2296 = vunpack.c.l.b16 %v954
        %v2297 = vunpack.c.h.b16 %v954
        %v2298 = vunpack.c.l.b16 %v955
        %v2299 = vunpack.c.h.b16 %v955
        %v2300 = vunpack.c.l.b16 %v956
        %v2301 = vunpack.c.h.b16 %v956
        %v2302 = vunpack.c.l.b16 %v957
        %v2303 = vunpack.c.h.b16 %v957
        %v2304 = vunpack.c.l.b16 %v958
        %v2305 = vunpack.c.h.b16 %v958
        %v2306 = vunpack.c.l.b16 %v959
        %v2307 = vunpack.c.h.b16 %v959
        %v2308 = vunpack.c.l.b16 %v960
        %v2309 = vunpack.c.h.b16 %v960
        %v2310 = vunpack.c.l.b16 %v961
        %v2311 = vunpack.c.h.b16 %v961
        %v2312 = vunpack.c.l.b16 %v962
        %v2313 = vunpack.c.h.b16 %v962
        %v2314 = vunpack.c.l.b16 %v963
        %v2315 = vunpack.c.h.b16 %v963
        %v2316 = vunpack.c.l.b16 %v964
        %v2317 = vunpack.c.h.b16 %v964
        %v2318 = vunpack.c.l.b16 %v965
        %v2319 = vunpack.c.h.b16 %v965
        %v2320 = vunpack.c.l.b16 %v966
        %v2321 = vunpack.c.h.b16 %v966
        %v2322 = vunpack.c.l.b16 %v967
        %v2323 = vunpack.c.h.b16 %v967
        %v2324 = vunpack.c.l.b16 %v968
        %v2325 = vunpack.c.h.b16 %v968
        %v2326 = vunpack.c.l.b16 %v969
        %v2327 = vunpack.c.h.b16 %v969
        %v2328 = vunpack.c.l.b16 %v970
        %v2329 = vunpack.c.h.b16 %v970
        %v2330 = vunpack.c.l.b16 %v971
        %v2331 = vunpack.c.h.b16 %v971
        %v2332 = vunpack.c.l.b16 %v972
        %v2333 = vunpack.c.h.b16 %v972
        %v2334 = vunpack.c.l.b16 %v973
        %v2335 = vunpack.c.h.b16 %v973
        %v2336 = vunpack.c.l.b16 %v974
        %v2337 = vunpack.c.h.b16 %v974
        %v2338 = vunpack.c.l.b16 %v975
        %v2339 = vunpack.c.h.b16 %v975
        %v2340 = vunpack.c.l.b16 %v976
        %v2341 = vunpack.c.h.b16 %v976
        %v2342 = vunpack.c.l.b16 %v977
        %v2343 = vunpack.c.h.b16 %v977
        %v2344 = vunpack.c.l.b16 %v978
        %v2345 = vunpack.c.h.b16 %v978
        %v2346 = vunpack.c.l.b16 %v979
        %v2347 = vunpack.c.h.b16 %v979
        %v2348 = vunpack.c.l.b16 %v980
        %v2349 = vunpack.c.h.b16 %v980
        %v2350 = vunpack.c.l.b16 %v981
        %v2351 = vunpack.c.h.b16 %v981
        %v2352 = vunpack.c.l.b16 %v982
        %v2353 = vunpack.c.h.b16 %v982
        %v2354 = vunpack.c.l.b16 %v983
        %v2355 = vunpack.c.h.b16 %v983
        %v2356 = vunpack.c.l.b16 %v984
        %v2357 = vunpack.c.h.b16 %v984
        %v2358 = vunpack.c.l.b16 %v985
        %v2359 = vunpack.c.h.b16 %v985
        %v2360 = vunpack.c.l.b16 %v986
        %v2361 = vunpack.c.h.b16 %v986
        %v2362 = vunpack.c.l.b16 %v987
        %v2363 = vunpack.c.h.b16 %v987
        %v2364 = vunpack.c.l.b16 %v988
        %v2365 = vunpack.c.h.b16 %v988
        %v2366 = vunpack.c.l.b16 %v989
        %v2367 = vunpack.c.h.b16 %v989
        %v2368 = vunpack.c.l.b16 %v990
        %v2369 = vunpack.c.h.b16 %v990
        %v2370 = vunpack.c.l.b16 %v991
        %v2371 = vunpack.c.h.b16 %v991
        %v2372 = vunpack.c.l.b16 %v992
        %v2373 = vunpack.c.h.b16 %v992
        %v2374 = vunpack.c.l.b16 %v993
        %v2375 = vunpack.c.h.b16 %v993
        %v2376 = vunpack.c.l.b16 %v994
        %v2377 = vunpack.c.h.b16 %v994
        %v2378 = vunpack.c.l.b16 %v995
        %v2379 = vunpack.c.h.b16 %v995
        %v2380 = vunpack.c.l.b16 %v996
        %v2381 = vunpack.c.h.b16 %v996
        %v2382 = vunpack.c.l.b16 %v997
        %v2383 = vunpack.c.h.b16 %v997
        %v2384 = vunpack.c.l.b16 %v998
        %v2385 = vunpack.c.h.b16 %v998
        %v2386 = vunpack.c.l.b16 %v999
        %v2387 = vunpack.c.h.b16 %v999
        %v2388 = vunpack.c.l.b16 %v1000
        %v2389 = vunpack.c.h.b16 %v1000
        %v2390 = vunpack.c.l.b16 %v1001
        %v2391 = vunpack.c.h.b16 %v1001
        %v2392 = vunpack.c.l.b16 %v1002
        %v2393 = vunpack.c.h.b16 %v1002
        %v2394 = vunpack.c.l.b16 %v1003
        %v2395 = vunpack.c.h.b16 %v1003
        %v2396 = vunpack.c.l.b16 %v1004
        %v2397 = vunpack.c.h.b16 %v1004
        %v2398 = vunpack.c.l.b16 %v1005
        %v2399 = vunpack.c.h.b16 %v1005
        %v2400 = vunpack.c.l.b16 %v1006
        %v2401 = vunpack.c.h.b16 %v1006
        %v2402 = vunpack.c.l.b16 %v1007
        %v2403 = vunpack.c.h.b16 %v1007
        %v2404 = vunpack.c.l.b16 %v1008
        %v2405 = vunpack.c.h.b16 %v1008
        %v2406 = vunpack.c.l.b16 %v1009
        %v2407 = vunpack.c.h.b16 %v1009
        %v2408 = vunpack.c.l.b16 %v1010
        %v2409 = vunpack.c.h.b16 %v1010
        %v2410 = vunpack.c.l.b16 %v1011
        %v2411 = vunpack.c.h.b16 %v1011
        %v2412 = vunpack.c.l.b16 %v1012
        %v2413 = vunpack.c.h.b16 %v1012
        %v2414 = vunpack.c.l.b16 %v1013
        %v2415 = vunpack.c.h.b16 %v1013
        %v2416 = vunpack.c.l.b16 %v1014
        %v2417 = vunpack.c.h.b16 %v1014
        %v2418 = vunpack.c.l.b16 %v1015
        %v2419 = vunpack.c.h.b16 %v1015
        %v2420 = vunpack.c.l.b16 %v1016
        %v2421 = vunpack.c.h.b16 %v1016
        %v2422 = vunpack.c.l.b16 %v1017
        %v2423 = vunpack.c.h.b16 %v1017
        %v2424 = vunpack.c.l.b16 %v1018
        %v2425 = vunpack.c.h.b16 %v1018
        %v2426 = vunpack.c.l.b16 %v1019
        %v2427 = vunpack.c.h.b16 %v1019
        %v2428 = vunpack.c.l.b16 %v1020
        %v2429 = vunpack.c.h.b16 %v1020
        %v2430 = vunpack.c.l.b16 %v1021
        %v2431 = vunpack.c.h.b16 %v1021
        %v2432 = vunpack.c.l.b16 %v1022
        %v2433 = vunpack.c.h.b16 %v1022
        %v2434 = vunpack.c.l.b16 %v1023
        %v2435 = vunpack.c.h.b16 %v1023
        %v2436 = vunpack.c.l.b16 %v1024
        %v2437 = vunpack.c.h.b16 %v1024
        %v2438 = vunpack.c.l.b16 %v1025
        %v2439 = vunpack.c.h.b16 %v1025
        %v2440 = vunpack.c.l.b16 %v1026
        %v2441 = vunpack.c.h.b16 %v1026
        %v2442 = vunpack.c.l.b16 %v1027
        %v2443 = vunpack.c.h.b16 %v1027
        %v2444 = vunpack.c.l.b16 %v1028
        %v2445 = vunpack.c.h.b16 %v1028
        %v2446 = vunpack.c.l.b16 %v1029
        %v2447 = vunpack.c.h.b16 %v1029
        %v2448 = vunpack.c.l.b16 %v1030
        %v2449 = vunpack.c.h.b16 %v1030
        %v2450 = vunpack.c.l.b16 %v1031
        %v2451 = vunpack.c.h.b16 %v1031
        %v2452 = vunpack.c.l.b16 %v1032
        %v2453 = vunpack.c.h.b16 %v1032
        %v2454 = vunpack.c.l.b16 %v1033
        %v2455 = vunpack.c.h.b16 %v1033
        %v2456 = vunpack.c.l.b16 %v1034
        %v2457 = vunpack.c.h.b16 %v1034
        %v2458 = vunpack.c.l.b16 %v1035
        %v2459 = vunpack.c.h.b16 %v1035
        %v2460 = vunpack.c.l.b16 %v1036
        %v2461 = vunpack.c.h.b16 %v1036
        %v2462 = vunpack.c.l.b16 %v1037
        %v2463 = vunpack.c.h.b16 %v1037
        %v2464 = vunpack.c.l.b16 %v1038
        %v2465 = vunpack.c.h.b16 %v1038
        %v2466 = vunpack.c.l.b16 %v1039
        %v2467 = vunpack.c.h.b16 %v1039
        %v2468 = vunpack.c.l.b16 %v1040
        %v2469 = vunpack.c.h.b16 %v1040
        %v2470 = vunpack.c.l.b16 %v1041
        %v2471 = vunpack.c.h.b16 %v1041
        %v2472 = vunpack.c.l.b16 %v1042
        %v2473 = vunpack.c.h.b16 %v1042
        %v2474 = vunpack.c.l.b16 %v1043
        %v2475 = vunpack.c.h.b16 %v1043
        %v2476 = vunpack.c.l.b16 %v1044
        %v2477 = vunpack.c.h.b16 %v1044
        %v2478 = vunpack.c.l.b16 %v1045
        %v2479 = vunpack.c.h.b16 %v1045
        %v2480 = vunpack.c.l.b16 %v1046
        %v2481 = vunpack.c.h.b16 %v1046
        %v2482 = vunpack.c.l.b16 %v1047
        %v2483 = vunpack.c.h.b16 %v1047
        %v2484 = vunpack.c.l.b16 %v1048
        %v2485 = vunpack.c.h.b16 %v1048
        %v2486 = vunpack.c.l.b16 %v1049
        %v2487 = vunpack.c.h.b16 %v1049
        %v2488 = vunpack.c.l.b16 %v1050
        %v2489 = vunpack.c.h.b16 %v1050
        %v2490 = vunpack.c.l.b16 %v1051
        %v2491 = vunpack.c.h.b16 %v1051
        %v2492 = vunpack.c.l.b16 %v1052
        %v2493 = vunpack.c.h.b16 %v1052
        %v2494 = vunpack.c.l.b16 %v1053
        %v2495 = vunpack.c.h.b16 %v1053
        %v2496 = vunpack.c.l.b16 %v1054
        %v2497 = vunpack.c.h.b16 %v1054
        %v2498 = vunpack.c.l.b16 %v1055
        %v2499 = vunpack.c.h.b16 %v1055
        %v2500 = vunpack.c.l.b16 %v1056
        %v2501 = vunpack.c.h.b16 %v1056
        %v2502 = vunpack.c.l.b16 %v1057
        %v2503 = vunpack.c.h.b16 %v1057
        %v2504 = vunpack.c.l.b16 %v1058
        %v2505 = vunpack.c.h.b16 %v1058
        %v2506 = vunpack.c.l.b16 %v1059
        %v2507 = vunpack.c.h.b16 %v1059
        %v2508 = vunpack.c.l.b16 %v1060
        %v2509 = vunpack.c.h.b16 %v1060
        %v2510 = vunpack.c.l.b16 %v1061
        %v2511 = vunpack.c.h.b16 %v1061
        %v2512 = vunpack.c.l.b16 %v1062
        %v2513 = vunpack.c.h.b16 %v1062
        %v2514 = vunpack.c.l.b16 %v1063
        %v2515 = vunpack.c.h.b16 %v1063
        %v2516 = vunpack.c.l.b16 %v1064
        %v2517 = vunpack.c.h.b16 %v1064
        %v2518 = vunpack.c.l.b16 %v1065
        %v2519 = vunpack.c.h.b16 %v1065
        %v2520 = vunpack.c.l.b16 %v1066
        %v2521 = vunpack.c.h.b16 %v1066
        %v2522 = vunpack.c.l.b16 %v1067
        %v2523 = vunpack.c.h.b16 %v1067
        %v2524 = vunpack.c.l.b16 %v1068
        %v2525 = vunpack.c.h.b16 %v1068
        %v2526 = vunpack.c.l.b16 %v1069
        %v2527 = vunpack.c.h.b16 %v1069
        %v2528 = vunpack.c.l.b16 %v1070
        %v2529 = vunpack.c.h.b16 %v1070
        %v2530 = vunpack.c.l.b16 %v1071
        %v2531 = vunpack.c.h.b16 %v1071
        %v2532 = vunpack.c.l.b16 %v1072
        %v2533 = vunpack.c.h.b16 %v1072
        %v2534 = vunpack.c.l.b16 %v1073
        %v2535 = vunpack.c.h.b16 %v1073
        %v2536 = vunpack.c.l.b16 %v1074
        %v2537 = vunpack.c.h.b16 %v1074
        %v2538 = vunpack.c.l.b16 %v1075
        %v2539 = vunpack.c.h.b16 %v1075
        %v2540 = vunpack.c.l.b16 %v1076
        %v2541 = vunpack.c.h.b16 %v1076
        %v2542 = vunpack.c.l.b16 %v1077
        %v2543 = vunpack.c.h.b16 %v1077
        %v2544 = vunpack.c.l.b16 %v1078
        %v2545 = vunpack.c.h.b16 %v1078
        %v2546 = vunpack.c.l.b16 %v1079
        %v2547 = vunpack.c.h.b16 %v1079
        %v2548 = vunpack.c.l.b16 %v1080
        %v2549 = vunpack.c.h.b16 %v1080
        %v2550 = vunpack.c.l.b16 %v1081
        %v2551 = vunpack.c.h.b16 %v1081
        %v2552 = vunpack.c.l.b16 %v1082
        %v2553 = vunpack.c.h.b16 %v1082
        %v2554 = vunpack.c.l.b16 %v1083
        %v2555 = vunpack.c.h.b16 %v1083
        %v2556 = vunpack.c.l.b16 %v1084
        %v2557 = vunpack.c.h.b16 %v1084
        %v2558 = vunpack.c.l.b16 %v1085
        %v2559 = vunpack.c.h.b16 %v1085
        %v2560 = vunpack.c.l.b16 %v1086
        %v2561 = vunpack.c.h.b16 %v1086
        %v2562 = vunpack.c.l.b16 %v1087
        %v2563 = vunpack.c.h.b16 %v1087
        %v2564 = vunpack.c.l.b16 %v1088
        %v2565 = vunpack.c.h.b16 %v1088
        %v2566 = vunpack.c.l.b16 %v1089
        %v2567 = vunpack.c.h.b16 %v1089
        %v2568 = vunpack.c.l.b16 %v1090
        %v2569 = vunpack.c.h.b16 %v1090
        %v2570 = vunpack.c.l.b16 %v1091
        %v2571 = vunpack.c.h.b16 %v1091
        %v2572 = vunpack.c.l.b16 %v1092
        %v2573 = vunpack.c.h.b16 %v1092
        %v2574 = vunpack.c.l.b16 %v1093
        %v2575 = vunpack.c.h.b16 %v1093
        %v2576 = vunpack.c.l.b16 %v1094
        %v2577 = vunpack.c.h.b16 %v1094
        %v2578 = vunpack.c.l.b16 %v1095
        %v2579 = vunpack.c.h.b16 %v1095
        %v2580 = vunpack.c.l.b16 %v1096
        %v2581 = vunpack.c.h.b16 %v1096
        %v2582 = vunpack.c.l.b16 %v1097
        %v2583 = vunpack.c.h.b16 %v1097
        %v2584 = vunpack.c.l.b16 %v1098
        %v2585 = vunpack.c.h.b16 %v1098
        %v2586 = vunpack.c.l.b16 %v1099
        %v2587 = vunpack.c.h.b16 %v1099
        %v2588 = vunpack.c.l.b16 %v1100
        %v2589 = vunpack.c.h.b16 %v1100
        %v2590 = vunpack.c.l.b16 %v1101
        %v2591 = vunpack.c.h.b16 %v1101
        %v2592 = vunpack.c.l.b16 %v1102
        %v2593 = vunpack.c.h.b16 %v1102
        %v2594 = vunpack.c.l.b16 %v1103
        %v2595 = vunpack.c.h.b16 %v1103
        %v2596 = vunpack.c.l.b16 %v1104
        %v2597 = vunpack.c.h.b16 %v1104
        %v2598 = vunpack.c.l.b16 %v1105
        %v2599 = vunpack.c.h.b16 %v1105
        %v2600 = vunpack.c.l.b16 %v1106
        %v2601 = vunpack.c.h.b16 %v1106
        %v2602 = vunpack.c.l.b16 %v1107
        %v2603 = vunpack.c.h.b16 %v1107
        %v2604 = vunpack.c.l.b16 %v1108
        %v2605 = vunpack.c.h.b16 %v1108
        %v2606 = vunpack.c.l.b16 %v1109
        %v2607 = vunpack.c.h.b16 %v1109
        %v2608 = vunpack.c.l.b16 %v1110
        %v2609 = vunpack.c.h.b16 %v1110
        %v2610 = vunpack.c.l.b16 %v1111
        %v2611 = vunpack.c.h.b16 %v1111
        %v2612 = vunpack.c.l.b16 %v1112
        %v2613 = vunpack.c.h.b16 %v1112
        %v2614 = vunpack.c.l.b16 %v1113
        %v2615 = vunpack.c.h.b16 %v1113
        %v2616 = vunpack.c.l.b16 %v1114
        %v2617 = vunpack.c.h.b16 %v1114
        %v2618 = vunpack.c.l.b16 %v1115
        %v2619 = vunpack.c.h.b16 %v1115
        %v2620 = vunpack.c.l.b16 %v1116
        %v2621 = vunpack.c.h.b16 %v1116
        %v2622 = vunpack.c.l.b16 %v1117
        %v2623 = vunpack.c.h.b16 %v1117
        %v2624 = vunpack.c.l.b16 %v1118
        %v2625 = vunpack.c.h.b16 %v1118
        %v2626 = vunpack.c.l.b16 %v1119
        %v2627 = vunpack.c.h.b16 %v1119
        %v2628 = vunpack.c.l.b16 %v1120
        %v2629 = vunpack.c.h.b16 %v1120
        %v2630 = vunpack.c.l.b16 %v1121
        %v2631 = vunpack.c.h.b16 %v1121
        %v2632 = vunpack.c.l.b16 %v1122
        %v2633 = vunpack.c.h.b16 %v1122
        %v2634 = vunpack.c.l.b16 %v1123
        %v2635 = vunpack.c.h.b16 %v1123
        %v2636 = vunpack.c.l.b16 %v1124
        %v2637 = vunpack.c.h.b16 %v1124
        %v2638 = vunpack.c.l.b16 %v1125
        %v2639 = vunpack.c.h.b16 %v1125
        %v2640 = vunpack.c.l.b16 %v1126
        %v2641 = vunpack.c.h.b16 %v1126
        %v2642 = vunpack.c.l.b16 %v1127
        %v2643 = vunpack.c.h.b16 %v1127
        %v2644 = vunpack.c.l.b16 %v1128
        %v2645 = vunpack.c.h.b16 %v1128
        %v2646 = vunpack.c.l.b16 %v1129
        %v2647 = vunpack.c.h.b16 %v1129
        %v2648 = vunpack.c.l.b16 %v1130
        %v2649 = vunpack.c.h.b16 %v1130
        %v2650 = vunpack.c.l.b16 %v1131
        %v2651 = vunpack.c.h.b16 %v1131
        %v2652 = vunpack.c.l.b16 %v1132
        %v2653 = vunpack.c.h.b16 %v1132
        %v2654 = vunpack.c.l.b16 %v1133
        %v2655 = vunpack.c.h.b16 %v1133
        %v2656 = vunpack.c.l.b16 %v1134
        %v2657 = vunpack.c.h.b16 %v1134
        %v2658 = vunpack.c.l.b16 %v1135
        %v2659 = vunpack.c.h.b16 %v1135
        %v2660 = vunpack.c.l.b16 %v1136
        %v2661 = vunpack.c.h.b16 %v1136
        %v2662 = vunpack.c.l.b16 %v1137
        %v2663 = vunpack.c.h.b16 %v1137
        %v2664 = vunpack.c.l.b16 %v1138
        %v2665 = vunpack.c.h.b16 %v1138
        %v2666 = vunpack.c.l.b16 %v1139
        %v2667 = vunpack.c.h.b16 %v1139
        %v2668 = vunpack.c.l.b16 %v1140
        %v2669 = vunpack.c.h.b16 %v1140
        %v2670 = vunpack.c.l.b16 %v1141
        %v2671 = vunpack.c.h.b16 %v1141
        %v2672 = vunpack.c.l.b16 %v1142
        %v2673 = vunpack.c.h.b16 %v1142
        %v2674 = vunpack.c.l.b16 %v1143
        %v2675 = vunpack.c.h.b16 %v1143
        %v2676 = vunpack.c.l.b16 %v1144
        %v2677 = vunpack.c.h.b16 %v1144
        %v2678 = vunpack.c.l.b16 %v1145
        %v2679 = vunpack.c.h.b16 %v1145
        %v2680 = vunpack.c.l.b16 %v1146
        %v2681 = vunpack.c.h.b16 %v1146
        %v2682 = vunpack.c.l.b16 %v1147
        %v2683 = vunpack.c.h.b16 %v1147
        %v2684 = vunpack.c.l.b16 %v1148
        %v2685 = vunpack.c.h.b16 %v1148
        %v2686 = vunpack.c.l.b16 %v1149
        %v2687 = vunpack.c.h.b16 %v1149
        %v2688 = vunpack.c.l.b16 %v1150
        %v2689 = vunpack.c.h.b16 %v1150
        %v2690 = vunpack.c.l.b16 %v1151
        %v2691 = vunpack.c.h.b16 %v1151
        %v2692 = vunpack.c.l.b16 %v1152
        %v2693 = vunpack.c.h.b16 %v1152
        %v2694 = vunpack.c.l.b16 %v1153
        %v2695 = vunpack.c.h.b16 %v1153
        %v2696 = vunpack.c.l.b16 %v1154
        %v2697 = vunpack.c.h.b16 %v1154
        %v2698 = vunpack.c.l.b16 %v1155
        %v2699 = vunpack.c.h.b16 %v1155
        %v2700 = vunpack.c.l.b16 %v1156
        %v2701 = vunpack.c.h.b16 %v1156
        %v2702 = vunpack.c.l.b16 %v1157
        %v2703 = vunpack.c.h.b16 %v1157
        %v2704 = vunpack.c.l.b16 %v1158
        %v2705 = vunpack.c.h.b16 %v1158
        %v2706 = vunpack.c.l.b16 %v1159
        %v2707 = vunpack.c.h.b16 %v1159
        %v2708 = vunpack.c.l.b16 %v1160
        %v2709 = vunpack.c.h.b16 %v1160
        %v2710 = vunpack.c.l.b16 %v1161
        %v2711 = vunpack.c.h.b16 %v1161
        %v2712 = vunpack.c.l.b16 %v1162
        %v2713 = vunpack.c.h.b16 %v1162
        %v2714 = vunpack.c.l.b16 %v1163
        %v2715 = vunpack.c.h.b16 %v1163
        %v2716 = vunpack.c.l.b16 %v1164
        %v2717 = vunpack.c.h.b16 %v1164
        %v2718 = vpack.c.b16 %v1702, %v1694
        %v2719 = vpack.c.b16 %v1703, %v1695
        %v2720 = vpack.c.b16 %v1704, %v1696
        %v2721 = vpack.c.b16 %v1705, %v1697
        %v2722 = vpack.c.b16 %v1706, %v1698
        %v2723 = vpack.c.b16 %v1707, %v1699
        %v2724 = vpack.c.b16 %v1708, %v1700
        %v2725 = vpack.c.b16 %v1709, %v1701
        %v2726 = vpack.c.b16 %v1718, %v1710
        %v2727 = vpack.c.b16 %v1719, %v1711
        %v2728 = vpack.c.b16 %v1720, %v1712
        %v2729 = vpack.c.b16 %v1721, %v1713
        %v2730 = vpack.c.b16 %v1722, %v1714
        %v2731 = vpack.c.b16 %v1723, %v1715
        %v2732 = vpack.c.b16 %v1724, %v1716
        %v2733 = vpack.c.b16 %v1725, %v1717
        %v2734 = vpack.c.b16 %v1734, %v1726
        %v2735 = vpack.c.b16 %v1735, %v1727
        %v2736 = vpack.c.b16 %v1736, %v1728
        %v2737 = vpack.c.b16 %v1737, %v1729
        %v2738 = vpack.c.b16 %v1738, %v1730
        %v2739 = vpack.c.b16 %v1739, %v1731
        %v2740 = vpack.c.b16 %v1740, %v1732
        %v2741 = vpack.c.b16 %v1741, %v1733
        %v2742 = vpack.c.b16 %v1750, %v1742
        %v2743 = vpack.c.b16 %v1751, %v1743
        %v2744 = vpack.c.b16 %v1752, %v1744
        %v2745 = vpack.c.b16 %v1753, %v1745
        %v2746 = vpack.c.b16 %v1754, %v1746
        %v2747 = vpack.c.b16 %v1755, %v1747
        %v2748 = vpack.c.b16 %v1756, %v1748
        %v2749 = vpack.c.b16 %v1757, %v1749
        %v2750 = vpack.c.b16 %v1766, %v1758
        %v2751 = vpack.c.b16 %v1767, %v1759
        %v2752 = vpack.c.b16 %v1768, %v1760
        %v2753 = vpack.c.b16 %v1769, %v1761
        %v2754 = vpack.c.b16 %v1770, %v1762
        %v2755 = vpack.c.b16 %v1771, %v1763
        %v2756 = vpack.c.b16 %v1772, %v1764
        %v2757 = vpack.c.b16 %v1773, %v1765
        %v2758 = vpack.c.b16 %v1782, %v1774
        %v2759 = vpack.c.b16 %v1783, %v1775
        %v2760 = vpack.c.b16 %v1784, %v1776
        %v2761 = vpack.c.b16 %v1785, %v1777
        %v2762 = vpack.c.b16 %v1786, %v1778
        %v2763 = vpack.c.b16 %v1787, %v1779
        %v2764 = vpack.c.b16 %v1788, %v1780
        %v2765 = vpack.c.b16 %v1789, %v1781
        %v2766 = vpack.c.b16 %v1798, %v1790
        %v2767 = vpack.c.b16 %v1799, %v1791
        %v2768 = vpack.c.b16 %v1800, %v1792
        %v2769 = vpack.c.b16 %v1801, %v1793
        %v2770 = vpack.c.b16 %v1802, %v1794
        %v2771 = vpack.c.b16 %v1803, %v1795
        %v2772 = vpack.c.b16 %v1804, %v1796
        %v2773 = vpack.c.b16 %v1805, %v1797
        %v2774 = vpack.c.b16 %v1814, %v1806
        %v2775 = vpack.c.b16 %v1815, %v1807
        %v2776 = vpack.c.b16 %v1816, %v1808
        %v2777 = vpack.c.b16 %v1817, %v1809
        %v2778 = vpack.c.b16 %v1818, %v1810
        %v2779 = vpack.c.b16 %v1819, %v1811
        %v2780 = vpack.c.b16 %v1820, %v1812
        %v2781 = vpack.c.b16 %v1821, %v1813
        %v2782 = vpack.c.b16 %v1830, %v1822
        %v2783 = vpack.c.b16 %v1831, %v1823
        %v2784 = vpack.c.b16 %v1832, %v1824
        %v2785 = vpack.c.b16 %v1833, %v1825
        %v2786 = vpack.c.b16 %v1834, %v1826
        %v2787 = vpack.c.b16 %v1835, %v1827
        %v2788 = vpack.c.b16 %v1836, %v1828
        %v2789 = vpack.c.b16 %v1837, %v1829
        %v2790 = vpack.c.b16 %v1846, %v1838
        %v2791 = vpack.c.b16 %v1847, %v1839
        %v2792 = vpack.c.b16 %v1848, %v1840
        %v2793 = vpack.c.b16 %v1849, %v1841
        %v2794 = vpack.c.b16 %v1850, %v1842
        %v2795 = vpack.c.b16 %v1851, %v1843
        %v2796 = vpack.c.b16 %v1852, %v1844
        %v2797 = vpack.c.b16 %v1853, %v1845
        %v2798 = vpack.c.b16 %v1862, %v1854
        %v2799 = vpack.c.b16 %v1863, %v1855
        %v2800 = vpack.c.b16 %v1864, %v1856
        %v2801 = vpack.c.b16 %v1865, %v1857
        %v2802 = vpack.c.b16 %v1866, %v1858
        %v2803 = vpack.c.b16 %v1867, %v1859
        %v2804 = vpack.c.b16 %v1868, %v1860
        %v2805 = vpack.c.b16 %v1869, %v1861
        %v2806 = vpack.c.b16 %v1878, %v1870
        %v2807 = vpack.c.b16 %v1879, %v1871
        %v2808 = vpack.c.b16 %v1880, %v1872
        %v2809 = vpack.c.b16 %v1881, %v1873
        %v2810 = vpack.c.b16 %v1882, %v1874
        %v2811 = vpack.c.b16 %v1883, %v1875
        %v2812 = vpack.c.b16 %v1884, %v1876
        %v2813 = vpack.c.b16 %v1885, %v1877
        %v2814 = vpack.c.b16 %v1894, %v1886
        %v2815 = vpack.c.b16 %v1895, %v1887
        %v2816 = vpack.c.b16 %v1896, %v1888
        %v2817 = vpack.c.b16 %v1897, %v1889
        %v2818 = vpack.c.b16 %v1898, %v1890
        %v2819 = vpack.c.b16 %v1899, %v1891
        %v2820 = vpack.c.b16 %v1900, %v1892
        %v2821 = vpack.c.b16 %v1901, %v1893
        %v2822 = vpack.c.b16 %v1910, %v1902
        %v2823 = vpack.c.b16 %v1911, %v1903
        %v2824 = vpack.c.b16 %v1912, %v1904
        %v2825 = vpack.c.b16 %v1913, %v1905
        %v2826 = vpack.c.b16 %v1914, %v1906
        %v2827 = vpack.c.b16 %v1915, %v1907
        %v2828 = vpack.c.b16 %v1916, %v1908
        %v2829 = vpack.c.b16 %v1917, %v1909
        %v2830 = vpack.c.b16 %v1926, %v1918
        %v2831 = vpack.c.b16 %v1927, %v1919
        %v2832 = vpack.c.b16 %v1928, %v1920
        %v2833 = vpack.c.b16 %v1929, %v1921
        %v2834 = vpack.c.b16 %v1930, %v1922
        %v2835 = vpack.c.b16 %v1931, %v1923
        %v2836 = vpack.c.b16 %v1932, %v1924
        %v2837 = vpack.c.b16 %v1933, %v1925
        %v2838 = vpack.c.b16 %v1942, %v1934
        %v2839 = vpack.c.b16 %v1943, %v1935
        %v2840 = vpack.c.b16 %v1944, %v1936
        %v2841 = vpack.c.b16 %v1945, %v1937
        %v2842 = vpack.c.b16 %v1946, %v1938
        %v2843 = vpack.c.b16 %v1947, %v1939
        %v2844 = vpack.c.b16 %v1948, %v1940
        %v2845 = vpack.c.b16 %v1949, %v1941
        %v2846 = vpack.c.b16 %v1958, %v1950
        %v2847 = vpack.c.b16 %v1959, %v1951
        %v2848 = vpack.c.b16 %v1960, %v1952
        %v2849 = vpack.c.b16 %v1961, %v1953
        %v2850 = vpack.c.b16 %v1962, %v1954
        %v2851 = vpack.c.b16 %v1963, %v1955
        %v2852 = vpack.c.b16 %v1964, %v1956
        %v2853 = vpack.c.b16 %v1965, %v1957
        %v2854 = vpack.c.b16 %v1974, %v1966
        %v2855 = vpack.c.b16 %v1975, %v1967
        %v2856 = vpack.c.b16 %v1976, %v1968
        %v2857 = vpack.c.b16 %v1977, %v1969
        %v2858 = vpack.c.b16 %v1978, %v1970
        %v2859 = vpack.c.b16 %v1979, %v1971
        %v2860 = vpack.c.b16 %v1980, %v1972
        %v2861 = vpack.c.b16 %v1981, %v1973
        %v2862 = vpack.c.b16 %v1990, %v1982
        %v2863 = vpack.c.b16 %v1991, %v1983
        %v2864 = vpack.c.b16 %v1992, %v1984
        %v2865 = vpack.c.b16 %v1993, %v1985
        %v2866 = vpack.c.b16 %v1994, %v1986
        %v2867 = vpack.c.b16 %v1995, %v1987
        %v2868 = vpack.c.b16 %v1996, %v1988
        %v2869 = vpack.c.b16 %v1997, %v1989
        %v2870 = vpack.c.b16 %v2006, %v1998
        %v2871 = vpack.c.b16 %v2007, %v1999
        %v2872 = vpack.c.b16 %v2008, %v2000
        %v2873 = vpack.c.b16 %v2009, %v2001
        %v2874 = vpack.c.b16 %v2010, %v2002
        %v2875 = vpack.c.b16 %v2011, %v2003
        %v2876 = vpack.c.b16 %v2012, %v2004
        %v2877 = vpack.c.b16 %v2013, %v2005
        %v2878 = vpack.c.b16 %v2022, %v2014
        %v2879 = vpack.c.b16 %v2023, %v2015
        %v2880 = vpack.c.b16 %v2024, %v2016
        %v2881 = vpack.c.b16 %v2025, %v2017
        %v2882 = vpack.c.b16 %v2026, %v2018
        %v2883 = vpack.c.b16 %v2027, %v2019
        %v2884 = vpack.c.b16 %v2028, %v2020
        %v2885 = vpack.c.b16 %v2029, %v2021
        %v2886 = vpack.c.b16 %v2038, %v2030
        %v2887 = vpack.c.b16 %v2039, %v2031
        %v2888 = vpack.c.b16 %v2040, %v2032
        %v2889 = vpack.c.b16 %v2041, %v2033
        %v2890 = vpack.c.b16 %v2042, %v2034
        %v2891 = vpack.c.b16 %v2043, %v2035
        %v2892 = vpack.c.b16 %v2044, %v2036
        %v2893 = vpack.c.b16 %v2045, %v2037
        %v2894 = vpack.c.b16 %v2054, %v2046
        %v2895 = vpack.c.b16 %v2055, %v2047
        %v2896 = vpack.c.b16 %v2056, %v2048
        %v2897 = vpack.c.b16 %v2057, %v2049
        %v2898 = vpack.c.b16 %v2058, %v2050
        %v2899 = vpack.c.b16 %v2059, %v2051
        %v2900 = vpack.c.b16 %v2060, %v2052
        %v2901 = vpack.c.b16 %v2061, %v2053
        %v2902 = vpack.c.b16 %v2070, %v2062
        %v2903 = vpack.c.b16 %v2071, %v2063
        %v2904 = vpack.c.b16 %v2072, %v2064
        %v2905 = vpack.c.b16 %v2073, %v2065
        %v2906 = vpack.c.b16 %v2074, %v2066
        %v2907 = vpack.c.b16 %v2075, %v2067
        %v2908 = vpack.c.b16 %v2076, %v2068
        %v2909 = vpack.c.b16 %v2077, %v2069
        %v2910 = vpack.c.b16 %v2086, %v2078
        %v2911 = vpack.c.b16 %v2087, %v2079
        %v2912 = vpack.c.b16 %v2088, %v2080
        %v2913 = vpack.c.b16 %v2089, %v2081
        %v2914 = vpack.c.b16 %v2090, %v2082
        %v2915 = vpack.c.b16 %v2091, %v2083
        %v2916 = vpack.c.b16 %v2092, %v2084
        %v2917 = vpack.c.b16 %v2093, %v2085
        %v2918 = vpack.c.b16 %v2102, %v2094
        %v2919 = vpack.c.b16 %v2103, %v2095
        %v2920 = vpack.c.b16 %v2104, %v2096
        %v2921 = vpack.c.b16 %v2105, %v2097
        %v2922 = vpack.c.b16 %v2106, %v2098
        %v2923 = vpack.c.b16 %v2107, %v2099
        %v2924 = vpack.c.b16 %v2108, %v2100
        %v2925 = vpack.c.b16 %v2109, %v2101
        %v2926 = vpack.c.b16 %v2118, %v2110
        %v2927 = vpack.c.b16 %v2119, %v2111
        %v2928 = vpack.c.b16 %v2120, %v2112
        %v2929 = vpack.c.b16 %v2121, %v2113
        %v2930 = vpack.c.b16 %v2122, %v2114
        %v2931 = vpack.c.b16 %v2123, %v2115
        %v2932 = vpack.c.b16 %v2124, %v2116
        %v2933 = vpack.c.b16 %v2125, %v2117
        %v2934 = vpack.c.b16 %v2134, %v2126
        %v2935 = vpack.c.b16 %v2135, %v2127
        %v2936 = vpack.c.b16 %v2136, %v2128
        %v2937 = vpack.c.b16 %v2137, %v2129
        %v2938 = vpack.c.b16 %v2138, %v2130
        %v2939 = vpack.c.b16 %v2139, %v2131
        %v2940 = vpack.c.b16 %v2140, %v2132
        %v2941 = vpack.c.b16 %v2141, %v2133
        %v2942 = vpack.c.b16 %v2150, %v2142
        %v2943 = vpack.c.b16 %v2151, %v2143
        %v2944 = vpack.c.b16 %v2152, %v2144
        %v2945 = vpack.c.b16 %v2153, %v2145
        %v2946 = vpack.c.b16 %v2154, %v2146
        %v2947 = vpack.c.b16 %v2155, %v2147
        %v2948 = vpack.c.b16 %v2156, %v2148
        %v2949 = vpack.c.b16 %v2157, %v2149
        %v2950 = vpack.c.b16 %v2166, %v2158
        %v2951 = vpack.c.b16 %v2167, %v2159
        %v2952 = vpack.c.b16 %v2168, %v2160
        %v2953 = vpack.c.b16 %v2169, %v2161
        %v2954 = vpack.c.b16 %v2170, %v2162
        %v2955 = vpack.c.b16 %v2171, %v2163
        %v2956 = vpack.c.b16 %v2172, %v2164
        %v2957 = vpack.c.b16 %v2173, %v2165
        %v2958 = vpack.c.b16 %v2182, %v2174
        %v2959 = vpack.c.b16 %v2183, %v2175
        %v2960 = vpack.c.b16 %v2184, %v2176
        %v2961 = vpack.c.b16 %v2185, %v2177
        %v2962 = vpack.c.b16 %v2186, %v2178
        %v2963 = vpack.c.b16 %v2187, %v2179
        %v2964 = vpack.c.b16 %v2188, %v2180
        %v2965 = vpack.c.b16 %v2189, %v2181
        %v2966 = vpack.c.b16 %v2198, %v2190
        %v2967 = vpack.c.b16 %v2199, %v2191
        %v2968 = vpack.c.b16 %v2200, %v2192
        %v2969 = vpack.c.b16 %v2201, %v2193
        %v2970 = vpack.c.b16 %v2202, %v2194
        %v2971 = vpack.c.b16 %v2203, %v2195
        %v2972 = vpack.c.b16 %v2204, %v2196
        %v2973 = vpack.c.b16 %v2205, %v2197
        %v2974 = vpack.c.b16 %v2214, %v2206
        %v2975 = vpack.c.b16 %v2215, %v2207
        %v2976 = vpack.c.b16 %v2216, %v2208
        %v2977 = vpack.c.b16 %v2217, %v2209
        %v2978 = vpack.c.b16 %v2218, %v2210
        %v2979 = vpack.c.b16 %v2219, %v2211
        %v2980 = vpack.c.b16 %v2220, %v2212
        %v2981 = vpack.c.b16 %v2221, %v2213
        %v2982 = vpack.c.b16 %v2230, %v2222
        %v2983 = vpack.c.b16 %v2231, %v2223
        %v2984 = vpack.c.b16 %v2232, %v2224
        %v2985 = vpack.c.b16 %v2233, %v2225
        %v2986 = vpack.c.b16 %v2234, %v2226
        %v2987 = vpack.c.b16 %v2235, %v2227
        %v2988 = vpack.c.b16 %v2236, %v2228
        %v2989 = vpack.c.b16 %v2237, %v2229
        %v2990 = vpack.c.b16 %v2246, %v2238
        %v2991 = vpack.c.b16 %v2247, %v2239
        %v2992 = vpack.c.b16 %v2248, %v2240
        %v2993 = vpack.c.b16 %v2249, %v2241
        %v2994 = vpack.c.b16 %v2250, %v2242
        %v2995 = vpack.c.b16 %v2251, %v2243
        %v2996 = vpack.c.b16 %v2252, %v2244
        %v2997 = vpack.c.b16 %v2253, %v2245
        %v2998 = vpack.c.b16 %v2262, %v2254
        %v2999 = vpack.c.b16 %v2263, %v2255
        %v3000 = vpack.c.b16 %v2264, %v2256
        %v3001 = vpack.c.b16 %v2265, %v2257
        %v3002 = vpack.c.b16 %v2266, %v2258
        %v3003 = vpack.c.b16 %v2267, %v2259
        %v3004 = vpack.c.b16 %v2268, %v2260
        %v3005 = vpack.c.b16 %v2269, %v2261
        %v3006 = vpack.c.b16 %v2278, %v2270
        %v3007 = vpack.c.b16 %v2279, %v2271
        %v3008 = vpack.c.b16 %v2280, %v2272
        %v3009 = vpack.c.b16 %v2281, %v2273
        %v3010 = vpack.c.b16 %v2282, %v2274
        %v3011 = vpack.c.b16 %v2283, %v2275
        %v3012 = vpack.c.b16 %v2284, %v2276
        %v3013 = vpack.c.b16 %v2285, %v2277
        %v3014 = vpack.c.b16 %v2294, %v2286
        %v3015 = vpack.c.b16 %v2295, %v2287
        %v3016 = vpack.c.b16 %v2296, %v2288
        %v3017 = vpack.c.b16 %v2297, %v2289
        %v3018 = vpack.c.b16 %v2298, %v2290
        %v3019 = vpack.c.b16 %v2299, %v2291
        %v3020 = vpack.c.b16 %v2300, %v2292
        %v3021 = vpack.c.b16 %v2301, %v2293
        %v3022 = vpack.c.b16 %v2310, %v2302
        %v3023 = vpack.c.b16 %v2311, %v2303
        %v3024 = vpack.c.b16 %v2312, %v2304
        %v3025 = vpack.c.b16 %v2313, %v2305
        %v3026 = vpack.c.b16 %v2314, %v2306
        %v3027 = vpack.c.b16 %v2315, %v2307
        %v3028 = vpack.c.b16 %v2316, %v2308
        %v3029 = vpack.c.b16 %v2317, %v2309
        %v3030 = vpack.c.b16 %v2326, %v2318
        %v3031 = vpack.c.b16 %v2327, %v2319
        %v3032 = vpack.c.b16 %v2328, %v2320
        %v3033 = vpack.c.b16 %v2329, %v2321
        %v3034 = vpack.c.b16 %v2330, %v2322
        %v3035 = vpack.c.b16 %v2331, %v2323
        %v3036 = vpack.c.b16 %v2332, %v2324
        %v3037 = vpack.c.b16 %v2333, %v2325
        %v3038 = vpack.c.b16 %v2342, %v2334
        %v3039 = vpack.c.b16 %v2343, %v2335
        %v3040 = vpack.c.b16 %v2344, %v2336
        %v3041 = vpack.c.b16 %v2345, %v2337
        %v3042 = vpack.c.b16 %v2346, %v2338
        %v3043 = vpack.c.b16 %v2347, %v2339
        %v3044 = vpack.c.b16 %v2348, %v2340
        %v3045 = vpack.c.b16 %v2349, %v2341
        %v3046 = vpack.c.b16 %v2358, %v2350
        %v3047 = vpack.c.b16 %v2359, %v2351
        %v3048 = vpack.c.b16 %v2360, %v2352
        %v3049 = vpack.c.b16 %v2361, %v2353
        %v3050 = vpack.c.b16 %v2362, %v2354
        %v3051 = vpack.c.b16 %v2363, %v2355
        %v3052 = vpack.c.b16 %v2364, %v2356
        %v3053 = vpack.c.b16 %v2365, %v2357
        %v3054 = vpack.c.b16 %v2374, %v2366
        %v3055 = vpack.c.b16 %v2375, %v2367
        %v3056 = vpack.c.b16 %v2376, %v2368
        %v3057 = vpack.c.b16 %v2377, %v2369
        %v3058 = vpack.c.b16 %v2378, %v2370
        %v3059 = vpack.c.b16 %v2379, %v2371
        %v3060 = vpack.c.b16 %v2380, %v2372
        %v3061 = vpack.c.b16 %v2381, %v2373
        %v3062 = vpack.c.b16 %v2390, %v2382
        %v3063 = vpack.c.b16 %v2391, %v2383
        %v3064 = vpack.c.b16 %v2392, %v2384
        %v3065 = vpack.c.b16 %v2393, %v2385
        %v3066 = vpack.c.b16 %v2394, %v2386
        %v3067 = vpack.c.b16 %v2395, %v2387
        %v3068 = vpack.c.b16 %v2396, %v2388
        %v3069 = vpack.c.b16 %v2397, %v2389
        %v3070 = vpack.c.b16 %v2406, %v2398
        %v3071 = vpack.c.b16 %v2407, %v2399
        %v3072 = vpack.c.b16 %v2408, %v2400
        %v3073 = vpack.c.b16 %v2409, %v2401
        %v3074 = vpack.c.b16 %v2410, %v2402
        %v3075 = vpack.c.b16 %v2411, %v2403
        %v3076 = vpack.c.b16 %v2412, %v2404
        %v3077 = vpack.c.b16 %v2413, %v2405
        %v3078 = vpack.c.b16 %v2422, %v2414
        %v3079 = vpack.c.b16 %v2423, %v2415
        %v3080 = vpack.c.b16 %v2424, %v2416
        %v3081 = vpack.c.b16 %v2425, %v2417
        %v3082 = vpack.c.b16 %v2426, %v2418
        %v3083 = vpack.c.b16 %v2427, %v2419
        %v3084 = vpack.c.b16 %v2428, %v2420
        %v3085 = vpack.c.b16 %v2429, %v2421
        %v3086 = vpack.c.b16 %v2438, %v2430
        %v3087 = vpack.c.b16 %v2439, %v2431
        %v3088 = vpack.c.b16 %v2440, %v2432
        %v3089 = vpack.c.b16 %v2441, %v2433
        %v3090 = vpack.c.b16 %v2442, %v2434
        %v3091 = vpack.c.b16 %v2443, %v2435
        %v3092 = vpack.c.b16 %v2444, %v2436
        %v3093 = vpack.c.b16 %v2445, %v2437
        %v3094 = vpack.c.b16 %v2454, %v2446
        %v3095 = vpack.c.b16 %v2455, %v2447
        %v3096 = vpack.c.b16 %v2456, %v2448
        %v3097 = vpack.c.b16 %v2457, %v2449
        %v3098 = vpack.c.b16 %v2458, %v2450
        %v3099 = vpack.c.b16 %v2459, %v2451
        %v3100 = vpack.c.b16 %v2460, %v2452
        %v3101 = vpack.c.b16 %v2461, %v2453
        %v3102 = vpack.c.b16 %v2470, %v2462
        %v3103 = vpack.c.b16 %v2471, %v2463
        %v3104 = vpack.c.b16 %v2472, %v2464
        %v3105 = vpack.c.b16 %v2473, %v2465
        %v3106 = vpack.c.b16 %v2474, %v2466
        %v3107 = vpack.c.b16 %v2475, %v2467
        %v3108 = vpack.c.b16 %v2476, %v2468
        %v3109 = vpack.c.b16 %v2477, %v2469
        %v3110 = vpack.c.b16 %v2486, %v2478
        %v3111 = vpack.c.b16 %v2487, %v2479
        %v3112 = vpack.c.b16 %v2488, %v2480
        %v3113 = vpack.c.b16 %v2489, %v2481
        %v3114 = vpack.c.b16 %v2490, %v2482
        %v3115 = vpack.c.b16 %v2491, %v2483
        %v3116 = vpack.c.b16 %v2492, %v2484
        %v3117 = vpack.c.b16 %v2493, %v2485
        %v3118 = vpack.c.b16 %v2502, %v2494
        %v3119 = vpack.c.b16 %v2503, %v2495
        %v3120 = vpack.c.b16 %v2504, %v2496
        %v3121 = vpack.c.b16 %v2505, %v2497
        %v3122 = vpack.c.b16 %v2506, %v2498
        %v3123 = vpack.c.b16 %v2507, %v2499
        %v3124 = vpack.c.b16 %v2508, %v2500
        %v3125 = vpack.c.b16 %v2509, %v2501
        %v3126 = vpack.c.b16 %v2518, %v2510
        %v3127 = vpack.c.b16 %v2519, %v2511
        %v3128 = vpack.c.b16 %v2520, %v2512
        %v3129 = vpack.c.b16 %v2521, %v2513
        %v3130 = vpack.c.b16 %v2522, %v2514
        %v3131 = vpack.c.b16 %v2523, %v2515
        %v3132 = vpack.c.b16 %v2524, %v2516
        %v3133 = vpack.c.b16 %v2525, %v2517
        %v3134 = vpack.c.b16 %v2534, %v2526
        %v3135 = vpack.c.b16 %v2535, %v2527
        %v3136 = vpack.c.b16 %v2536, %v2528
        %v3137 = vpack.c.b16 %v2537, %v2529
        %v3138 = vpack.c.b16 %v2538, %v2530
        %v3139 = vpack.c.b16 %v2539, %v2531
        %v3140 = vpack.c.b16 %v2540, %v2532
        %v3141 = vpack.c.b16 %v2541, %v2533
        %v3142 = vpack.c.b16 %v2550, %v2542
        %v3143 = vpack.c.b16 %v2551, %v2543
        %v3144 = vpack.c.b16 %v2552, %v2544
        %v3145 = vpack.c.b16 %v2553, %v2545
        %v3146 = vpack.c.b16 %v2554, %v2546
        %v3147 = vpack.c.b16 %v2555, %v2547
        %v3148 = vpack.c.b16 %v2556, %v2548
        %v3149 = vpack.c.b16 %v2557, %v2549
        %v3150 = vpack.c.b16 %v2566, %v2558
        %v3151 = vpack.c.b16 %v2567, %v2559
        %v3152 = vpack.c.b16 %v2568, %v2560
        %v3153 = vpack.c.b16 %v2569, %v2561
        %v3154 = vpack.c.b16 %v2570, %v2562
        %v3155 = vpack.c.b16 %v2571, %v2563
        %v3156 = vpack.c.b16 %v2572, %v2564
        %v3157 = vpack.c.b16 %v2573, %v2565
        %v3158 = vpack.c.b16 %v2582, %v2574
        %v3159 = vpack.c.b16 %v2583, %v2575
        %v3160 = vpack.c.b16 %v2584, %v2576
        %v3161 = vpack.c.b16 %v2585, %v2577
        %v3162 = vpack.c.b16 %v2586, %v2578
        %v3163 = vpack.c.b16 %v2587, %v2579
        %v3164 = vpack.c.b16 %v2588, %v2580
        %v3165 = vpack.c.b16 %v2589, %v2581
        %v3166 = vpack.c.b16 %v2598, %v2590
        %v3167 = vpack.c.b16 %v2599, %v2591
        %v3168 = vpack.c.b16 %v2600, %v2592
        %v3169 = vpack.c.b16 %v2601, %v2593
        %v3170 = vpack.c.b16 %v2602, %v2594
        %v3171 = vpack.c.b16 %v2603, %v2595
        %v3172 = vpack.c.b16 %v2604, %v2596
        %v3173 = vpack.c.b16 %v2605, %v2597
        %v3174 = vpack.c.b16 %v2614, %v2606
        %v3175 = vpack.c.b16 %v2615, %v2607
        %v3176 = vpack.c.b16 %v2616, %v2608
        %v3177 = vpack.c.b16 %v2617, %v2609
        %v3178 = vpack.c.b16 %v2618, %v2610
        %v3179 = vpack.c.b16 %v2619, %v2611
        %v3180 = vpack.c.b16 %v2620, %v2612
        %v3181 = vpack.c.b16 %v2621, %v2613
        %v3182 = vpack.c.b16 %v2630, %v2622
        %v3183 = vpack.c.b16 %v2631, %v2623
        %v3184 = vpack.c.b16 %v2632, %v2624
        %v3185 = vpack.c.b16 %v2633, %v2625
        %v3186 = vpack.c.b16 %v2634, %v2626
        %v3187 = vpack.c.b16 %v2635, %v2627
        %v3188 = vpack.c.b16 %v2636, %v2628
        %v3189 = vpack.c.b16 %v2637, %v2629
        %v3190 = vpack.c.b16 %v2646, %v2638
        %v3191 = vpack.c.b16 %v2647, %v2639
        %v3192 = vpack.c.b16 %v2648, %v2640
        %v3193 = vpack.c.b16 %v2649, %v2641
        %v3194 = vpack.c.b16 %v2650, %v2642
        %v3195 = vpack.c.b16 %v2651, %v2643
        %v3196 = vpack.c.b16 %v2652, %v2644
        %v3197 = vpack.c.b16 %v2653, %v2645
        %v3198 = vpack.c.b16 %v2662, %v2654
        %v3199 = vpack.c.b16 %v2663, %v2655
        %v3200 = vpack.c.b16 %v2664, %v2656
        %v3201 = vpack.c.b16 %v2665, %v2657
        %v3202 = vpack.c.b16 %v2666, %v2658
        %v3203 = vpack.c.b16 %v2667, %v2659
        %v3204 = vpack.c.b16 %v2668, %v2660
        %v3205 = vpack.c.b16 %v2669, %v2661
        %v3206 = vpack.c.b16 %v2678, %v2670
        %v3207 = vpack.c.b16 %v2679, %v2671
        %v3208 = vpack.c.b16 %v2680, %v2672
        %v3209 = vpack.c.b16 %v2681, %v2673
        %v3210 = vpack.c.b16 %v2682, %v2674
        %v3211 = vpack.c.b16 %v2683, %v2675
        %v3212 = vpack.c.b16 %v2684, %v2676
        %v3213 = vpack.c.b16 %v2685, %v2677
        %v3214 = vpack.c.b16 %v2694, %v2686
        %v3215 = vpack.c.b16 %v2695, %v2687
        %v3216 = vpack.c.b16 %v2696, %v2688
        %v3217 = vpack.c.b16 %v2697, %v2689
        %v3218 = vpack.c.b16 %v2698, %v2690
        %v3219 = vpack.c.b16 %v2699, %v2691
        %v3220 = vpack.c.b16 %v2700, %v2692
        %v3221 = vpack.c.b16 %v2701, %v2693
        %v3222 = vpack.c.b16 %v2710, %v2702
        %v3223 = vpack.c.b16 %v2711, %v2703
        %v3224 = vpack.c.b16 %v2712, %v2704
        %v3225 = vpack.c.b16 %v2713, %v2705
        %v3226 = vpack.c.b16 %v2714, %v2706
        %v3227 = vpack.c.b16 %v2715, %v2707
        %v3228 = vpack.c.b16 %v2716, %v2708
        %v3229 = vpack.c.b16 %v2717, %v2709
        %3742 = vmatpush.bf16.msra.mxu0 %v2774
        %3743 = vmatpush.bf16.msra.mxu0 %v2766
        %3744 = vmatpush.bf16.msra.mxu0 %v2758
        %3745 = vmatpush.bf16.msra.mxu0 %v2750
        %3746 = vmatpush.bf16.msra.mxu0 %v2742
        %3747 = vmatpush.bf16.msra.mxu0 %v2734
        %3748 = vmatpush.bf16.msra.mxu0 %v2726
        %3749 = vmatpush.bf16.msra.mxu0 %v2718
        %3750 = vmatmul.bf16.gmra.mxu0 %v645
        %v3751 = vpop.f32.mrf.mxu0
        %v3752 = vadd.f32 %v1166, %v3751
        %v3753 = vpop.f32.mrf.mxu0
        %3754 = vdwg.mxu0
        %3755 = vmatpush.bf16.msra.mxu0 %v2838
        %3756 = vmatpush.bf16.msra.mxu0 %v2830
        %3757 = vmatpush.bf16.msra.mxu0 %v2822
        %3758 = vmatpush.bf16.msra.mxu0 %v2814
        %3759 = vmatpush.bf16.msra.mxu0 %v2806
        %3760 = vmatpush.bf16.msra.mxu0 %v2798
        %3761 = vmatpush.bf16.msra.mxu0 %v2790
        %3762 = vmatpush.bf16.msra.mxu0 %v2782
        %3763 = vmatmul.bf16.gmra.mxu0 %v646
        %v3764 = vpop.f32.mrf.mxu0
        %v3765 = vadd.f32 %v3752, %v3764
        %v3766 = vpop.f32.mrf.mxu0
        %3767 = vdwg.mxu0
        %3768 = vmatpush.bf16.msra.mxu0 %v2902
        %3769 = vmatpush.bf16.msra.mxu0 %v2894
        %3770 = vmatpush.bf16.msra.mxu0 %v2886
        %3771 = vmatpush.bf16.msra.mxu0 %v2878
        %3772 = vmatpush.bf16.msra.mxu0 %v2870
        %3773 = vmatpush.bf16.msra.mxu0 %v2862
        %3774 = vmatpush.bf16.msra.mxu0 %v2854
        %3775 = vmatpush.bf16.msra.mxu0 %v2846
        %3776 = vmatmul.bf16.gmra.mxu0 %v647
        %v3777 = vpop.f32.mrf.mxu0
        %v3778 = vadd.f32 %v3765, %v3777
        %v3779 = vpop.f32.mrf.mxu0
        %3780 = vdwg.mxu0
        %3781 = vmatpush.bf16.msra.mxu0 %v2966
        %3782 = vmatpush.bf16.msra.mxu0 %v2958
        %3783 = vmatpush.bf16.msra.mxu0 %v2950
        %3784 = vmatpush.bf16.msra.mxu0 %v2942
        %3785 = vmatpush.bf16.msra.mxu0 %v2934
        %3786 = vmatpush.bf16.msra.mxu0 %v2926
        %3787 = vmatpush.bf16.msra.mxu0 %v2918
        %3788 = vmatpush.bf16.msra.mxu0 %v2910
        %3789 = vmatmul.bf16.gmra.mxu0 %v648
        %v3790 = vpop.f32.mrf.mxu0
        %v3791 = vadd.f32 %v3778, %v3790
        %v3792 = vpop.f32.mrf.mxu0
        %3793 = vdwg.mxu0
        %3794 = vmatpush.bf16.msra.mxu0 %v3030
        %3795 = vmatpush.bf16.msra.mxu0 %v3022
        %3796 = vmatpush.bf16.msra.mxu0 %v3014
        %3797 = vmatpush.bf16.msra.mxu0 %v3006
        %3798 = vmatpush.bf16.msra.mxu0 %v2998
        %3799 = vmatpush.bf16.msra.mxu0 %v2990
        %3800 = vmatpush.bf16.msra.mxu0 %v2982
        %3801 = vmatpush.bf16.msra.mxu0 %v2974
        %3802 = vmatmul.bf16.gmra.mxu0 %v649
        %v3803 = vpop.f32.mrf.mxu0
        %v3804 = vadd.f32 %v3791, %v3803
        %v3805 = vpop.f32.mrf.mxu0
        %3806 = vdwg.mxu0
        %3807 = vmatpush.bf16.msra.mxu0 %v3094
        %3808 = vmatpush.bf16.msra.mxu0 %v3086
        %3809 = vmatpush.bf16.msra.mxu0 %v3078
        %3810 = vmatpush.bf16.msra.mxu0 %v3070
        %3811 = vmatpush.bf16.msra.mxu0 %v3062
        %3812 = vmatpush.bf16.msra.mxu0 %v3054
        %3813 = vmatpush.bf16.msra.mxu0 %v3046
        %3814 = vmatpush.bf16.msra.mxu0 %v3038
        %3815 = vmatmul.bf16.gmra.mxu0 %v650
        %v3816 = vpop.f32.mrf.mxu0
        %v3817 = vadd.f32 %v3804, %v3816
        %v3818 = vpop.f32.mrf.mxu0
        %3819 = vdwg.mxu0
        %3820 = vmatpush.bf16.msra.mxu0 %v3158
        %3821 = vmatpush.bf16.msra.mxu0 %v3150
        %3822 = vmatpush.bf16.msra.mxu0 %v3142
        %3823 = vmatpush.bf16.msra.mxu0 %v3134
        %3824 = vmatpush.bf16.msra.mxu0 %v3126
        %3825 = vmatpush.bf16.msra.mxu0 %v3118
        %3826 = vmatpush.bf16.msra.mxu0 %v3110
        %3827 = vmatpush.bf16.msra.mxu0 %v3102
        %3828 = vmatmul.bf16.gmra.mxu0 %v651
        %v3829 = vpop.f32.mrf.mxu0
        %v3830 = vadd.f32 %v3817, %v3829
        %v3831 = vpop.f32.mrf.mxu0
        %3832 = vdwg.mxu0
        %3833 = vmatpush.bf16.msra.mxu0 %v3222
        %3834 = vmatpush.bf16.msra.mxu0 %v3214
        %3835 = vmatpush.bf16.msra.mxu0 %v3206
        %3836 = vmatpush.bf16.msra.mxu0 %v3198
        %3837 = vmatpush.bf16.msra.mxu0 %v3190
        %3838 = vmatpush.bf16.msra.mxu0 %v3182
        %3839 = vmatpush.bf16.msra.mxu0 %v3174
        %3840 = vmatpush.bf16.msra.mxu0 %v3166
        %3841 = vmatmul.bf16.gmra.mxu0 %v652
        %v3842 = vpop.f32.mrf.mxu0
        %v3843 = vadd.f32 %v3830, %v3842
        %v3844 = vpop.f32.mrf.mxu0
        %3845 = vdwg.mxu0
        %3846 = vmatpush.bf16.msra.mxu0 %v2775
        %3847 = vmatpush.bf16.msra.mxu0 %v2767
        %3848 = vmatpush.bf16.msra.mxu0 %v2759
        %3849 = vmatpush.bf16.msra.mxu0 %v2751
        %3850 = vmatpush.bf16.msra.mxu0 %v2743
        %3851 = vmatpush.bf16.msra.mxu0 %v2735
        %3852 = vmatpush.bf16.msra.mxu0 %v2727
        %3853 = vmatpush.bf16.msra.mxu0 %v2719
        %3854 = vmatmul.bf16.gmra.mxu0 %v645
        %v3855 = vpop.f32.mrf.mxu0
        %v3856 = vadd.f32 %v1167, %v3855
        %v3857 = vpop.f32.mrf.mxu0
        %3858 = vdwg.mxu0
        %3859 = vmatpush.bf16.msra.mxu0 %v2839
        %3860 = vmatpush.bf16.msra.mxu0 %v2831
        %3861 = vmatpush.bf16.msra.mxu0 %v2823
        %3862 = vmatpush.bf16.msra.mxu0 %v2815
        %3863 = vmatpush.bf16.msra.mxu0 %v2807
        %3864 = vmatpush.bf16.msra.mxu0 %v2799
        %3865 = vmatpush.bf16.msra.mxu0 %v2791
        %3866 = vmatpush.bf16.msra.mxu0 %v2783
        %3867 = vmatmul.bf16.gmra.mxu0 %v646
        %v3868 = vpop.f32.mrf.mxu0
        %v3869 = vadd.f32 %v3856, %v3868
        %v3870 = vpop.f32.mrf.mxu0
        %3871 = vdwg.mxu0
        %3872 = vmatpush.bf16.msra.mxu0 %v2903
        %3873 = vmatpush.bf16.msra.mxu0 %v2895
        %3874 = vmatpush.bf16.msra.mxu0 %v2887
        %3875 = vmatpush.bf16.msra.mxu0 %v2879
        %3876 = vmatpush.bf16.msra.mxu0 %v2871
        %3877 = vmatpush.bf16.msra.mxu0 %v2863
        %3878 = vmatpush.bf16.msra.mxu0 %v2855
        %3879 = vmatpush.bf16.msra.mxu0 %v2847
        %3880 = vmatmul.bf16.gmra.mxu0 %v647
        %v3881 = vpop.f32.mrf.mxu0
        %v3882 = vadd.f32 %v3869, %v3881
        %v3883 = vpop.f32.mrf.mxu0
        %3884 = vdwg.mxu0
        %3885 = vmatpush.bf16.msra.mxu0 %v2967
        %3886 = vmatpush.bf16.msra.mxu0 %v2959
        %3887 = vmatpush.bf16.msra.mxu0 %v2951
        %3888 = vmatpush.bf16.msra.mxu0 %v2943
        %3889 = vmatpush.bf16.msra.mxu0 %v2935
        %3890 = vmatpush.bf16.msra.mxu0 %v2927
        %3891 = vmatpush.bf16.msra.mxu0 %v2919
        %3892 = vmatpush.bf16.msra.mxu0 %v2911
        %3893 = vmatmul.bf16.gmra.mxu0 %v648
        %v3894 = vpop.f32.mrf.mxu0
        %v3895 = vadd.f32 %v3882, %v3894
        %v3896 = vpop.f32.mrf.mxu0
        %3897 = vdwg.mxu0
        %3898 = vmatpush.bf16.msra.mxu0 %v3031
        %3899 = vmatpush.bf16.msra.mxu0 %v3023
        %3900 = vmatpush.bf16.msra.mxu0 %v3015
        %3901 = vmatpush.bf16.msra.mxu0 %v3007
        %3902 = vmatpush.bf16.msra.mxu0 %v2999
        %3903 = vmatpush.bf16.msra.mxu0 %v2991
        %3904 = vmatpush.bf16.msra.mxu0 %v2983
        %3905 = vmatpush.bf16.msra.mxu0 %v2975
        %3906 = vmatmul.bf16.gmra.mxu0 %v649
        %v3907 = vpop.f32.mrf.mxu0
        %v3908 = vadd.f32 %v3895, %v3907
        %v3909 = vpop.f32.mrf.mxu0
        %3910 = vdwg.mxu0
        %3911 = vmatpush.bf16.msra.mxu0 %v3095
        %3912 = vmatpush.bf16.msra.mxu0 %v3087
        %3913 = vmatpush.bf16.msra.mxu0 %v3079
        %3914 = vmatpush.bf16.msra.mxu0 %v3071
        %3915 = vmatpush.bf16.msra.mxu0 %v3063
        %3916 = vmatpush.bf16.msra.mxu0 %v3055
        %3917 = vmatpush.bf16.msra.mxu0 %v3047
        %3918 = vmatpush.bf16.msra.mxu0 %v3039
        %3919 = vmatmul.bf16.gmra.mxu0 %v650
        %v3920 = vpop.f32.mrf.mxu0
        %v3921 = vadd.f32 %v3908, %v3920
        %v3922 = vpop.f32.mrf.mxu0
        %3923 = vdwg.mxu0
        %3924 = vmatpush.bf16.msra.mxu0 %v3159
        %3925 = vmatpush.bf16.msra.mxu0 %v3151
        %3926 = vmatpush.bf16.msra.mxu0 %v3143
        %3927 = vmatpush.bf16.msra.mxu0 %v3135
        %3928 = vmatpush.bf16.msra.mxu0 %v3127
        %3929 = vmatpush.bf16.msra.mxu0 %v3119
        %3930 = vmatpush.bf16.msra.mxu0 %v3111
        %3931 = vmatpush.bf16.msra.mxu0 %v3103
        %3932 = vmatmul.bf16.gmra.mxu0 %v651
        %v3933 = vpop.f32.mrf.mxu0
        %v3934 = vadd.f32 %v3921, %v3933
        %v3935 = vpop.f32.mrf.mxu0
        %3936 = vdwg.mxu0
        %3937 = vmatpush.bf16.msra.mxu0 %v3223
        %3938 = vmatpush.bf16.msra.mxu0 %v3215
        %3939 = vmatpush.bf16.msra.mxu0 %v3207
        %3940 = vmatpush.bf16.msra.mxu0 %v3199
        %3941 = vmatpush.bf16.msra.mxu0 %v3191
        %3942 = vmatpush.bf16.msra.mxu0 %v3183
        %3943 = vmatpush.bf16.msra.mxu0 %v3175
        %3944 = vmatpush.bf16.msra.mxu0 %v3167
        %3945 = vmatmul.bf16.gmra.mxu0 %v652
        %v3946 = vpop.f32.mrf.mxu0
        %v3947 = vadd.f32 %v3934, %v3946
        %v3948 = vpop.f32.mrf.mxu0
        %3949 = vdwg.mxu0
        %3950 = vmatpush.bf16.msra.mxu0 %v2776
        %3951 = vmatpush.bf16.msra.mxu0 %v2768
        %3952 = vmatpush.bf16.msra.mxu0 %v2760
        %3953 = vmatpush.bf16.msra.mxu0 %v2752
        %3954 = vmatpush.bf16.msra.mxu0 %v2744
        %3955 = vmatpush.bf16.msra.mxu0 %v2736
        %3956 = vmatpush.bf16.msra.mxu0 %v2728
        %3957 = vmatpush.bf16.msra.mxu0 %v2720
        %3958 = vmatmul.bf16.gmra.mxu0 %v645
        %v3959 = vpop.f32.mrf.mxu0
        %v3960 = vadd.f32 %v1168, %v3959
        %v3961 = vpop.f32.mrf.mxu0
        %3962 = vdwg.mxu0
        %3963 = vmatpush.bf16.msra.mxu0 %v2840
        %3964 = vmatpush.bf16.msra.mxu0 %v2832
        %3965 = vmatpush.bf16.msra.mxu0 %v2824
        %3966 = vmatpush.bf16.msra.mxu0 %v2816
        %3967 = vmatpush.bf16.msra.mxu0 %v2808
        %3968 = vmatpush.bf16.msra.mxu0 %v2800
        %3969 = vmatpush.bf16.msra.mxu0 %v2792
        %3970 = vmatpush.bf16.msra.mxu0 %v2784
        %3971 = vmatmul.bf16.gmra.mxu0 %v646
        %v3972 = vpop.f32.mrf.mxu0
        %v3973 = vadd.f32 %v3960, %v3972
        %v3974 = vpop.f32.mrf.mxu0
        %3975 = vdwg.mxu0
        %3976 = vmatpush.bf16.msra.mxu0 %v2904
        %3977 = vmatpush.bf16.msra.mxu0 %v2896
        %3978 = vmatpush.bf16.msra.mxu0 %v2888
        %3979 = vmatpush.bf16.msra.mxu0 %v2880
        %3980 = vmatpush.bf16.msra.mxu0 %v2872
        %3981 = vmatpush.bf16.msra.mxu0 %v2864
        %3982 = vmatpush.bf16.msra.mxu0 %v2856
        %3983 = vmatpush.bf16.msra.mxu0 %v2848
        %3984 = vmatmul.bf16.gmra.mxu0 %v647
        %v3985 = vpop.f32.mrf.mxu0
        %v3986 = vadd.f32 %v3973, %v3985
        %v3987 = vpop.f32.mrf.mxu0
        %3988 = vdwg.mxu0
        %3989 = vmatpush.bf16.msra.mxu0 %v2968
        %3990 = vmatpush.bf16.msra.mxu0 %v2960
        %3991 = vmatpush.bf16.msra.mxu0 %v2952
        %3992 = vmatpush.bf16.msra.mxu0 %v2944
        %3993 = vmatpush.bf16.msra.mxu0 %v2936
        %3994 = vmatpush.bf16.msra.mxu0 %v2928
        %3995 = vmatpush.bf16.msra.mxu0 %v2920
        %3996 = vmatpush.bf16.msra.mxu0 %v2912
        %3997 = vmatmul.bf16.gmra.mxu0 %v648
        %v3998 = vpop.f32.mrf.mxu0
        %v3999 = vadd.f32 %v3986, %v3998
        %v4000 = vpop.f32.mrf.mxu0
        %4001 = vdwg.mxu0
        %4002 = vmatpush.bf16.msra.mxu0 %v3032
        %4003 = vmatpush.bf16.msra.mxu0 %v3024
        %4004 = vmatpush.bf16.msra.mxu0 %v3016
        %4005 = vmatpush.bf16.msra.mxu0 %v3008
        %4006 = vmatpush.bf16.msra.mxu0 %v3000
        %4007 = vmatpush.bf16.msra.mxu0 %v2992
        %4008 = vmatpush.bf16.msra.mxu0 %v2984
        %4009 = vmatpush.bf16.msra.mxu0 %v2976
        %4010 = vmatmul.bf16.gmra.mxu0 %v649
        %v4011 = vpop.f32.mrf.mxu0
        %v4012 = vadd.f32 %v3999, %v4011
        %v4013 = vpop.f32.mrf.mxu0
        %4014 = vdwg.mxu0
        %4015 = vmatpush.bf16.msra.mxu0 %v3096
        %4016 = vmatpush.bf16.msra.mxu0 %v3088
        %4017 = vmatpush.bf16.msra.mxu0 %v3080
        %4018 = vmatpush.bf16.msra.mxu0 %v3072
        %4019 = vmatpush.bf16.msra.mxu0 %v3064
        %4020 = vmatpush.bf16.msra.mxu0 %v3056
        %4021 = vmatpush.bf16.msra.mxu0 %v3048
        %4022 = vmatpush.bf16.msra.mxu0 %v3040
        %4023 = vmatmul.bf16.gmra.mxu0 %v650
        %v4024 = vpop.f32.mrf.mxu0
        %v4025 = vadd.f32 %v4012, %v4024
        %v4026 = vpop.f32.mrf.mxu0
        %4027 = vdwg.mxu0
        %4028 = vmatpush.bf16.msra.mxu0 %v3160
        %4029 = vmatpush.bf16.msra.mxu0 %v3152
        %4030 = vmatpush.bf16.msra.mxu0 %v3144
        %4031 = vmatpush.bf16.msra.mxu0 %v3136
        %4032 = vmatpush.bf16.msra.mxu0 %v3128
        %4033 = vmatpush.bf16.msra.mxu0 %v3120
        %4034 = vmatpush.bf16.msra.mxu0 %v3112
        %4035 = vmatpush.bf16.msra.mxu0 %v3104
        %4036 = vmatmul.bf16.gmra.mxu0 %v651
        %v4037 = vpop.f32.mrf.mxu0
        %v4038 = vadd.f32 %v4025, %v4037
        %v4039 = vpop.f32.mrf.mxu0
        %4040 = vdwg.mxu0
        %4041 = vmatpush.bf16.msra.mxu0 %v3224
        %4042 = vmatpush.bf16.msra.mxu0 %v3216
        %4043 = vmatpush.bf16.msra.mxu0 %v3208
        %4044 = vmatpush.bf16.msra.mxu0 %v3200
        %4045 = vmatpush.bf16.msra.mxu0 %v3192
        %4046 = vmatpush.bf16.msra.mxu0 %v3184
        %4047 = vmatpush.bf16.msra.mxu0 %v3176
        %4048 = vmatpush.bf16.msra.mxu0 %v3168
        %4049 = vmatmul.bf16.gmra.mxu0 %v652
        %v4050 = vpop.f32.mrf.mxu0
        %v4051 = vadd.f32 %v4038, %v4050
        %v4052 = vpop.f32.mrf.mxu0
        %4053 = vdwg.mxu0
        %4054 = vmatpush.bf16.msra.mxu0 %v2777
        %4055 = vmatpush.bf16.msra.mxu0 %v2769
        %4056 = vmatpush.bf16.msra.mxu0 %v2761
        %4057 = vmatpush.bf16.msra.mxu0 %v2753
        %4058 = vmatpush.bf16.msra.mxu0 %v2745
        %4059 = vmatpush.bf16.msra.mxu0 %v2737
        %4060 = vmatpush.bf16.msra.mxu0 %v2729
        %4061 = vmatpush.bf16.msra.mxu0 %v2721
        %4062 = vmatmul.bf16.gmra.mxu0 %v645
        %v4063 = vpop.f32.mrf.mxu0
        %v4064 = vadd.f32 %v1169, %v4063
        %v4065 = vpop.f32.mrf.mxu0
        %4066 = vdwg.mxu0
        %4067 = vmatpush.bf16.msra.mxu0 %v2841
        %4068 = vmatpush.bf16.msra.mxu0 %v2833
        %4069 = vmatpush.bf16.msra.mxu0 %v2825
        %4070 = vmatpush.bf16.msra.mxu0 %v2817
        %4071 = vmatpush.bf16.msra.mxu0 %v2809
        %4072 = vmatpush.bf16.msra.mxu0 %v2801
        %4073 = vmatpush.bf16.msra.mxu0 %v2793
        %4074 = vmatpush.bf16.msra.mxu0 %v2785
        %4075 = vmatmul.bf16.gmra.mxu0 %v646
        %v4076 = vpop.f32.mrf.mxu0
        %v4077 = vadd.f32 %v4064, %v4076
        %v4078 = vpop.f32.mrf.mxu0
        %4079 = vdwg.mxu0
        %4080 = vmatpush.bf16.msra.mxu0 %v2905
        %4081 = vmatpush.bf16.msra.mxu0 %v2897
        %4082 = vmatpush.bf16.msra.mxu0 %v2889
        %4083 = vmatpush.bf16.msra.mxu0 %v2881
        %4084 = vmatpush.bf16.msra.mxu0 %v2873
        %4085 = vmatpush.bf16.msra.mxu0 %v2865
        %4086 = vmatpush.bf16.msra.mxu0 %v2857
        %4087 = vmatpush.bf16.msra.mxu0 %v2849
        %4088 = vmatmul.bf16.gmra.mxu0 %v647
        %v4089 = vpop.f32.mrf.mxu0
        %v4090 = vadd.f32 %v4077, %v4089
        %v4091 = vpop.f32.mrf.mxu0
        %4092 = vdwg.mxu0
        %4093 = vmatpush.bf16.msra.mxu0 %v2969
        %4094 = vmatpush.bf16.msra.mxu0 %v2961
        %4095 = vmatpush.bf16.msra.mxu0 %v2953
        %4096 = vmatpush.bf16.msra.mxu0 %v2945
        %4097 = vmatpush.bf16.msra.mxu0 %v2937
        %4098 = vmatpush.bf16.msra.mxu0 %v2929
        %4099 = vmatpush.bf16.msra.mxu0 %v2921
        %4100 = vmatpush.bf16.msra.mxu0 %v2913
        %4101 = vmatmul.bf16.gmra.mxu0 %v648
        %v4102 = vpop.f32.mrf.mxu0
        %v4103 = vadd.f32 %v4090, %v4102
        %v4104 = vpop.f32.mrf.mxu0
        %4105 = vdwg.mxu0
        %4106 = vmatpush.bf16.msra.mxu0 %v3033
        %4107 = vmatpush.bf16.msra.mxu0 %v3025
        %4108 = vmatpush.bf16.msra.mxu0 %v3017
        %4109 = vmatpush.bf16.msra.mxu0 %v3009
        %4110 = vmatpush.bf16.msra.mxu0 %v3001
        %4111 = vmatpush.bf16.msra.mxu0 %v2993
        %4112 = vmatpush.bf16.msra.mxu0 %v2985
        %4113 = vmatpush.bf16.msra.mxu0 %v2977
        %4114 = vmatmul.bf16.gmra.mxu0 %v649
        %v4115 = vpop.f32.mrf.mxu0
        %v4116 = vadd.f32 %v4103, %v4115
        %v4117 = vpop.f32.mrf.mxu0
        %4118 = vdwg.mxu0
        %4119 = vmatpush.bf16.msra.mxu0 %v3097
        %4120 = vmatpush.bf16.msra.mxu0 %v3089
        %4121 = vmatpush.bf16.msra.mxu0 %v3081
        %4122 = vmatpush.bf16.msra.mxu0 %v3073
        %4123 = vmatpush.bf16.msra.mxu0 %v3065
        %4124 = vmatpush.bf16.msra.mxu0 %v3057
        %4125 = vmatpush.bf16.msra.mxu0 %v3049
        %4126 = vmatpush.bf16.msra.mxu0 %v3041
        %4127 = vmatmul.bf16.gmra.mxu0 %v650
        %v4128 = vpop.f32.mrf.mxu0
        %v4129 = vadd.f32 %v4116, %v4128
        %v4130 = vpop.f32.mrf.mxu0
        %4131 = vdwg.mxu0
        %4132 = vmatpush.bf16.msra.mxu0 %v3161
        %4133 = vmatpush.bf16.msra.mxu0 %v3153
        %4134 = vmatpush.bf16.msra.mxu0 %v3145
        %4135 = vmatpush.bf16.msra.mxu0 %v3137
        %4136 = vmatpush.bf16.msra.mxu0 %v3129
        %4137 = vmatpush.bf16.msra.mxu0 %v3121
        %4138 = vmatpush.bf16.msra.mxu0 %v3113
        %4139 = vmatpush.bf16.msra.mxu0 %v3105
        %4140 = vmatmul.bf16.gmra.mxu0 %v651
        %v4141 = vpop.f32.mrf.mxu0
        %v4142 = vadd.f32 %v4129, %v4141
        %v4143 = vpop.f32.mrf.mxu0
        %4144 = vdwg.mxu0
        %4145 = vmatpush.bf16.msra.mxu0 %v3225
        %4146 = vmatpush.bf16.msra.mxu0 %v3217
        %4147 = vmatpush.bf16.msra.mxu0 %v3209
        %4148 = vmatpush.bf16.msra.mxu0 %v3201
        %4149 = vmatpush.bf16.msra.mxu0 %v3193
        %4150 = vmatpush.bf16.msra.mxu0 %v3185
        %4151 = vmatpush.bf16.msra.mxu0 %v3177
        %4152 = vmatpush.bf16.msra.mxu0 %v3169
        %4153 = vmatmul.bf16.gmra.mxu0 %v652
        %v4154 = vpop.f32.mrf.mxu0
        %v4155 = vadd.f32 %v4142, %v4154
        %v4156 = vpop.f32.mrf.mxu0
        %4157 = vdwg.mxu0
        %4158 = vmatpush.bf16.msra.mxu0 %v2778
        %4159 = vmatpush.bf16.msra.mxu0 %v2770
        %4160 = vmatpush.bf16.msra.mxu0 %v2762
        %4161 = vmatpush.bf16.msra.mxu0 %v2754
        %4162 = vmatpush.bf16.msra.mxu0 %v2746
        %4163 = vmatpush.bf16.msra.mxu0 %v2738
        %4164 = vmatpush.bf16.msra.mxu0 %v2730
        %4165 = vmatpush.bf16.msra.mxu0 %v2722
        %4166 = vmatmul.bf16.gmra.mxu0 %v645
        %v4167 = vpop.f32.mrf.mxu0
        %v4168 = vadd.f32 %v1170, %v4167
        %v4169 = vpop.f32.mrf.mxu0
        %4170 = vdwg.mxu0
        %4171 = vmatpush.bf16.msra.mxu0 %v2842
        %4172 = vmatpush.bf16.msra.mxu0 %v2834
        %4173 = vmatpush.bf16.msra.mxu0 %v2826
        %4174 = vmatpush.bf16.msra.mxu0 %v2818
        %4175 = vmatpush.bf16.msra.mxu0 %v2810
        %4176 = vmatpush.bf16.msra.mxu0 %v2802
        %4177 = vmatpush.bf16.msra.mxu0 %v2794
        %4178 = vmatpush.bf16.msra.mxu0 %v2786
        %4179 = vmatmul.bf16.gmra.mxu0 %v646
        %v4180 = vpop.f32.mrf.mxu0
        %v4181 = vadd.f32 %v4168, %v4180
        %v4182 = vpop.f32.mrf.mxu0
        %4183 = vdwg.mxu0
        %4184 = vmatpush.bf16.msra.mxu0 %v2906
        %4185 = vmatpush.bf16.msra.mxu0 %v2898
        %4186 = vmatpush.bf16.msra.mxu0 %v2890
        %4187 = vmatpush.bf16.msra.mxu0 %v2882
        %4188 = vmatpush.bf16.msra.mxu0 %v2874
        %4189 = vmatpush.bf16.msra.mxu0 %v2866
        %4190 = vmatpush.bf16.msra.mxu0 %v2858
        %4191 = vmatpush.bf16.msra.mxu0 %v2850
        %4192 = vmatmul.bf16.gmra.mxu0 %v647
        %v4193 = vpop.f32.mrf.mxu0
        %v4194 = vadd.f32 %v4181, %v4193
        %v4195 = vpop.f32.mrf.mxu0
        %4196 = vdwg.mxu0
        %4197 = vmatpush.bf16.msra.mxu0 %v2970
        %4198 = vmatpush.bf16.msra.mxu0 %v2962
        %4199 = vmatpush.bf16.msra.mxu0 %v2954
        %4200 = vmatpush.bf16.msra.mxu0 %v2946
        %4201 = vmatpush.bf16.msra.mxu0 %v2938
        %4202 = vmatpush.bf16.msra.mxu0 %v2930
        %4203 = vmatpush.bf16.msra.mxu0 %v2922
        %4204 = vmatpush.bf16.msra.mxu0 %v2914
        %4205 = vmatmul.bf16.gmra.mxu0 %v648
        %v4206 = vpop.f32.mrf.mxu0
        %v4207 = vadd.f32 %v4194, %v4206
        %v4208 = vpop.f32.mrf.mxu0
        %4209 = vdwg.mxu0
        %4210 = vmatpush.bf16.msra.mxu0 %v3034
        %4211 = vmatpush.bf16.msra.mxu0 %v3026
        %4212 = vmatpush.bf16.msra.mxu0 %v3018
        %4213 = vmatpush.bf16.msra.mxu0 %v3010
        %4214 = vmatpush.bf16.msra.mxu0 %v3002
        %4215 = vmatpush.bf16.msra.mxu0 %v2994
        %4216 = vmatpush.bf16.msra.mxu0 %v2986
        %4217 = vmatpush.bf16.msra.mxu0 %v2978
        %4218 = vmatmul.bf16.gmra.mxu0 %v649
        %v4219 = vpop.f32.mrf.mxu0
        %v4220 = vadd.f32 %v4207, %v4219
        %v4221 = vpop.f32.mrf.mxu0
        %4222 = vdwg.mxu0
        %4223 = vmatpush.bf16.msra.mxu0 %v3098
        %4224 = vmatpush.bf16.msra.mxu0 %v3090
        %4225 = vmatpush.bf16.msra.mxu0 %v3082
        %4226 = vmatpush.bf16.msra.mxu0 %v3074
        %4227 = vmatpush.bf16.msra.mxu0 %v3066
        %4228 = vmatpush.bf16.msra.mxu0 %v3058
        %4229 = vmatpush.bf16.msra.mxu0 %v3050
        %4230 = vmatpush.bf16.msra.mxu0 %v3042
        %4231 = vmatmul.bf16.gmra.mxu0 %v650
        %v4232 = vpop.f32.mrf.mxu0
        %v4233 = vadd.f32 %v4220, %v4232
        %v4234 = vpop.f32.mrf.mxu0
        %4235 = vdwg.mxu0
        %4236 = vmatpush.bf16.msra.mxu0 %v3162
        %4237 = vmatpush.bf16.msra.mxu0 %v3154
        %4238 = vmatpush.bf16.msra.mxu0 %v3146
        %4239 = vmatpush.bf16.msra.mxu0 %v3138
        %4240 = vmatpush.bf16.msra.mxu0 %v3130
        %4241 = vmatpush.bf16.msra.mxu0 %v3122
        %4242 = vmatpush.bf16.msra.mxu0 %v3114
        %4243 = vmatpush.bf16.msra.mxu0 %v3106
        %4244 = vmatmul.bf16.gmra.mxu0 %v651
        %v4245 = vpop.f32.mrf.mxu0
        %v4246 = vadd.f32 %v4233, %v4245
        %v4247 = vpop.f32.mrf.mxu0
        %4248 = vdwg.mxu0
        %4249 = vmatpush.bf16.msra.mxu0 %v3226
        %4250 = vmatpush.bf16.msra.mxu0 %v3218
        %4251 = vmatpush.bf16.msra.mxu0 %v3210
        %4252 = vmatpush.bf16.msra.mxu0 %v3202
        %4253 = vmatpush.bf16.msra.mxu0 %v3194
        %4254 = vmatpush.bf16.msra.mxu0 %v3186
        %4255 = vmatpush.bf16.msra.mxu0 %v3178
        %4256 = vmatpush.bf16.msra.mxu0 %v3170
        %4257 = vmatmul.bf16.gmra.mxu0 %v652
        %v4258 = vpop.f32.mrf.mxu0
        %v4259 = vadd.f32 %v4246, %v4258
        %v4260 = vpop.f32.mrf.mxu0
        %4261 = vdwg.mxu0
        %4262 = vmatpush.bf16.msra.mxu0 %v2779
        %4263 = vmatpush.bf16.msra.mxu0 %v2771
        %4264 = vmatpush.bf16.msra.mxu0 %v2763
        %4265 = vmatpush.bf16.msra.mxu0 %v2755
        %4266 = vmatpush.bf16.msra.mxu0 %v2747
        %4267 = vmatpush.bf16.msra.mxu0 %v2739
        %4268 = vmatpush.bf16.msra.mxu0 %v2731
        %4269 = vmatpush.bf16.msra.mxu0 %v2723
        %4270 = vmatmul.bf16.gmra.mxu0 %v645
        %v4271 = vpop.f32.mrf.mxu0
        %v4272 = vadd.f32 %v1171, %v4271
        %v4273 = vpop.f32.mrf.mxu0
        %4274 = vdwg.mxu0
        %4275 = vmatpush.bf16.msra.mxu0 %v2843
        %4276 = vmatpush.bf16.msra.mxu0 %v2835
        %4277 = vmatpush.bf16.msra.mxu0 %v2827
        %4278 = vmatpush.bf16.msra.mxu0 %v2819
        %4279 = vmatpush.bf16.msra.mxu0 %v2811
        %4280 = vmatpush.bf16.msra.mxu0 %v2803
        %4281 = vmatpush.bf16.msra.mxu0 %v2795
        %4282 = vmatpush.bf16.msra.mxu0 %v2787
        %4283 = vmatmul.bf16.gmra.mxu0 %v646
        %v4284 = vpop.f32.mrf.mxu0
        %v4285 = vadd.f32 %v4272, %v4284
        %v4286 = vpop.f32.mrf.mxu0
        %4287 = vdwg.mxu0
        %4288 = vmatpush.bf16.msra.mxu0 %v2907
        %4289 = vmatpush.bf16.msra.mxu0 %v2899
        %4290 = vmatpush.bf16.msra.mxu0 %v2891
        %4291 = vmatpush.bf16.msra.mxu0 %v2883
        %4292 = vmatpush.bf16.msra.mxu0 %v2875
        %4293 = vmatpush.bf16.msra.mxu0 %v2867
        %4294 = vmatpush.bf16.msra.mxu0 %v2859
        %4295 = vmatpush.bf16.msra.mxu0 %v2851
        %4296 = vmatmul.bf16.gmra.mxu0 %v647
        %v4297 = vpop.f32.mrf.mxu0
        %v4298 = vadd.f32 %v4285, %v4297
        %v4299 = vpop.f32.mrf.mxu0
        %4300 = vdwg.mxu0
        %4301 = vmatpush.bf16.msra.mxu0 %v2971
        %4302 = vmatpush.bf16.msra.mxu0 %v2963
        %4303 = vmatpush.bf16.msra.mxu0 %v2955
        %4304 = vmatpush.bf16.msra.mxu0 %v2947
        %4305 = vmatpush.bf16.msra.mxu0 %v2939
        %4306 = vmatpush.bf16.msra.mxu0 %v2931
        %4307 = vmatpush.bf16.msra.mxu0 %v2923
        %4308 = vmatpush.bf16.msra.mxu0 %v2915
        %4309 = vmatmul.bf16.gmra.mxu0 %v648
        %v4310 = vpop.f32.mrf.mxu0
        %v4311 = vadd.f32 %v4298, %v4310
        %v4312 = vpop.f32.mrf.mxu0
        %4313 = vdwg.mxu0
        %4314 = vmatpush.bf16.msra.mxu0 %v3035
        %4315 = vmatpush.bf16.msra.mxu0 %v3027
        %4316 = vmatpush.bf16.msra.mxu0 %v3019
        %4317 = vmatpush.bf16.msra.mxu0 %v3011
        %4318 = vmatpush.bf16.msra.mxu0 %v3003
        %4319 = vmatpush.bf16.msra.mxu0 %v2995
        %4320 = vmatpush.bf16.msra.mxu0 %v2987
        %4321 = vmatpush.bf16.msra.mxu0 %v2979
        %4322 = vmatmul.bf16.gmra.mxu0 %v649
        %v4323 = vpop.f32.mrf.mxu0
        %v4324 = vadd.f32 %v4311, %v4323
        %v4325 = vpop.f32.mrf.mxu0
        %4326 = vdwg.mxu0
        %4327 = vmatpush.bf16.msra.mxu0 %v3099
        %4328 = vmatpush.bf16.msra.mxu0 %v3091
        %4329 = vmatpush.bf16.msra.mxu0 %v3083
        %4330 = vmatpush.bf16.msra.mxu0 %v3075
        %4331 = vmatpush.bf16.msra.mxu0 %v3067
        %4332 = vmatpush.bf16.msra.mxu0 %v3059
        %4333 = vmatpush.bf16.msra.mxu0 %v3051
        %4334 = vmatpush.bf16.msra.mxu0 %v3043
        %4335 = vmatmul.bf16.gmra.mxu0 %v650
        %v4336 = vpop.f32.mrf.mxu0
        %v4337 = vadd.f32 %v4324, %v4336
        %v4338 = vpop.f32.mrf.mxu0
        %4339 = vdwg.mxu0
        %4340 = vmatpush.bf16.msra.mxu0 %v3163
        %4341 = vmatpush.bf16.msra.mxu0 %v3155
        %4342 = vmatpush.bf16.msra.mxu0 %v3147
        %4343 = vmatpush.bf16.msra.mxu0 %v3139
        %4344 = vmatpush.bf16.msra.mxu0 %v3131
        %4345 = vmatpush.bf16.msra.mxu0 %v3123
        %4346 = vmatpush.bf16.msra.mxu0 %v3115
        %4347 = vmatpush.bf16.msra.mxu0 %v3107
        %4348 = vmatmul.bf16.gmra.mxu0 %v651
        %v4349 = vpop.f32.mrf.mxu0
        %v4350 = vadd.f32 %v4337, %v4349
        %v4351 = vpop.f32.mrf.mxu0
        %4352 = vdwg.mxu0
        %4353 = vmatpush.bf16.msra.mxu0 %v3227
        %4354 = vmatpush.bf16.msra.mxu0 %v3219
        %4355 = vmatpush.bf16.msra.mxu0 %v3211
        %4356 = vmatpush.bf16.msra.mxu0 %v3203
        %4357 = vmatpush.bf16.msra.mxu0 %v3195
        %4358 = vmatpush.bf16.msra.mxu0 %v3187
        %4359 = vmatpush.bf16.msra.mxu0 %v3179
        %4360 = vmatpush.bf16.msra.mxu0 %v3171
        %4361 = vmatmul.bf16.gmra.mxu0 %v652
        %v4362 = vpop.f32.mrf.mxu0
        %v4363 = vadd.f32 %v4350, %v4362
        %v4364 = vpop.f32.mrf.mxu0
        %4365 = vdwg.mxu0
        %4366 = vmatpush.bf16.msra.mxu0 %v2780
        %4367 = vmatpush.bf16.msra.mxu0 %v2772
        %4368 = vmatpush.bf16.msra.mxu0 %v2764
        %4369 = vmatpush.bf16.msra.mxu0 %v2756
        %4370 = vmatpush.bf16.msra.mxu0 %v2748
        %4371 = vmatpush.bf16.msra.mxu0 %v2740
        %4372 = vmatpush.bf16.msra.mxu0 %v2732
        %4373 = vmatpush.bf16.msra.mxu0 %v2724
        %4374 = vmatmul.bf16.gmra.mxu0 %v645
        %v4375 = vpop.f32.mrf.mxu0
        %v4376 = vadd.f32 %v1172, %v4375
        %v4377 = vpop.f32.mrf.mxu0
        %4378 = vdwg.mxu0
        %4379 = vmatpush.bf16.msra.mxu0 %v2844
        %4380 = vmatpush.bf16.msra.mxu0 %v2836
        %4381 = vmatpush.bf16.msra.mxu0 %v2828
        %4382 = vmatpush.bf16.msra.mxu0 %v2820
        %4383 = vmatpush.bf16.msra.mxu0 %v2812
        %4384 = vmatpush.bf16.msra.mxu0 %v2804
        %4385 = vmatpush.bf16.msra.mxu0 %v2796
        %4386 = vmatpush.bf16.msra.mxu0 %v2788
        %4387 = vmatmul.bf16.gmra.mxu0 %v646
        %v4388 = vpop.f32.mrf.mxu0
        %v4389 = vadd.f32 %v4376, %v4388
        %v4390 = vpop.f32.mrf.mxu0
        %4391 = vdwg.mxu0
        %4392 = vmatpush.bf16.msra.mxu0 %v2908
        %4393 = vmatpush.bf16.msra.mxu0 %v2900
        %4394 = vmatpush.bf16.msra.mxu0 %v2892
        %4395 = vmatpush.bf16.msra.mxu0 %v2884
        %4396 = vmatpush.bf16.msra.mxu0 %v2876
        %4397 = vmatpush.bf16.msra.mxu0 %v2868
        %4398 = vmatpush.bf16.msra.mxu0 %v2860
        %4399 = vmatpush.bf16.msra.mxu0 %v2852
        %4400 = vmatmul.bf16.gmra.mxu0 %v647
        %v4401 = vpop.f32.mrf.mxu0
        %v4402 = vadd.f32 %v4389, %v4401
        %v4403 = vpop.f32.mrf.mxu0
        %4404 = vdwg.mxu0
        %4405 = vmatpush.bf16.msra.mxu0 %v2972
        %4406 = vmatpush.bf16.msra.mxu0 %v2964
        %4407 = vmatpush.bf16.msra.mxu0 %v2956
        %4408 = vmatpush.bf16.msra.mxu0 %v2948
        %4409 = vmatpush.bf16.msra.mxu0 %v2940
        %4410 = vmatpush.bf16.msra.mxu0 %v2932
        %4411 = vmatpush.bf16.msra.mxu0 %v2924
        %4412 = vmatpush.bf16.msra.mxu0 %v2916
        %4413 = vmatmul.bf16.gmra.mxu0 %v648
        %v4414 = vpop.f32.mrf.mxu0
        %v4415 = vadd.f32 %v4402, %v4414
        %v4416 = vpop.f32.mrf.mxu0
        %4417 = vdwg.mxu0
        %4418 = vmatpush.bf16.msra.mxu0 %v3036
        %4419 = vmatpush.bf16.msra.mxu0 %v3028
        %4420 = vmatpush.bf16.msra.mxu0 %v3020
        %4421 = vmatpush.bf16.msra.mxu0 %v3012
        %4422 = vmatpush.bf16.msra.mxu0 %v3004
        %4423 = vmatpush.bf16.msra.mxu0 %v2996
        %4424 = vmatpush.bf16.msra.mxu0 %v2988
        %4425 = vmatpush.bf16.msra.mxu0 %v2980
        %4426 = vmatmul.bf16.gmra.mxu0 %v649
        %v4427 = vpop.f32.mrf.mxu0
        %v4428 = vadd.f32 %v4415, %v4427
        %v4429 = vpop.f32.mrf.mxu0
        %4430 = vdwg.mxu0
        %4431 = vmatpush.bf16.msra.mxu0 %v3100
        %4432 = vmatpush.bf16.msra.mxu0 %v3092
        %4433 = vmatpush.bf16.msra.mxu0 %v3084
        %4434 = vmatpush.bf16.msra.mxu0 %v3076
        %4435 = vmatpush.bf16.msra.mxu0 %v3068
        %4436 = vmatpush.bf16.msra.mxu0 %v3060
        %4437 = vmatpush.bf16.msra.mxu0 %v3052
        %4438 = vmatpush.bf16.msra.mxu0 %v3044
        %4439 = vmatmul.bf16.gmra.mxu0 %v650
        %v4440 = vpop.f32.mrf.mxu0
        %v4441 = vadd.f32 %v4428, %v4440
        %v4442 = vpop.f32.mrf.mxu0
        %4443 = vdwg.mxu0
        %4444 = vmatpush.bf16.msra.mxu0 %v3164
        %4445 = vmatpush.bf16.msra.mxu0 %v3156
        %4446 = vmatpush.bf16.msra.mxu0 %v3148
        %4447 = vmatpush.bf16.msra.mxu0 %v3140
        %4448 = vmatpush.bf16.msra.mxu0 %v3132
        %4449 = vmatpush.bf16.msra.mxu0 %v3124
        %4450 = vmatpush.bf16.msra.mxu0 %v3116
        %4451 = vmatpush.bf16.msra.mxu0 %v3108
        %4452 = vmatmul.bf16.gmra.mxu0 %v651
        %v4453 = vpop.f32.mrf.mxu0
        %v4454 = vadd.f32 %v4441, %v4453
        %v4455 = vpop.f32.mrf.mxu0
        %4456 = vdwg.mxu0
        %4457 = vmatpush.bf16.msra.mxu0 %v3228
        %4458 = vmatpush.bf16.msra.mxu0 %v3220
        %4459 = vmatpush.bf16.msra.mxu0 %v3212
        %4460 = vmatpush.bf16.msra.mxu0 %v3204
        %4461 = vmatpush.bf16.msra.mxu0 %v3196
        %4462 = vmatpush.bf16.msra.mxu0 %v3188
        %4463 = vmatpush.bf16.msra.mxu0 %v3180
        %4464 = vmatpush.bf16.msra.mxu0 %v3172
        %4465 = vmatmul.bf16.gmra.mxu0 %v652
        %v4466 = vpop.f32.mrf.mxu0
        %v4467 = vadd.f32 %v4454, %v4466
        %v4468 = vpop.f32.mrf.mxu0
        %4469 = vdwg.mxu0
        %4470 = vmatpush.bf16.msra.mxu0 %v2781
        %4471 = vmatpush.bf16.msra.mxu0 %v2773
        %4472 = vmatpush.bf16.msra.mxu0 %v2765
        %4473 = vmatpush.bf16.msra.mxu0 %v2757
        %4474 = vmatpush.bf16.msra.mxu0 %v2749
        %4475 = vmatpush.bf16.msra.mxu0 %v2741
        %4476 = vmatpush.bf16.msra.mxu0 %v2733
        %4477 = vmatpush.bf16.msra.mxu0 %v2725
        %4478 = vmatmul.bf16.gmra.mxu0 %v645
        %v4479 = vpop.f32.mrf.mxu0
        %v4480 = vadd.f32 %v1173, %v4479
        %v4481 = vpop.f32.mrf.mxu0
        %4482 = vdwg.mxu0
        %4483 = vmatpush.bf16.msra.mxu0 %v2845
        %4484 = vmatpush.bf16.msra.mxu0 %v2837
        %4485 = vmatpush.bf16.msra.mxu0 %v2829
        %4486 = vmatpush.bf16.msra.mxu0 %v2821
        %4487 = vmatpush.bf16.msra.mxu0 %v2813
        %4488 = vmatpush.bf16.msra.mxu0 %v2805
        %4489 = vmatpush.bf16.msra.mxu0 %v2797
        %4490 = vmatpush.bf16.msra.mxu0 %v2789
        %4491 = vmatmul.bf16.gmra.mxu0 %v646
        %v4492 = vpop.f32.mrf.mxu0
        %v4493 = vadd.f32 %v4480, %v4492
        %v4494 = vpop.f32.mrf.mxu0
        %4495 = vdwg.mxu0
        %4496 = vmatpush.bf16.msra.mxu0 %v2909
        %4497 = vmatpush.bf16.msra.mxu0 %v2901
        %4498 = vmatpush.bf16.msra.mxu0 %v2893
        %4499 = vmatpush.bf16.msra.mxu0 %v2885
        %4500 = vmatpush.bf16.msra.mxu0 %v2877
        %4501 = vmatpush.bf16.msra.mxu0 %v2869
        %4502 = vmatpush.bf16.msra.mxu0 %v2861
        %4503 = vmatpush.bf16.msra.mxu0 %v2853
        %4504 = vmatmul.bf16.gmra.mxu0 %v647
        %v4505 = vpop.f32.mrf.mxu0
        %v4506 = vadd.f32 %v4493, %v4505
        %v4507 = vpop.f32.mrf.mxu0
        %4508 = vdwg.mxu0
        %4509 = vmatpush.bf16.msra.mxu0 %v2973
        %4510 = vmatpush.bf16.msra.mxu0 %v2965
        %4511 = vmatpush.bf16.msra.mxu0 %v2957
        %4512 = vmatpush.bf16.msra.mxu0 %v2949
        %4513 = vmatpush.bf16.msra.mxu0 %v2941
        %4514 = vmatpush.bf16.msra.mxu0 %v2933
        %4515 = vmatpush.bf16.msra.mxu0 %v2925
        %4516 = vmatpush.bf16.msra.mxu0 %v2917
        %4517 = vmatmul.bf16.gmra.mxu0 %v648
        %v4518 = vpop.f32.mrf.mxu0
        %v4519 = vadd.f32 %v4506, %v4518
        %v4520 = vpop.f32.mrf.mxu0
        %4521 = vdwg.mxu0
        %4522 = vmatpush.bf16.msra.mxu0 %v3037
        %4523 = vmatpush.bf16.msra.mxu0 %v3029
        %4524 = vmatpush.bf16.msra.mxu0 %v3021
        %4525 = vmatpush.bf16.msra.mxu0 %v3013
        %4526 = vmatpush.bf16.msra.mxu0 %v3005
        %4527 = vmatpush.bf16.msra.mxu0 %v2997
        %4528 = vmatpush.bf16.msra.mxu0 %v2989
        %4529 = vmatpush.bf16.msra.mxu0 %v2981
        %4530 = vmatmul.bf16.gmra.mxu0 %v649
        %v4531 = vpop.f32.mrf.mxu0
        %v4532 = vadd.f32 %v4519, %v4531
        %v4533 = vpop.f32.mrf.mxu0
        %4534 = vdwg.mxu0
        %4535 = vmatpush.bf16.msra.mxu0 %v3101
        %4536 = vmatpush.bf16.msra.mxu0 %v3093
        %4537 = vmatpush.bf16.msra.mxu0 %v3085
        %4538 = vmatpush.bf16.msra.mxu0 %v3077
        %4539 = vmatpush.bf16.msra.mxu0 %v3069
        %4540 = vmatpush.bf16.msra.mxu0 %v3061
        %4541 = vmatpush.bf16.msra.mxu0 %v3053
        %4542 = vmatpush.bf16.msra.mxu0 %v3045
        %4543 = vmatmul.bf16.gmra.mxu0 %v650
        %v4544 = vpop.f32.mrf.mxu0
        %v4545 = vadd.f32 %v4532, %v4544
        %v4546 = vpop.f32.mrf.mxu0
        %4547 = vdwg.mxu0
        %4548 = vmatpush.bf16.msra.mxu0 %v3165
        %4549 = vmatpush.bf16.msra.mxu0 %v3157
        %4550 = vmatpush.bf16.msra.mxu0 %v3149
        %4551 = vmatpush.bf16.msra.mxu0 %v3141
        %4552 = vmatpush.bf16.msra.mxu0 %v3133
        %4553 = vmatpush.bf16.msra.mxu0 %v3125
        %4554 = vmatpush.bf16.msra.mxu0 %v3117
        %4555 = vmatpush.bf16.msra.mxu0 %v3109
        %4556 = vmatmul.bf16.gmra.mxu0 %v651
        %v4557 = vpop.f32.mrf.mxu0
        %v4558 = vadd.f32 %v4545, %v4557
        %v4559 = vpop.f32.mrf.mxu0
        %4560 = vdwg.mxu0
        %4561 = vmatpush.bf16.msra.mxu0 %v3229
        %4562 = vmatpush.bf16.msra.mxu0 %v3221
        %4563 = vmatpush.bf16.msra.mxu0 %v3213
        %4564 = vmatpush.bf16.msra.mxu0 %v3205
        %4565 = vmatpush.bf16.msra.mxu0 %v3197
        %4566 = vmatpush.bf16.msra.mxu0 %v3189
        %4567 = vmatpush.bf16.msra.mxu0 %v3181
        %4568 = vmatpush.bf16.msra.mxu0 %v3173
        %4569 = vmatmul.bf16.gmra.mxu0 %v652
        %v4570 = vpop.f32.mrf.mxu0
        %v4571 = vadd.f32 %v4558, %v4570
        %v4572 = vpop.f32.mrf.mxu0
        %4573 = vdwg.mxu0
        %v4574 = vmax.f32 %v3843, 0.0
        %v4575 = vmax.f32 %v3947, 0.0
        %v4576 = vmax.f32 %v4051, 0.0
        %v4577 = vmax.f32 %v4155, 0.0
        %v4578 = vmax.f32 %v4259, 0.0
        %v4579 = vmax.f32 %v4363, 0.0
        %v4580 = vmax.f32 %v4467, 0.0
        %v4581 = vmax.f32 %v4571, 0.0
        %vm4582 = vcmask 1041408
        %v4583 = vsel %vm4582, %v4574, 0.0
        %v4584 = vrot.slane %v4583, 4
        %v4585 = vadd.f32 %v4583, %v4584
        %v4586 = vrot.slane %v4585, 2
        %v4587 = vadd.f32 %v4585, %v4586
        %v4588 = vrot.slane %v4587, 1
        %v4589 = vadd.f32 %v4587, %v4588
        %v4590 = vsel %vm4582, %v4575, 0.0
        %v4591 = vrot.slane %v4590, 4
        %v4592 = vadd.f32 %v4590, %v4591
        %v4593 = vrot.slane %v4592, 2
        %v4594 = vadd.f32 %v4592, %v4593
        %v4595 = vrot.slane %v4594, 1
        %v4596 = vadd.f32 %v4594, %v4595
        %v4597 = vsel %vm4582, %v4576, 0.0
        %v4598 = vrot.slane %v4597, 4
        %v4599 = vadd.f32 %v4597, %v4598
        %v4600 = vrot.slane %v4599, 2
        %v4601 = vadd.f32 %v4599, %v4600
        %v4602 = vrot.slane %v4601, 1
        %v4603 = vadd.f32 %v4601, %v4602
        %v4604 = vsel %vm4582, %v4577, 0.0
        %v4605 = vrot.slane %v4604, 4
        %v4606 = vadd.f32 %v4604, %v4605
        %v4607 = vrot.slane %v4606, 2
        %v4608 = vadd.f32 %v4606, %v4607
        %v4609 = vrot.slane %v4608, 1
        %v4610 = vadd.f32 %v4608, %v4609
        %v4611 = vsel %vm4582, %v4578, 0.0
        %v4612 = vrot.slane %v4611, 4
        %v4613 = vadd.f32 %v4611, %v4612
        %v4614 = vrot.slane %v4613, 2
        %v4615 = vadd.f32 %v4613, %v4614
        %v4616 = vrot.slane %v4615, 1
        %v4617 = vadd.f32 %v4615, %v4616
        %v4618 = vsel %vm4582, %v4579, 0.0
        %v4619 = vrot.slane %v4618, 4
        %v4620 = vadd.f32 %v4618, %v4619
        %v4621 = vrot.slane %v4620, 2
        %v4622 = vadd.f32 %v4620, %v4621
        %v4623 = vrot.slane %v4622, 1
        %v4624 = vadd.f32 %v4622, %v4623
        %v4625 = vsel %vm4582, %v4580, 0.0
        %v4626 = vrot.slane %v4625, 4
        %v4627 = vadd.f32 %v4625, %v4626
        %v4628 = vrot.slane %v4627, 2
        %v4629 = vadd.f32 %v4627, %v4628
        %v4630 = vrot.slane %v4629, 1
        %v4631 = vadd.f32 %v4629, %v4630
        %v4632 = vsel %vm4582, %v4581, 0.0
        %v4633 = vrot.slane %v4632, 4
        %v4634 = vadd.f32 %v4632, %v4633
        %v4635 = vrot.slane %v4634, 2
        %v4636 = vadd.f32 %v4634, %v4635
        %v4637 = vrot.slane %v4636, 1
        %v4638 = vadd.f32 %v4636, %v4637
        %v4639 = vmul.f32 %v4589, 0.5
        %v4640 = vmul.f32 %v4596, 0.5
        %v4641 = vmul.f32 %v4603, 0.5
        %v4642 = vmul.f32 %v4610, 0.5
        %v4643 = vmul.f32 %v4617, 0.5
        %v4644 = vmul.f32 %v4624, 0.5
        %v4645 = vmul.f32 %v4631, 0.5
        %v4646 = vmul.f32 %v4638, 0.5
        %v4647 = vmul.f32 %v4574, %v4574
        %v4648 = vmul.f32 %v4575, %v4575
        %v4649 = vmul.f32 %v4576, %v4576
        %v4650 = vmul.f32 %v4577, %v4577
        %v4651 = vmul.f32 %v4578, %v4578
        %v4652 = vmul.f32 %v4579, %v4579
        %v4653 = vmul.f32 %v4580, %v4580
        %v4654 = vmul.f32 %v4581, %v4581
        %v4655 = vsel %vm4582, %v4647, 0.0
        %v4656 = vrot.slane %v4655, 4
        %v4657 = vadd.f32 %v4655, %v4656
        %v4658 = vrot.slane %v4657, 2
        %v4659 = vadd.f32 %v4657, %v4658
        %v4660 = vrot.slane %v4659, 1
        %v4661 = vadd.f32 %v4659, %v4660
        %v4662 = vsel %vm4582, %v4648, 0.0
        %v4663 = vrot.slane %v4662, 4
        %v4664 = vadd.f32 %v4662, %v4663
        %v4665 = vrot.slane %v4664, 2
        %v4666 = vadd.f32 %v4664, %v4665
        %v4667 = vrot.slane %v4666, 1
        %v4668 = vadd.f32 %v4666, %v4667
        %v4669 = vsel %vm4582, %v4649, 0.0
        %v4670 = vrot.slane %v4669, 4
        %v4671 = vadd.f32 %v4669, %v4670
        %v4672 = vrot.slane %v4671, 2
        %v4673 = vadd.f32 %v4671, %v4672
        %v4674 = vrot.slane %v4673, 1
        %v4675 = vadd.f32 %v4673, %v4674
        %v4676 = vsel %vm4582, %v4650, 0.0
        %v4677 = vrot.slane %v4676, 4
        %v4678 = vadd.f32 %v4676, %v4677
        %v4679 = vrot.slane %v4678, 2
        %v4680 = vadd.f32 %v4678, %v4679
        %v4681 = vrot.slane %v4680, 1
        %v4682 = vadd.f32 %v4680, %v4681
        %v4683 = vsel %vm4582, %v4651, 0.0
        %v4684 = vrot.slane %v4683, 4
        %v4685 = vadd.f32 %v4683, %v4684
        %v4686 = vrot.slane %v4685, 2
        %v4687 = vadd.f32 %v4685, %v4686
        %v4688 = vrot.slane %v4687, 1
        %v4689 = vadd.f32 %v4687, %v4688
        %v4690 = vsel %vm4582, %v4652, 0.0
        %v4691 = vrot.slane %v4690, 4
        %v4692 = vadd.f32 %v4690, %v4691
        %v4693 = vrot.slane %v4692, 2
        %v4694 = vadd.f32 %v4692, %v4693
        %v4695 = vrot.slane %v4694, 1
        %v4696 = vadd.f32 %v4694, %v4695
        %v4697 = vsel %vm4582, %v4653, 0.0
        %v4698 = vrot.slane %v4697, 4
        %v4699 = vadd.f32 %v4697, %v4698
        %v4700 = vrot.slane %v4699, 2
        %v4701 = vadd.f32 %v4699, %v4700
        %v4702 = vrot.slane %v4701, 1
        %v4703 = vadd.f32 %v4701, %v4702
        %v4704 = vsel %vm4582, %v4654, 0.0
        %v4705 = vrot.slane %v4704, 4
        %v4706 = vadd.f32 %v4704, %v4705
        %v4707 = vrot.slane %v4706, 2
        %v4708 = vadd.f32 %v4706, %v4707
        %v4709 = vrot.slane %v4708, 1
        %v4710 = vadd.f32 %v4708, %v4709
        %v4711 = vmul.f32 %v4661, 0.5
        %v4712 = vmul.f32 %v4668, 0.5
        %v4713 = vmul.f32 %v4675, 0.5
        %v4714 = vmul.f32 %v4682, 0.5
        %v4715 = vmul.f32 %v4689, 0.5
        %v4716 = vmul.f32 %v4696, 0.5
        %v4717 = vmul.f32 %v4703, 0.5
        %v4718 = vmul.f32 %v4710, 0.5
        %v4719 = vmul.f32 %v4639, %v4639
        %v4720 = vmul.f32 %v4640, %v4640
        %v4721 = vmul.f32 %v4641, %v4641
        %v4722 = vmul.f32 %v4642, %v4642
        %v4723 = vmul.f32 %v4643, %v4643
        %v4724 = vmul.f32 %v4644, %v4644
        %v4725 = vmul.f32 %v4645, %v4645
        %v4726 = vmul.f32 %v4646, %v4646
        %v4727 = vsub.f32 %v4711, %v4719
        %v4728 = vsub.f32 %v4712, %v4720
        %v4729 = vsub.f32 %v4713, %v4721
        %v4730 = vsub.f32 %v4714, %v4722
        %v4731 = vsub.f32 %v4715, %v4723
        %v4732 = vsub.f32 %v4716, %v4724
        %v4733 = vsub.f32 %v4717, %v4725
        %v4734 = vsub.f32 %v4718, %v4726
        %v4735 = vmax.f32 %v4727, 0.0
        %v4736 = vmax.f32 %v4728, 0.0
        %v4737 = vmax.f32 %v4729, 0.0
        %v4738 = vmax.f32 %v4730, 0.0
        %v4739 = vmax.f32 %v4731, 0.0
        %v4740 = vmax.f32 %v4732, 0.0
        %v4741 = vmax.f32 %v4733, 0.0
        %v4742 = vmax.f32 %v4734, 0.0
        %v4743 = vadd.f32 %v4735, 1e-05
        %v4744 = vadd.f32 %v4736, 1e-05
        %v4745 = vadd.f32 %v4737, 1e-05
        %v4746 = vadd.f32 %v4738, 1e-05
        %v4747 = vadd.f32 %v4739, 1e-05
        %v4748 = vadd.f32 %v4740, 1e-05
        %v4749 = vadd.f32 %v4741, 1e-05
        %v4750 = vadd.f32 %v4742, 1e-05
        %v4751 = vrsqrt.pop %v4743
        %v4752 = vmul.f32 %v4751, %v4743
        %v4753 = vmul.f32 %v4752, %v4751
        %v4754 = vmul.f32 0.5, %v4753
        %v4755 = vsub.f32 1.5, %v4754
        %v4756 = vmul.f32 %v4751, %v4755
        %vm4757 = vweird.f32 %v4743
        %vm4758 = vweird.f32 %v4751
        %vm4759 = vmor %vm4757, %vm4758
        %v4760 = vsel %vm4759, %v4751, %v4756
        %v4761 = vrsqrt.pop %v4744
        %v4762 = vmul.f32 %v4761, %v4744
        %v4763 = vmul.f32 %v4762, %v4761
        %v4764 = vmul.f32 0.5, %v4763
        %v4765 = vsub.f32 1.5, %v4764
        %v4766 = vmul.f32 %v4761, %v4765
        %vm4767 = vweird.f32 %v4744
        %vm4768 = vweird.f32 %v4761
        %vm4769 = vmor %vm4767, %vm4768
        %v4770 = vsel %vm4769, %v4761, %v4766
        %v4771 = vrsqrt.pop %v4745
        %v4772 = vmul.f32 %v4771, %v4745
        %v4773 = vmul.f32 %v4772, %v4771
        %v4774 = vmul.f32 0.5, %v4773
        %v4775 = vsub.f32 1.5, %v4774
        %v4776 = vmul.f32 %v4771, %v4775
        %vm4777 = vweird.f32 %v4745
        %vm4778 = vweird.f32 %v4771
        %vm4779 = vmor %vm4777, %vm4778
        %v4780 = vsel %vm4779, %v4771, %v4776
        %v4781 = vrsqrt.pop %v4746
        %v4782 = vmul.f32 %v4781, %v4746
        %v4783 = vmul.f32 %v4782, %v4781
        %v4784 = vmul.f32 0.5, %v4783
        %v4785 = vsub.f32 1.5, %v4784
        %v4786 = vmul.f32 %v4781, %v4785
        %vm4787 = vweird.f32 %v4746
        %vm4788 = vweird.f32 %v4781
        %vm4789 = vmor %vm4787, %vm4788
        %v4790 = vsel %vm4789, %v4781, %v4786
        %v4791 = vrsqrt.pop %v4747
        %v4792 = vmul.f32 %v4791, %v4747
        %v4793 = vmul.f32 %v4792, %v4791
        %v4794 = vmul.f32 0.5, %v4793
        %v4795 = vsub.f32 1.5, %v4794
        %v4796 = vmul.f32 %v4791, %v4795
        %vm4797 = vweird.f32 %v4747
        %vm4798 = vweird.f32 %v4791
        %vm4799 = vmor %vm4797, %vm4798
        %v4800 = vsel %vm4799, %v4791, %v4796
        %v4801 = vrsqrt.pop %v4748
        %v4802 = vmul.f32 %v4801, %v4748
        %v4803 = vmul.f32 %v4802, %v4801
        %v4804 = vmul.f32 0.5, %v4803
        %v4805 = vsub.f32 1.5, %v4804
        %v4806 = vmul.f32 %v4801, %v4805
        %vm4807 = vweird.f32 %v4748
        %vm4808 = vweird.f32 %v4801
        %vm4809 = vmor %vm4807, %vm4808
        %v4810 = vsel %vm4809, %v4801, %v4806
        %v4811 = vrsqrt.pop %v4749
        %v4812 = vmul.f32 %v4811, %v4749
        %v4813 = vmul.f32 %v4812, %v4811
        %v4814 = vmul.f32 0.5, %v4813
        %v4815 = vsub.f32 1.5, %v4814
        %v4816 = vmul.f32 %v4811, %v4815
        %vm4817 = vweird.f32 %v4749
        %vm4818 = vweird.f32 %v4811
        %vm4819 = vmor %vm4817, %vm4818
        %v4820 = vsel %vm4819, %v4811, %v4816
        %v4821 = vrsqrt.pop %v4750
        %v4822 = vmul.f32 %v4821, %v4750
        %v4823 = vmul.f32 %v4822, %v4821
        %v4824 = vmul.f32 0.5, %v4823
        %v4825 = vsub.f32 1.5, %v4824
        %v4826 = vmul.f32 %v4821, %v4825
        %vm4827 = vweird.f32 %v4750
        %vm4828 = vweird.f32 %v4821
        %vm4829 = vmor %vm4827, %vm4828
        %v4830 = vsel %vm4829, %v4821, %v4826
        %v4839 = vrot.slane %v4770, 7
        %v4840 = vrot.slane %v4780, 6
        %v4841 = vrot.slane %v4790, 5
        %v4842 = vrot.slane %v4800, 4
        %v4843 = vrot.slane %v4810, 3
        %v4844 = vrot.slane %v4820, 2
        %v4845 = vrot.slane %v4830, 1
        %vm4846 = vcmask 1040384
        %v4847 = vsel %vm4846, %v4760, %v4839
        %vm4848 = vcmask 1042434
        %v4849 = vsel %vm4848, %v4840, %v4841
        %v4850 = vsel %vm4582, %v4847, %v4849
        %vm4851 = vcmask 1044484
        %v4852 = vsel %vm4851, %v4842, %v4843
        %vm4853 = vcmask 1046534
        %v4854 = vsel %vm4853, %v4844, %v4845
        %vm4855 = vcmask 1045508
        %v4856 = vsel %vm4855, %v4852, %v4854
        %vm4857 = vcmask 1043456
        %v4858 = vsel %vm4857, %v4850, %v4856
        %v4860 = vmul.f32 %v642, %v4858
        %v4862 = vperm.slane %v4860, 0
        %v4863 = vperm.slane %v4860, 1
        %v4864 = vperm.slane %v4860, 2
        %v4865 = vperm.slane %v4860, 3
        %v4866 = vperm.slane %v4860, 4
        %v4867 = vperm.slane %v4860, 5
        %v4868 = vperm.slane %v4860, 6
        %v4869 = vperm.slane %v4860, 7
        %v4878 = vmul.f32 %v4639, %v4862
        %v4879 = vmul.f32 %v4640, %v4863
        %v4880 = vmul.f32 %v4641, %v4864
        %v4881 = vmul.f32 %v4642, %v4865
        %v4882 = vmul.f32 %v4643, %v4866
        %v4883 = vmul.f32 %v4644, %v4867
        %v4884 = vmul.f32 %v4645, %v4868
        %v4885 = vmul.f32 %v4646, %v4869
        %v4894 = vrot.slane %v4879, 7
        %v4895 = vrot.slane %v4880, 6
        %v4896 = vrot.slane %v4881, 5
        %v4897 = vrot.slane %v4882, 4
        %v4898 = vrot.slane %v4883, 3
        %v4899 = vrot.slane %v4884, 2
        %v4900 = vrot.slane %v4885, 1
        %v4901 = vsel %vm4846, %v4878, %v4894
        %v4902 = vsel %vm4848, %v4895, %v4896
        %v4903 = vsel %vm4582, %v4901, %v4902
        %v4904 = vsel %vm4851, %v4897, %v4898
        %v4905 = vsel %vm4853, %v4899, %v4900
        %v4906 = vsel %vm4855, %v4904, %v4905
        %v4907 = vsel %vm4857, %v4903, %v4906
        %v4909 = vsub.f32 %v644, %v4907
        %v4910 = vmul.f32 %v4574, %v4862
        %v4911 = vmul.f32 %v4575, %v4863
        %v4912 = vmul.f32 %v4576, %v4864
        %v4913 = vmul.f32 %v4577, %v4865
        %v4914 = vmul.f32 %v4578, %v4866
        %v4915 = vmul.f32 %v4579, %v4867
        %v4916 = vmul.f32 %v4580, %v4868
        %v4917 = vmul.f32 %v4581, %v4869
        %v4919 = vperm.slane %v4909, 0
        %v4920 = vperm.slane %v4909, 1
        %v4921 = vperm.slane %v4909, 2
        %v4922 = vperm.slane %v4909, 3
        %v4923 = vperm.slane %v4909, 4
        %v4924 = vperm.slane %v4909, 5
        %v4925 = vperm.slane %v4909, 6
        %v4926 = vperm.slane %v4909, 7
        %v4935 = vadd.f32 %v4910, %v4919
        %v4936 = vadd.f32 %v4911, %v4920
        %v4937 = vadd.f32 %v4912, %v4921
        %v4938 = vadd.f32 %v4913, %v4922
        %v4939 = vadd.f32 %v4914, %v4923
        %v4940 = vadd.f32 %v4915, %v4924
        %v4941 = vadd.f32 %v4916, %v4925
        %v4942 = vadd.f32 %v4917, %v4926
        %v4943 = vpack.c.bf16 %v4935, %v4935
        %v4944 = vpack.c.bf16 %v4936, %v4936
        %v4945 = vpack.c.bf16 %v4937, %v4937
        %v4946 = vpack.c.bf16 %v4938, %v4938
        %v4947 = vpack.c.bf16 %v4939, %v4939
        %v4948 = vpack.c.bf16 %v4940, %v4940
        %v4949 = vpack.c.bf16 %v4941, %v4941
        %v4950 = vpack.c.bf16 %v4942, %v4942
        %v4951 = vld [vmem:[%s354] sm:$0xf]
        %v4952 = vld [vmem:[%s354 + $0x4] sm:$0xf]
        %v4953 = vld [vmem:[%s354 + $0x8] sm:$0xf]
        %v4954 = vld [vmem:[%s354 + $0xc] sm:$0xf]
        %v4955 = vld [vmem:[%s354 + $0x10] sm:$0xf]
        %v4956 = vld [vmem:[%s354 + $0x14] sm:$0xf]
        %v4957 = vld [vmem:[%s354 + $0x18] sm:$0xf]
        %v4958 = vld [vmem:[%s354 + $0x1c] sm:$0xf]
        %v4959 = vld [vmem:[%s354 + $0x20] sm:$0xf]
        %v4960 = vld [vmem:[%s354 + $0x24] sm:$0xf]
        %v4961 = vld [vmem:[%s354 + $0x28] sm:$0xf]
        %v4962 = vld [vmem:[%s354 + $0x2c] sm:$0xf]
        %v4963 = vld [vmem:[%s354 + $0x30] sm:$0xf]
        %v4964 = vld [vmem:[%s354 + $0x34] sm:$0xf]
        %v4965 = vld [vmem:[%s354 + $0x38] sm:$0xf]
        %v4966 = vld [vmem:[%s354 + $0x3c] sm:$0xf]
        %v4967 = vld [vmem:[%s354 + $0x40] sm:$0xf]
        %v4968 = vld [vmem:[%s354 + $0x44] sm:$0xf]
        %v4969 = vld [vmem:[%s354 + $0x48] sm:$0xf]
        %v4970 = vld [vmem:[%s354 + $0x4c] sm:$0xf]
        %v4971 = vld [vmem:[%s354 + $0x50] sm:$0xf]
        %v4972 = vld [vmem:[%s354 + $0x54] sm:$0xf]
        %v4973 = vld [vmem:[%s354 + $0x58] sm:$0xf]
        %v4974 = vld [vmem:[%s354 + $0x5c] sm:$0xf]
        %v4975 = vld [vmem:[%s354 + $0x60] sm:$0xf]
        %v4976 = vld [vmem:[%s354 + $0x64] sm:$0xf]
        %v4977 = vld [vmem:[%s354 + $0x68] sm:$0xf]
        %v4978 = vld [vmem:[%s354 + $0x6c] sm:$0xf]
        %v4979 = vld [vmem:[%s354 + $0x70] sm:$0xf]
        %v4980 = vld [vmem:[%s354 + $0x74] sm:$0xf]
        %v4981 = vld [vmem:[%s354 + $0x78] sm:$0xf]
        %v4982 = vld [vmem:[%s354 + $0x7c] sm:$0xf]
        %v4983 = vld [vmem:[%s354 + $0x80] sm:$0xf]
        %v4984 = vld [vmem:[%s354 + $0x84] sm:$0xf]
        %v4985 = vld [vmem:[%s354 + $0x88] sm:$0xf]
        %v4986 = vld [vmem:[%s354 + $0x8c] sm:$0xf]
        %v4987 = vld [vmem:[%s354 + $0x90] sm:$0xf]
        %v4988 = vld [vmem:[%s354 + $0x94] sm:$0xf]
        %v4989 = vld [vmem:[%s354 + $0x98] sm:$0xf]
        %v4990 = vld [vmem:[%s354 + $0x9c] sm:$0xf]
        %v4991 = vld [vmem:[%s354 + $0xa0] sm:$0xf]
        %v4992 = vld [vmem:[%s354 + $0xa4] sm:$0xf]
        %v4993 = vld [vmem:[%s354 + $0xa8] sm:$0xf]
        %v4994 = vld [vmem:[%s354 + $0xac] sm:$0xf]
        %v4995 = vld [vmem:[%s354 + $0xb0] sm:$0xf]
        %v4996 = vld [vmem:[%s354 + $0xb4] sm:$0xf]
        %v4997 = vld [vmem:[%s354 + $0xb8] sm:$0xf]
        %v4998 = vld [vmem:[%s354 + $0xbc] sm:$0xf]
        %v4999 = vld [vmem:[%s354 + $0xc0] sm:$0xf]
        %v5000 = vld [vmem:[%s354 + $0xc4] sm:$0xf]
        %v5001 = vld [vmem:[%s354 + $0xc8] sm:$0xf]
        %v5002 = vld [vmem:[%s354 + $0xcc] sm:$0xf]
        %v5003 = vld [vmem:[%s354 + $0xd0] sm:$0xf]
        %v5004 = vld [vmem:[%s354 + $0xd4] sm:$0xf]
        %v5005 = vld [vmem:[%s354 + $0xd8] sm:$0xf]
        %v5006 = vld [vmem:[%s354 + $0xdc] sm:$0xf]
        %v5007 = vld [vmem:[%s354 + $0xe0] sm:$0xf]
        %v5008 = vld [vmem:[%s354 + $0xe4] sm:$0xf]
        %v5009 = vld [vmem:[%s354 + $0xe8] sm:$0xf]
        %v5010 = vld [vmem:[%s354 + $0xec] sm:$0xf]
        %v5011 = vld [vmem:[%s354 + $0xf0] sm:$0xf]
        %v5012 = vld [vmem:[%s354 + $0xf4] sm:$0xf]
        %v5013 = vld [vmem:[%s354 + $0xf8] sm:$0xf]
        %v5014 = vld [vmem:[%s354 + $0xfc] sm:$0xf]
        %v5015 = vld [vmem:[%s354 + $0x100] sm:$0xf]
        %v5016 = vld [vmem:[%s354 + $0x104] sm:$0xf]
        %v5017 = vld [vmem:[%s354 + $0x108] sm:$0xf]
        %v5018 = vld [vmem:[%s354 + $0x10c] sm:$0xf]
        %v5019 = vld [vmem:[%s354 + $0x110] sm:$0xf]
        %v5020 = vld [vmem:[%s354 + $0x114] sm:$0xf]
        %v5021 = vld [vmem:[%s354 + $0x118] sm:$0xf]
        %v5022 = vld [vmem:[%s354 + $0x11c] sm:$0xf]
        %v5023 = vld [vmem:[%s354 + $0x120] sm:$0xf]
        %v5024 = vld [vmem:[%s354 + $0x124] sm:$0xf]
        %v5025 = vld [vmem:[%s354 + $0x128] sm:$0xf]
        %v5026 = vld [vmem:[%s354 + $0x12c] sm:$0xf]
        %v5027 = vld [vmem:[%s354 + $0x130] sm:$0xf]
        %v5028 = vld [vmem:[%s354 + $0x134] sm:$0xf]
        %v5029 = vld [vmem:[%s354 + $0x138] sm:$0xf]
        %v5030 = vld [vmem:[%s354 + $0x13c] sm:$0xf]
        %v5031 = vld [vmem:[%s354 + $0x140] sm:$0xf]
        %v5032 = vld [vmem:[%s354 + $0x144] sm:$0xf]
        %v5033 = vld [vmem:[%s354 + $0x148] sm:$0xf]
        %v5034 = vld [vmem:[%s354 + $0x14c] sm:$0xf]
        %v5035 = vld [vmem:[%s354 + $0x150] sm:$0xf]
        %v5036 = vld [vmem:[%s354 + $0x154] sm:$0xf]
        %v5037 = vld [vmem:[%s354 + $0x158] sm:$0xf]
        %v5038 = vld [vmem:[%s354 + $0x15c] sm:$0xf]
        %v5039 = vld [vmem:[%s354 + $0x160] sm:$0xf]
        %v5040 = vld [vmem:[%s354 + $0x164] sm:$0xf]
        %v5041 = vld [vmem:[%s354 + $0x168] sm:$0xf]
        %v5042 = vld [vmem:[%s354 + $0x16c] sm:$0xf]
        %v5043 = vld [vmem:[%s354 + $0x170] sm:$0xf]
        %v5044 = vld [vmem:[%s354 + $0x174] sm:$0xf]
        %v5045 = vld [vmem:[%s354 + $0x178] sm:$0xf]
        %v5046 = vld [vmem:[%s354 + $0x17c] sm:$0xf]
        %v5047 = vld [vmem:[%s354 + $0x180] sm:$0xf]
        %v5048 = vld [vmem:[%s354 + $0x184] sm:$0xf]
        %v5049 = vld [vmem:[%s354 + $0x188] sm:$0xf]
        %v5050 = vld [vmem:[%s354 + $0x18c] sm:$0xf]
        %v5051 = vld [vmem:[%s354 + $0x190] sm:$0xf]
        %v5052 = vld [vmem:[%s354 + $0x194] sm:$0xf]
        %v5053 = vld [vmem:[%s354 + $0x198] sm:$0xf]
        %v5054 = vld [vmem:[%s354 + $0x19c] sm:$0xf]
        %v5055 = vld [vmem:[%s354 + $0x1a0] sm:$0xf]
        %v5056 = vld [vmem:[%s354 + $0x1a4] sm:$0xf]
        %v5057 = vld [vmem:[%s354 + $0x1a8] sm:$0xf]
        %v5058 = vld [vmem:[%s354 + $0x1ac] sm:$0xf]
        %v5059 = vld [vmem:[%s354 + $0x1b0] sm:$0xf]
        %v5060 = vld [vmem:[%s354 + $0x1b4] sm:$0xf]
        %v5061 = vld [vmem:[%s354 + $0x1b8] sm:$0xf]
        %v5062 = vld [vmem:[%s354 + $0x1bc] sm:$0xf]
        %v5063 = vld [vmem:[%s354 + $0x1c0] sm:$0xf]
        %v5064 = vld [vmem:[%s354 + $0x1c4] sm:$0xf]
        %v5065 = vld [vmem:[%s354 + $0x1c8] sm:$0xf]
        %v5066 = vld [vmem:[%s354 + $0x1cc] sm:$0xf]
        %v5067 = vld [vmem:[%s354 + $0x1d0] sm:$0xf]
        %v5068 = vld [vmem:[%s354 + $0x1d4] sm:$0xf]
        %v5069 = vld [vmem:[%s354 + $0x1d8] sm:$0xf]
        %v5070 = vld [vmem:[%s354 + $0x1dc] sm:$0xf]
        %v5071 = vld [vmem:[%s354 + $0x1e0] sm:$0xf]
        %v5072 = vld [vmem:[%s354 + $0x1e4] sm:$0xf]
        %v5073 = vld [vmem:[%s354 + $0x1e8] sm:$0xf]
        %v5074 = vld [vmem:[%s354 + $0x1ec] sm:$0xf]
        %v5075 = vld [vmem:[%s354 + $0x1f0] sm:$0xf]
        %v5076 = vld [vmem:[%s354 + $0x1f4] sm:$0xf]
        %v5077 = vld [vmem:[%s354 + $0x1f8] sm:$0xf]
        %v5078 = vld [vmem:[%s354 + $0x1fc] sm:$0xf]
        %v5079 = vld [vmem:[%s363] sm:$0x1]
        %v5081 = vperm.slane %v5079, 0
        %v5211 = vunpack.c.l.b16 %v4951
        %v5212 = vunpack.c.l.b16 %v4952
        %v5213 = vunpack.c.l.b16 %v4953
        %v5214 = vunpack.c.l.b16 %v4954
        %v5215 = vunpack.c.l.b16 %v4955
        %v5216 = vunpack.c.l.b16 %v4956
        %v5217 = vunpack.c.l.b16 %v4957
        %v5218 = vunpack.c.l.b16 %v4958
        %v5219 = vunpack.c.l.b16 %v4959
        %v5220 = vunpack.c.l.b16 %v4960
        %v5221 = vunpack.c.l.b16 %v4961
        %v5222 = vunpack.c.l.b16 %v4962
        %v5223 = vunpack.c.l.b16 %v4963
        %v5224 = vunpack.c.l.b16 %v4964
        %v5225 = vunpack.c.l.b16 %v4965
        %v5226 = vunpack.c.l.b16 %v4966
        %v5227 = vunpack.c.l.b16 %v4967
        %v5228 = vunpack.c.l.b16 %v4968
        %v5229 = vunpack.c.l.b16 %v4969
        %v5230 = vunpack.c.l.b16 %v4970
        %v5231 = vunpack.c.l.b16 %v4971
        %v5232 = vunpack.c.l.b16 %v4972
        %v5233 = vunpack.c.l.b16 %v4973
        %v5234 = vunpack.c.l.b16 %v4974
        %v5235 = vunpack.c.l.b16 %v4975
        %v5236 = vunpack.c.l.b16 %v4976
        %v5237 = vunpack.c.l.b16 %v4977
        %v5238 = vunpack.c.l.b16 %v4978
        %v5239 = vunpack.c.l.b16 %v4979
        %v5240 = vunpack.c.l.b16 %v4980
        %v5241 = vunpack.c.l.b16 %v4981
        %v5242 = vunpack.c.l.b16 %v4982
        %v5243 = vunpack.c.l.b16 %v4983
        %v5244 = vunpack.c.l.b16 %v4984
        %v5245 = vunpack.c.l.b16 %v4985
        %v5246 = vunpack.c.l.b16 %v4986
        %v5247 = vunpack.c.l.b16 %v4987
        %v5248 = vunpack.c.l.b16 %v4988
        %v5249 = vunpack.c.l.b16 %v4989
        %v5250 = vunpack.c.l.b16 %v4990
        %v5251 = vunpack.c.l.b16 %v4991
        %v5252 = vunpack.c.l.b16 %v4992
        %v5253 = vunpack.c.l.b16 %v4993
        %v5254 = vunpack.c.l.b16 %v4994
        %v5255 = vunpack.c.l.b16 %v4995
        %v5256 = vunpack.c.l.b16 %v4996
        %v5257 = vunpack.c.l.b16 %v4997
        %v5258 = vunpack.c.l.b16 %v4998
        %v5259 = vunpack.c.l.b16 %v4999
        %v5260 = vunpack.c.l.b16 %v5000
        %v5261 = vunpack.c.l.b16 %v5001
        %v5262 = vunpack.c.l.b16 %v5002
        %v5263 = vunpack.c.l.b16 %v5003
        %v5264 = vunpack.c.l.b16 %v5004
        %v5265 = vunpack.c.l.b16 %v5005
        %v5266 = vunpack.c.l.b16 %v5006
        %v5267 = vunpack.c.l.b16 %v5007
        %v5268 = vunpack.c.l.b16 %v5008
        %v5269 = vunpack.c.l.b16 %v5009
        %v5270 = vunpack.c.l.b16 %v5010
        %v5271 = vunpack.c.l.b16 %v5011
        %v5272 = vunpack.c.l.b16 %v5012
        %v5273 = vunpack.c.l.b16 %v5013
        %v5274 = vunpack.c.l.b16 %v5014
        %v5275 = vunpack.c.l.b16 %v5015
        %v5276 = vunpack.c.l.b16 %v5016
        %v5277 = vunpack.c.l.b16 %v5017
        %v5278 = vunpack.c.l.b16 %v5018
        %v5279 = vunpack.c.l.b16 %v5019
        %v5280 = vunpack.c.l.b16 %v5020
        %v5281 = vunpack.c.l.b16 %v5021
        %v5282 = vunpack.c.l.b16 %v5022
        %v5283 = vunpack.c.l.b16 %v5023
        %v5284 = vunpack.c.l.b16 %v5024
        %v5285 = vunpack.c.l.b16 %v5025
        %v5286 = vunpack.c.l.b16 %v5026
        %v5287 = vunpack.c.l.b16 %v5027
        %v5288 = vunpack.c.l.b16 %v5028
        %v5289 = vunpack.c.l.b16 %v5029
        %v5290 = vunpack.c.l.b16 %v5030
        %v5291 = vunpack.c.l.b16 %v5031
        %v5292 = vunpack.c.l.b16 %v5032
        %v5293 = vunpack.c.l.b16 %v5033
        %v5294 = vunpack.c.l.b16 %v5034
        %v5295 = vunpack.c.l.b16 %v5035
        %v5296 = vunpack.c.l.b16 %v5036
        %v5297 = vunpack.c.l.b16 %v5037
        %v5298 = vunpack.c.l.b16 %v5038
        %v5299 = vunpack.c.l.b16 %v5039
        %v5300 = vunpack.c.l.b16 %v5040
        %v5301 = vunpack.c.l.b16 %v5041
        %v5302 = vunpack.c.l.b16 %v5042
        %v5303 = vunpack.c.l.b16 %v5043
        %v5304 = vunpack.c.l.b16 %v5044
        %v5305 = vunpack.c.l.b16 %v5045
        %v5306 = vunpack.c.l.b16 %v5046
        %v5307 = vunpack.c.l.b16 %v5047
        %v5308 = vunpack.c.l.b16 %v5048
        %v5309 = vunpack.c.l.b16 %v5049
        %v5310 = vunpack.c.l.b16 %v5050
        %v5311 = vunpack.c.l.b16 %v5051
        %v5312 = vunpack.c.l.b16 %v5052
        %v5313 = vunpack.c.l.b16 %v5053
        %v5314 = vunpack.c.l.b16 %v5054
        %v5315 = vunpack.c.l.b16 %v5055
        %v5316 = vunpack.c.l.b16 %v5056
        %v5317 = vunpack.c.l.b16 %v5057
        %v5318 = vunpack.c.l.b16 %v5058
        %v5319 = vunpack.c.l.b16 %v5059
        %v5320 = vunpack.c.l.b16 %v5060
        %v5321 = vunpack.c.l.b16 %v5061
        %v5322 = vunpack.c.l.b16 %v5062
        %v5323 = vunpack.c.l.b16 %v5063
        %v5324 = vunpack.c.l.b16 %v5064
        %v5325 = vunpack.c.l.b16 %v5065
        %v5326 = vunpack.c.l.b16 %v5066
        %v5327 = vunpack.c.l.b16 %v5067
        %v5328 = vunpack.c.l.b16 %v5068
        %v5329 = vunpack.c.l.b16 %v5069
        %v5330 = vunpack.c.l.b16 %v5070
        %v5331 = vunpack.c.l.b16 %v5071
        %v5332 = vunpack.c.l.b16 %v5072
        %v5333 = vunpack.c.l.b16 %v5073
        %v5334 = vunpack.c.l.b16 %v5074
        %v5335 = vunpack.c.l.b16 %v5075
        %v5336 = vunpack.c.l.b16 %v5076
        %v5337 = vunpack.c.l.b16 %v5077
        %v5338 = vunpack.c.l.b16 %v5078
        %v5339 = vpack.c.b16 %v5212, %v5211
        %v5340 = vpack.c.b16 %v5214, %v5213
        %v5341 = vpack.c.b16 %v5216, %v5215
        %v5342 = vpack.c.b16 %v5218, %v5217
        %v5343 = vpack.c.b16 %v5220, %v5219
        %v5344 = vpack.c.b16 %v5222, %v5221
        %v5345 = vpack.c.b16 %v5224, %v5223
        %v5346 = vpack.c.b16 %v5226, %v5225
        %v5347 = vpack.c.b16 %v5228, %v5227
        %v5348 = vpack.c.b16 %v5230, %v5229
        %v5349 = vpack.c.b16 %v5232, %v5231
        %v5350 = vpack.c.b16 %v5234, %v5233
        %v5351 = vpack.c.b16 %v5236, %v5235
        %v5352 = vpack.c.b16 %v5238, %v5237
        %v5353 = vpack.c.b16 %v5240, %v5239
        %v5354 = vpack.c.b16 %v5242, %v5241
        %v5355 = vpack.c.b16 %v5244, %v5243
        %v5356 = vpack.c.b16 %v5246, %v5245
        %v5357 = vpack.c.b16 %v5248, %v5247
        %v5358 = vpack.c.b16 %v5250, %v5249
        %v5359 = vpack.c.b16 %v5252, %v5251
        %v5360 = vpack.c.b16 %v5254, %v5253
        %v5361 = vpack.c.b16 %v5256, %v5255
        %v5362 = vpack.c.b16 %v5258, %v5257
        %v5363 = vpack.c.b16 %v5260, %v5259
        %v5364 = vpack.c.b16 %v5262, %v5261
        %v5365 = vpack.c.b16 %v5264, %v5263
        %v5366 = vpack.c.b16 %v5266, %v5265
        %v5367 = vpack.c.b16 %v5268, %v5267
        %v5368 = vpack.c.b16 %v5270, %v5269
        %v5369 = vpack.c.b16 %v5272, %v5271
        %v5370 = vpack.c.b16 %v5274, %v5273
        %v5371 = vpack.c.b16 %v5276, %v5275
        %v5372 = vpack.c.b16 %v5278, %v5277
        %v5373 = vpack.c.b16 %v5280, %v5279
        %v5374 = vpack.c.b16 %v5282, %v5281
        %v5375 = vpack.c.b16 %v5284, %v5283
        %v5376 = vpack.c.b16 %v5286, %v5285
        %v5377 = vpack.c.b16 %v5288, %v5287
        %v5378 = vpack.c.b16 %v5290, %v5289
        %v5379 = vpack.c.b16 %v5292, %v5291
        %v5380 = vpack.c.b16 %v5294, %v5293
        %v5381 = vpack.c.b16 %v5296, %v5295
        %v5382 = vpack.c.b16 %v5298, %v5297
        %v5383 = vpack.c.b16 %v5300, %v5299
        %v5384 = vpack.c.b16 %v5302, %v5301
        %v5385 = vpack.c.b16 %v5304, %v5303
        %v5386 = vpack.c.b16 %v5306, %v5305
        %v5387 = vpack.c.b16 %v5308, %v5307
        %v5388 = vpack.c.b16 %v5310, %v5309
        %v5389 = vpack.c.b16 %v5312, %v5311
        %v5390 = vpack.c.b16 %v5314, %v5313
        %v5391 = vpack.c.b16 %v5316, %v5315
        %v5392 = vpack.c.b16 %v5318, %v5317
        %v5393 = vpack.c.b16 %v5320, %v5319
        %v5394 = vpack.c.b16 %v5322, %v5321
        %v5395 = vpack.c.b16 %v5324, %v5323
        %v5396 = vpack.c.b16 %v5326, %v5325
        %v5397 = vpack.c.b16 %v5328, %v5327
        %v5398 = vpack.c.b16 %v5330, %v5329
        %v5399 = vpack.c.b16 %v5332, %v5331
        %v5400 = vpack.c.b16 %v5334, %v5333
        %v5401 = vpack.c.b16 %v5336, %v5335
        %v5402 = vpack.c.b16 %v5338, %v5337
        %5467 = vmatpush.bf16.msra.mxu0 %v5346
        %5468 = vmatpush.bf16.msra.mxu0 %v5345
        %5469 = vmatpush.bf16.msra.mxu0 %v5344
        %5470 = vmatpush.bf16.msra.mxu0 %v5343
        %5471 = vmatpush.bf16.msra.mxu0 %v5342
        %5472 = vmatpush.bf16.msra.mxu0 %v5341
        %5473 = vmatpush.bf16.msra.mxu0 %v5340
        %5474 = vmatpush.bf16.msra.mxu0 %v5339
        %5475 = vmatmul.bf16.gmra.mxu0 %v4943
        %v5476 = vpop.f32.mrf.mxu0
        %v5477 = vadd.f32 %v5081, %v5476
        %v5478 = vpop.f32.mrf.mxu0
        %5479 = vdwg.mxu0
        %5480 = vmatpush.bf16.msra.mxu0 %v5354
        %5481 = vmatpush.bf16.msra.mxu0 %v5353
        %5482 = vmatpush.bf16.msra.mxu0 %v5352
        %5483 = vmatpush.bf16.msra.mxu0 %v5351
        %5484 = vmatpush.bf16.msra.mxu0 %v5350
        %5485 = vmatpush.bf16.msra.mxu0 %v5349
        %5486 = vmatpush.bf16.msra.mxu0 %v5348
        %5487 = vmatpush.bf16.msra.mxu0 %v5347
        %5488 = vmatmul.bf16.gmra.mxu0 %v4944
        %v5489 = vpop.f32.mrf.mxu0
        %v5490 = vadd.f32 %v5477, %v5489
        %v5491 = vpop.f32.mrf.mxu0
        %5492 = vdwg.mxu0
        %5493 = vmatpush.bf16.msra.mxu0 %v5362
        %5494 = vmatpush.bf16.msra.mxu0 %v5361
        %5495 = vmatpush.bf16.msra.mxu0 %v5360
        %5496 = vmatpush.bf16.msra.mxu0 %v5359
        %5497 = vmatpush.bf16.msra.mxu0 %v5358
        %5498 = vmatpush.bf16.msra.mxu0 %v5357
        %5499 = vmatpush.bf16.msra.mxu0 %v5356
        %5500 = vmatpush.bf16.msra.mxu0 %v5355
        %5501 = vmatmul.bf16.gmra.mxu0 %v4945
        %v5502 = vpop.f32.mrf.mxu0
        %v5503 = vadd.f32 %v5490, %v5502
        %v5504 = vpop.f32.mrf.mxu0
        %5505 = vdwg.mxu0
        %5506 = vmatpush.bf16.msra.mxu0 %v5370
        %5507 = vmatpush.bf16.msra.mxu0 %v5369
        %5508 = vmatpush.bf16.msra.mxu0 %v5368
        %5509 = vmatpush.bf16.msra.mxu0 %v5367
        %5510 = vmatpush.bf16.msra.mxu0 %v5366
        %5511 = vmatpush.bf16.msra.mxu0 %v5365
        %5512 = vmatpush.bf16.msra.mxu0 %v5364
        %5513 = vmatpush.bf16.msra.mxu0 %v5363
        %5514 = vmatmul.bf16.gmra.mxu0 %v4946
        %v5515 = vpop.f32.mrf.mxu0
        %v5516 = vadd.f32 %v5503, %v5515
        %v5517 = vpop.f32.mrf.mxu0
        %5518 = vdwg.mxu0
        %5519 = vmatpush.bf16.msra.mxu0 %v5378
        %5520 = vmatpush.bf16.msra.mxu0 %v5377
        %5521 = vmatpush.bf16.msra.mxu0 %v5376
        %5522 = vmatpush.bf16.msra.mxu0 %v5375
        %5523 = vmatpush.bf16.msra.mxu0 %v5374
        %5524 = vmatpush.bf16.msra.mxu0 %v5373
        %5525 = vmatpush.bf16.msra.mxu0 %v5372
        %5526 = vmatpush.bf16.msra.mxu0 %v5371
        %5527 = vmatmul.bf16.gmra.mxu0 %v4947
        %v5528 = vpop.f32.mrf.mxu0
        %v5529 = vadd.f32 %v5516, %v5528
        %v5530 = vpop.f32.mrf.mxu0
        %5531 = vdwg.mxu0
        %5532 = vmatpush.bf16.msra.mxu0 %v5386
        %5533 = vmatpush.bf16.msra.mxu0 %v5385
        %5534 = vmatpush.bf16.msra.mxu0 %v5384
        %5535 = vmatpush.bf16.msra.mxu0 %v5383
        %5536 = vmatpush.bf16.msra.mxu0 %v5382
        %5537 = vmatpush.bf16.msra.mxu0 %v5381
        %5538 = vmatpush.bf16.msra.mxu0 %v5380
        %5539 = vmatpush.bf16.msra.mxu0 %v5379
        %5540 = vmatmul.bf16.gmra.mxu0 %v4948
        %v5541 = vpop.f32.mrf.mxu0
        %v5542 = vadd.f32 %v5529, %v5541
        %v5543 = vpop.f32.mrf.mxu0
        %5544 = vdwg.mxu0
        %5545 = vmatpush.bf16.msra.mxu0 %v5394
        %5546 = vmatpush.bf16.msra.mxu0 %v5393
        %5547 = vmatpush.bf16.msra.mxu0 %v5392
        %5548 = vmatpush.bf16.msra.mxu0 %v5391
        %5549 = vmatpush.bf16.msra.mxu0 %v5390
        %5550 = vmatpush.bf16.msra.mxu0 %v5389
        %5551 = vmatpush.bf16.msra.mxu0 %v5388
        %5552 = vmatpush.bf16.msra.mxu0 %v5387
        %5553 = vmatmul.bf16.gmra.mxu0 %v4949
        %v5554 = vpop.f32.mrf.mxu0
        %v5555 = vadd.f32 %v5542, %v5554
        %v5556 = vpop.f32.mrf.mxu0
        %5557 = vdwg.mxu0
        %5558 = vmatpush.bf16.msra.mxu0 %v5402
        %5559 = vmatpush.bf16.msra.mxu0 %v5401
        %5560 = vmatpush.bf16.msra.mxu0 %v5400
        %5561 = vmatpush.bf16.msra.mxu0 %v5399
        %5562 = vmatpush.bf16.msra.mxu0 %v5398
        %5563 = vmatpush.bf16.msra.mxu0 %v5397
        %5564 = vmatpush.bf16.msra.mxu0 %v5396
        %5565 = vmatpush.bf16.msra.mxu0 %v5395
        %5566 = vmatmul.bf16.gmra.mxu0 %v4950
        %v5567 = vpop.f32.mrf.mxu0
        %v5568 = vadd.f32 %v5555, %v5567
        %v5569 = vpop.f32.mrf.mxu0
        %5570 = vdwg.mxu0
        %5571 = vst [vmem:[%s406] sm:$0x3] %v5568
        %s5572 = sand.u32 %s176, 1
        %s5573 = scalar_lea.sflag [#allocation4], %s5572
        %s5574 = sand.u32 %s176, 1
        %s5575 = smul.addr %s5574, 2
        %s5576 = scalar_lea.vmem [#allocation11], %s5575
        // Predicated region
        $region69: #{tpu_custom_call.1} parent=43 // pred_check
          %p5577 = pneg %p186
        $region70: #{tpu_custom_call.1} parent=43 // pred_check_branch
          %5579 = sbr.rel (%p5577) target = $region72
        $region71: #{tpu_custom_call.1} parent=43 // pred_region
          %5581 = vsyncadd %s5573, 0
          %s5582 = smul.addr %s22, 2
          %s5583 = scalar_lea.hbm %s6, %s5582
          %s5585 = sshll.u32 %s5576, 4
          %s5586 = int_to_ptr.vmem [resolvable:$true] %s5585
          %s5587 = sshll.u32 %s5583, 4
          %s5588 = int_to_ptr.hbm [resolvable:$true] %s5587
          %5590 = dma.vmem_to_hbm [thread:$0]  %s5586, 32, %s5588, %s5573
        $region72: #{tpu_custom_call.1} parent=43 // pred_fallthru
          _
      $region44: #{tpu_custom_call.1} parent=5 // pred_fallthru
        _
      %p5591 = scmp.le.s32.totalorder 2, %s17
      // Predicated region
      $region73: #{tpu_custom_call.1} parent=5 // pred_check
        %p5592 = pneg %p5591
      $region74: #{tpu_custom_call.1} parent=5 // pred_check_branch
        %5594 = sbr.rel (%p5592) target = $region76
      $region75: #{tpu_custom_call.1} parent=5 // pred_region
        %s5595 = ssub.s32 %s17, 2
        // Predicated region
        $region77: #{tpu_custom_call.1} parent=75 // pred_check
          %p5596 = pneg %p192
        $region78: #{tpu_custom_call.1} parent=75 // pred_check_branch
          %5598 = sbr.rel (%p5596) target = $region80
        $region79: #{tpu_custom_call.1} parent=75 // pred_region
          %s5599 = sand.u32 %s177, 1
          %s5600 = scalar_lea.sflag [#allocation4], %s5599
          %s5601 = sand.u32 %s177, 1
          %s5602 = smul.addr %s5601, 2
          %s5603 = scalar_lea.vmem [#allocation11], %s5602
          %5605 = dma.done %s5600, 32
        $region80: #{tpu_custom_call.1} parent=75 // pred_fallthru
          _
      $region76: #{tpu_custom_call.1} parent=5 // pred_fallthru
        _
    $region6: #{tpu_custom_call.1} parent=1 // loop_footer
      %s21 = sadd.s32 1, %s17
    $region7: #{tpu_custom_call.1} parent=1 // loop_footer_branch
      %16 = sbr.rel target = $region3
    $region8: #{tpu_custom_call.1} parent=1 // loop_exit
      _
    %5606 = vsyncpa [#allocation3], 1
    %s5607 = scalar_lea.sflag [#allocation3], 1
    %5608 = vsyncpa %s5607, 1
    %5609 = vsyncpa [#allocation6], 1
    %5610 = vsyncpa [#allocation4], 1
    %s5611 = scalar_lea.sflag [#allocation4], 1
    %5612 = vsyncpa %s5611, 1

</llo_original>
